<compile_context>
chip_gen: v6e
topology: v6e:2x2x1
jax: 0.10.0
libtpu: 0.0.40
codegen_flags: <defaults>
</compile_context>

<pallas_src>
import functools

import jax
import jax.numpy as jnp
from jax.experimental import pallas as pl
from jax.experimental.pallas import tpu as pltpu


def _yolo_layer_kernel(x_ref, w_ref, coef_ref, grid_ref, *out_refs,
                       na, no, emit_raw, mxu_dtype):
    """Fused 1x1-conv + bias + sigmoid + YOLO box decode for one (batch, tile).

    x_ref    : (C, T)  feature-map slab (NCHW layout, spatial flattened)
    w_ref    : (N, C)  1x1 conv weight, N = na*no rows (torch layout)
    coef_ref : (N, 8)  per-output-channel decode coefficients:
               [bias, t_scale, const, gx_scale, gy_scale, anchor, wh_mask, 0]
    grid_ref : (2, T)  rows = (grid_x, grid_y) for the pixels of this tile
    out_refs : pred_ref (na, T, no) decoded predictions
               raw_ref  (na, T, no) raw conv output (only when emit_raw)
    """
    pred_ref = out_refs[0]
    raw_ref = out_refs[1] if emit_raw else None

    x = x_ref[...]
    w = w_ref[...]
    coef = coef_ref[...]
    g = grid_ref[...]

    if mxu_dtype is not None:
        x = x.astype(mxu_dtype)
        w = w.astype(mxu_dtype)

    # 1x1 conv == channel matmul on the MXU (f32 accumulation); bias over lanes.
    conv = jnp.dot(w, x, preferred_element_type=jnp.float32) + coef[:, 0:1]

    sig = jax.nn.sigmoid(conv)          # EUP
    t = sig + sig                       # 2*sigmoid, shared by xy and wh paths
    gx = g[0:1, :]                      # (1, T)
    gy = g[1:2, :]                      # (1, T)

    # xy / score path:  t * t_scale + (gx*gx_scale + gy*gy_scale + const)
    #   o==0: (2s - 0.5 + gx) * stride   o==1: (2s - 0.5 + gy) * stride   o>=4: s
    lin = t * coef[:, 1:2] + (gx * coef[:, 3:4] + gy * coef[:, 4:5] + coef[:, 2:3])
    # wh path: (2s)^2 * anchor
    wh = (t * t) * coef[:, 5:6]
    dec = jnp.where(coef[:, 6:7] > 0.0, wh, lin)           # (N, T)

    # Emit the final (na, T, no) layout directly: pack the per-channel rows
    # into a sublane-padded (R, T) block (R multiple of 128) so the single XLU
    # transpose has fully (8,128)-aligned source AND destination vregs, then
    # store per-anchor lane slices into the output block.
    n_rows = na * no
    pieces = [dec] + ([conv] if emit_raw else [])
    used = len(pieces) * n_rows
    r_pad = ((used + 127) // 128) * 128
    if r_pad > used:
        pieces.append(jnp.zeros((r_pad - used, dec.shape[1]), jnp.float32))
    big = pieces[0] if len(pieces) == 1 else jnp.concatenate(pieces, axis=0)
    big_t = big.T                                           # (T, R) via XLU

    for a in range(na):
        pred_ref[a, :, :] = big_t[:, a * no:(a + 1) * no]
        if emit_raw:
            off = n_rows + a * no
            raw_ref[a, :, :] = big_t[:, off:off + no]


def _pick_tile_hw(hw: int, batch: int, max_tile: int = 2048, min_tile: int = 512):
    """Pad H*W up to a multiple of 128 and pick a lane-aligned spatial tile.

    Returns (padded_hw, tile). tile is the largest multiple of 128 dividing
    padded_hw with tile <= max_tile; if that leaves < 4 total grid steps we
    prefer a smaller divisor (never below min_tile) so both v7x TensorCores
    get work and DMA/compute overlap.
    """
    hwp = ((hw + 127) // 128) * 128
    divisors = [t for t in range(128, min(hwp, max_tile) + 1, 128) if hwp % t == 0]
    best = max(divisors)
    if batch * (hwp // best) < 4:
        for t in sorted(divisors, reverse=True):
            if t >= min_tile and batch * (hwp // t) >= 4:
                return hwp, t
    return hwp, best


def _decode_coefficients(bias, anchors_px, stride, no, na):
    """Build the (na*no, 8) per-output-channel coefficient table (hoists every
    integer div/mod out of the kernel)."""
    N = na * no
    o_idx = jnp.arange(N) % no
    a_idx = jnp.arange(N) // no
    is_xy = o_idx < 2
    is_score = o_idx >= 4
    s = jnp.float32(stride)
    t_scale = jnp.where(is_xy, s, jnp.where(is_score, 0.5, 0.0))
    const = jnp.where(is_xy, -0.5 * s, 0.0)
    gx_scale = jnp.where(o_idx == 0, s, 0.0)
    gy_scale = jnp.where(o_idx == 1, s, 0.0)
    anch = jnp.where(o_idx == 2, anchors_px[a_idx, 0],
                     jnp.where(o_idx == 3, anchors_px[a_idx, 1], 0.0))
    wh_mask = ((o_idx == 2) | (o_idx == 3)).astype(jnp.float32)
    zeros = jnp.zeros((N,), jnp.float32)
    return jnp.stack([bias.astype(jnp.float32), t_scale, const,
                      gx_scale, gy_scale, anch, wh_mask, zeros], axis=1)


def yolo_head_layer(x_nchw, weight_nc, bias, anchors_px, stride, no, na,
                    emit_raw=True, mxu_dtype=None, max_tile_hw=2048):
    """Run one pyramid level of the YOLO head.

    Returns (pred, raw_x):
      pred  : (B, na*H*W, no)           decoded predictions for this level
      raw_x : (B, na, H, W, no) or None the module's x[i] output
    """
    B, C, H, W = x_nchw.shape
    HW = H * W
    N = na * no
    HWp, T = _pick_tile_hw(HW, B, max_tile_hw)
    n_tiles = HWp // T

    x3 = x_nchw.reshape(B, C, HW).astype(jnp.float32)       # free reshape (NCHW)
    if HWp != HW:
        x3 = jnp.pad(x3, ((0, 0), (0, 0), (0, HWp - HW)))   # lane-align H*W
    wmat = weight_nc.astype(jnp.float32)                     # (N, C)
    coef = _decode_coefficients(bias, anchors_px, stride, no, na)   # (N, 8)

    p = jnp.arange(HW)
    grid_xy = jnp.stack([(p % W).astype(jnp.float32),
                         (p // W).astype(jnp.float32)], axis=0)     # (2, HW)
    if HWp != HW:
        grid_xy = jnp.pad(grid_xy, ((0, 0), (0, HWp - HW)))

    n_out = 2 if emit_raw else 1
    cost = pl.CostEstimate(
        flops=int(2 * B * HWp * C * N),
        transcendentals=int(B * HWp * N),
        bytes_accessed=int(4 * (B * C * HWp + N * C + N * 8 + 2 * HWp
                                + n_out * B * N * HWp)),
    )
    # Double-buffered block footprint. The no-wide minor dim of the output
    # blocks is lane-padded to 128 in VMEM; epilogue intermediates included.
    no_pad = ((no + 127) // 128) * 128
    r_pad = ((n_out * N + 127) // 128) * 128
    in_block = 4 * (C * T + N * C + N * 8 + 2 * T)
    out_block = 4 * na * T * no_pad * n_out
    scratch = 4 * (6 * N * T + 2 * r_pad * T)
    vmem_est = 2 * (in_block + out_block) + scratch + (2 << 20)
    vmem_limit = int(min(max(vmem_est, 32 << 20), 48 << 20))   # v7x-safe cap

    out_shape = [jax.ShapeDtypeStruct((B, na, HWp, no), jnp.float32)]
    out_specs = [pl.BlockSpec((None, na, T, no), lambda b, j: (b, 0, j, 0))]
    if emit_raw:
        out_shape.append(jax.ShapeDtypeStruct((B, na, HWp, no), jnp.float32))
        out_specs.append(pl.BlockSpec((None, na, T, no), lambda b, j: (b, 0, j, 0)))

    kernel = functools.partial(_yolo_layer_kernel, na=na, no=no,
                               emit_raw=emit_raw, mxu_dtype=mxu_dtype)

    results = pl.pallas_call(
        kernel,
        out_shape=tuple(out_shape),
        grid=(B, n_tiles),
        in_specs=[
            pl.BlockSpec((None, C, T), lambda b, j: (b, 0, j)),   # x slab
            pl.BlockSpec((N, C), lambda b, j: (0, 0)),            # weight
            pl.BlockSpec((N, 8), lambda b, j: (0, 0)),            # decode coeffs
            pl.BlockSpec((2, T), lambda b, j: (0, j)),            # grid x/y rows
        ],
        out_specs=tuple(out_specs),
        compiler_params=pltpu.CompilerParams(
            dimension_semantics=("parallel", "parallel"),
            vmem_limit_bytes=vmem_limit,
        ),
        cost_estimate=cost,
    )(x3, wmat, coef, grid_xy)

    pred = results[0]
    if HWp != HW:
        pred = pred[:, :, :HW, :]
    pred_out = pred.reshape(B, na * HW, no)          # free reshape

    raw_x = None
    if emit_raw:
        raw = results[1]
        if HWp != HW:
            raw = raw[:, :, :HW, :]
        raw_x = raw.reshape(B, na, H, W, no)         # free reshape
    return pred_out, raw_x


@functools.partial(jax.jit,
                   static_argnames=("strides", "n_classes", "emit_raw",
                                    "use_bf16_mxu"))
def yolo_head_forward(xs, weights, biases, anchors, strides, n_classes,
                      emit_raw=True, use_bf16_mxu=False):
    """Inference-mode forward of YOLOHead (out_xyxy=False).

    emit_raw=True  -> returns (cat_preds, [raw_x per level])   (inference mode)
    emit_raw=False -> returns (cat_preds, None)                 (export mode)
    All three pyramid levels run inside this single jitted function.
    """
    na = anchors.shape[1]
    no = n_classes + 5
    mxu_dtype = jnp.bfloat16 if use_bf16_mxu else None
    preds, raws = [], []
    for i, x in enumerate(xs):
        pred, raw_x = yolo_head_layer(
            x, weights[i], biases[i], anchors[i], float(strides[i]), no, na,
            emit_raw=emit_raw, mxu_dtype=mxu_dtype)
        preds.append(pred)
        raws.append(raw_x)
    cat = jnp.concatenate(preds, axis=1)
    if emit_raw:
        return cat, raws
    return cat, None


def _reference_forward(xs, weights, biases, anchors, strides, n_classes):
    """Pure-JAX reference that mirrors the torch module's math."""
    na = anchors.shape[1]
    no = n_classes + 5
    raws, preds = [], []
    for i, x in enumerate(xs):
        B, C, H, W = x.shape
        conv = jnp.einsum('bchw,nc->bnhw', x, weights[i]) + biases[i][None, :, None, None]
        raw = conv.reshape(B, na, no, H, W).transpose(0, 1, 3, 4, 2)  # (B,na,H,W,no)
        raws.append(raw)
        y = jax.nn.sigmoid(raw)
        yg, xg = jnp.meshgrid(jnp.arange(H), jnp.arange(W), indexing='ij')
        grid = jnp.stack((xg, yg), axis=2).reshape(1, 1, H, W, 2).astype(jnp.float32)
        box_xy = (y[..., 0:2] * 2.0 - 0.5 + grid) * strides[i]
        box_wh = (y[..., 2:4] * 2.0) ** 2 * anchors[i].reshape(1, na, 1, 1, 2)
        score = y[..., 4:]
        pred = jnp.concatenate(
            [box_xy.reshape(B, -1, 2), box_wh.reshape(B, -1, 2),
             score.reshape(B, -1, n_classes + 1)], axis=-1)
        preds.append(pred)
    return jnp.concatenate(preds, axis=1), raws


if __name__ == "__main__":
    # ---- config (small, consistent with the module) ----
    n_classes = 3
    no = n_classes + 5                      # 8
    anchors_cfg = ((10., 13., 16., 30., 33., 23.),
                   (30., 61., 62., 45., 59., 119.),
                   (116., 90., 156., 198., 373., 326.))
    n_channels = (16, 32, 64)
    strides = (8.0, 16.0, 32.0)
    n_layers = len(anchors_cfg)
    na = len(anchors_cfg[0]) // 2           # 3
    anchors = jnp.asarray(anchors_cfg, dtype=jnp.float32).reshape(n_layers, na, 2)

    B = 2
    img = 64
    spatial = [int(img // s) for s in strides]   # [8, 4, 2]

    key = jax.random.PRNGKey(0)
    keys = jax.random.split(key, 3 * n_layers)

    xs, weights, biases = [], [], []
    for i in range(n_layers):
        C, HWs = n_channels[i], spatial[i]
        xs.append(jax.random.normal(keys[3 * i], (B, C, HWs, HWs), dtype=jnp.float32))
        # weight in torch conv layout (out_channels, in_channels) = (na*no, C)
        weights.append(0.1 * jax.random.normal(keys[3 * i + 1], (na * no, C), dtype=jnp.float32))
        biases.append(0.1 * jax.random.normal(keys[3 * i + 2], (na * no,), dtype=jnp.float32))

    xs, weights, biases = tuple(xs), tuple(weights), tuple(biases)

    # inference mode: (cat preds, list of raw x[i])
    pred_cat, raw_list = yolo_head_forward(xs, weights, biases, anchors,
                                           strides, n_classes)
    jax.block_until_ready(pred_cat)
    for r in raw_list:
        jax.block_until_ready(r)

    # export mode path (raw output dropped inside the kernel)
    pred_only, _ = yolo_head_forward(xs, weights, biases, anchors, strides,
                                     n_classes, emit_raw=False)
    jax.block_until_ready(pred_only)

    # correctness check against pure-JAX reference
    ref_pred, ref_raws = _reference_forward(xs, weights, biases, anchors,
                                            strides, n_classes)
    assert pred_cat.shape == (B, na * sum(h * h for h in spatial), no)
    assert jnp.allclose(pred_cat, ref_pred, rtol=1e-3, atol=1e-2)
    assert jnp.allclose(pred_only, pred_cat, rtol=1e-5, atol=1e-5)
    for r, rr in zip(raw_list, ref_raws):
        assert r.shape == rr.shape
        assert jnp.allclose(r, rr, rtol=1e-3, atol=1e-2)

    print("KERNEL_OK")
</pallas_src>

<mosaic_0001>
module attributes {stable_mosaic.version = 11 : i64} {
  func.func @_yolo_layer_kernel(%arg0: i32, %arg1: i32, %arg2: memref<1x64x128xf32, #tpu.memory_space<vmem>>, %arg3: memref<24x64xf32, #tpu.memory_space<vmem>>, %arg4: memref<24x8xf32, #tpu.memory_space<vmem>>, %arg5: memref<2x128xf32, #tpu.memory_space<vmem>>, %arg6: memref<1x3x128x8xf32, #tpu.memory_space<vmem>>, %arg7: memref<1x3x128x8xf32, #tpu.memory_space<vmem>>) attributes {dimension_semantics = [#tpu.dimension_semantics<parallel>, #tpu.dimension_semantics<parallel>], iteration_bounds = array<i64: 2, 1>, scalar_prefetch = 0 : i64, scratch_operands = 0 : i64, tpu.core_type = #tpu.core_type<tc>, window_params = [{transform_indices = @transform_0, window_bounds = array<i64: 1, 64, 128>}, {pipeline_mode = #tpu.pipeline_mode<synchronous>, transform_indices = @transform_1, window_bounds = array<i64: 24, 64>}, {pipeline_mode = #tpu.pipeline_mode<synchronous>, transform_indices = @transform_2, window_bounds = array<i64: 24, 8>}, {transform_indices = @transform_3, window_bounds = array<i64: 2, 128>}, {transform_indices = @transform_4, window_bounds = array<i64: 1, 3, 128, 8>}, {transform_indices = @transform_5, window_bounds = array<i64: 1, 3, 128, 8>}]} {
    %c0 = arith.constant 0 : index
    %c0_0 = arith.constant 0 : index
    %c0_1 = arith.constant 0 : index
    %0 = vector.load %arg2[%c0, %c0_0, %c0_1] : memref<1x64x128xf32, #tpu.memory_space<vmem>>, vector<1x64x128xf32>
    %1 = vector.shape_cast %0 : vector<1x64x128xf32> to vector<64x128xf32>
    %c0_2 = arith.constant 0 : index
    %c0_3 = arith.constant 0 : index
    %2 = vector.load %arg3[%c0_2, %c0_3] : memref<24x64xf32, #tpu.memory_space<vmem>>, vector<24x64xf32>
    %c0_4 = arith.constant 0 : index
    %c0_5 = arith.constant 0 : index
    %3 = vector.load %arg4[%c0_4, %c0_5] : memref<24x8xf32, #tpu.memory_space<vmem>>, vector<24x8xf32>
    %c0_6 = arith.constant 0 : index
    %c0_7 = arith.constant 0 : index
    %4 = vector.load %arg5[%c0_6, %c0_7] : memref<2x128xf32, #tpu.memory_space<vmem>>, vector<2x128xf32>
    %cst = arith.constant dense<0.000000e+00> : vector<24x128xf32>
    %5 = tpu.matmul %2, %1, %cst {dimension_numbers = #tpu.dot_dimension_numbers<[1], [0], [0], [1], [0, 0, 1, 1], [], []>} : vector<24x64xf32>, vector<64x128xf32>, vector<24x128xf32> -> vector<24x128xf32>
    %6 = vector.extract_strided_slice %3 {offsets = [0, 0], sizes = [24, 1], strides = [1, 1]} : vector<24x8xf32> to vector<24x1xf32>
    %7 = vector.broadcast %6 : vector<24x1xf32> to vector<24x128xf32>
    %8 = arith.addf %5, %7 : vector<24x128xf32>
    %9 = arith.negf %8 : vector<24x128xf32>
    %10 = math.exp %9 : vector<24x128xf32>
    %cst_8 = arith.constant 1.000000e+00 : f32
    %11 = vector.broadcast %cst_8 : f32 to vector<24x128xf32>
    %12 = arith.addf %11, %10 : vector<24x128xf32>
    %13 = arith.divf %11, %12 : vector<24x128xf32>
    %14 = arith.addf %13, %13 : vector<24x128xf32>
    %15 = vector.extract_strided_slice %4 {offsets = [0, 0], sizes = [1, 128], strides = [1, 1]} : vector<2x128xf32> to vector<1x128xf32>
    %16 = vector.extract_strided_slice %4 {offsets = [1, 0], sizes = [1, 128], strides = [1, 1]} : vector<2x128xf32> to vector<1x128xf32>
    %17 = vector.extract_strided_slice %3 {offsets = [0, 1], sizes = [24, 1], strides = [1, 1]} : vector<24x8xf32> to vector<24x1xf32>
    %18 = vector.broadcast %17 : vector<24x1xf32> to vector<24x128xf32>
    %19 = arith.mulf %14, %18 : vector<24x128xf32>
    %20 = vector.extract_strided_slice %3 {offsets = [0, 3], sizes = [24, 1], strides = [1, 1]} : vector<24x8xf32> to vector<24x1xf32>
    %21 = vector.broadcast %15 : vector<1x128xf32> to vector<24x128xf32>
    %22 = vector.broadcast %20 : vector<24x1xf32> to vector<24x128xf32>
    %23 = arith.mulf %21, %22 : vector<24x128xf32>
    %24 = vector.extract_strided_slice %3 {offsets = [0, 4], sizes = [24, 1], strides = [1, 1]} : vector<24x8xf32> to vector<24x1xf32>
    %25 = vector.broadcast %16 : vector<1x128xf32> to vector<24x128xf32>
    %26 = vector.broadcast %24 : vector<24x1xf32> to vector<24x128xf32>
    %27 = arith.mulf %25, %26 : vector<24x128xf32>
    %28 = arith.addf %23, %27 : vector<24x128xf32>
    %29 = vector.extract_strided_slice %3 {offsets = [0, 2], sizes = [24, 1], strides = [1, 1]} : vector<24x8xf32> to vector<24x1xf32>
    %30 = vector.broadcast %29 : vector<24x1xf32> to vector<24x128xf32>
    %31 = arith.addf %28, %30 : vector<24x128xf32>
    %32 = arith.addf %19, %31 : vector<24x128xf32>
    %33 = arith.mulf %14, %14 : vector<24x128xf32>
    %34 = vector.extract_strided_slice %3 {offsets = [0, 5], sizes = [24, 1], strides = [1, 1]} : vector<24x8xf32> to vector<24x1xf32>
    %35 = vector.broadcast %34 : vector<24x1xf32> to vector<24x128xf32>
    %36 = arith.mulf %33, %35 : vector<24x128xf32>
    %37 = vector.extract_strided_slice %3 {offsets = [0, 6], sizes = [24, 1], strides = [1, 1]} : vector<24x8xf32> to vector<24x1xf32>
    %cst_9 = arith.constant 0.000000e+00 : f32
    %38 = vector.broadcast %cst_9 : f32 to vector<24x1xf32>
    %39 = arith.cmpf ogt, %37, %38 : vector<24x1xf32>
    %40 = vector.shape_cast %39 : vector<24x1xi1> to vector<24x1xi1>
    %41 = vector.broadcast %40 : vector<24x1xi1> to vector<24x128xi1>
    %42 = arith.select %41, %36, %32 : vector<24x128xi1>, vector<24x128xf32>
    %cst_10 = arith.constant 0.000000e+00 : f32
    %43 = vector.broadcast %cst_10 : f32 to vector<80x128xf32>
    %44 = tpu.concatenate %42, %8, %43 in 0 : vector<24x128xf32>, vector<24x128xf32>, vector<80x128xf32> -> vector<128x128xf32>
    %45 = tpu.transpose %44, [1, 0] : vector<128x128xf32> -> vector<128x128xf32>
    %46 = vector.extract_strided_slice %45 {offsets = [0, 0], sizes = [128, 8], strides = [1, 1]} : vector<128x128xf32> to vector<128x8xf32>
    %c0_11 = arith.constant 0 : index
    %c0_12 = arith.constant 0 : index
    %c0_13 = arith.constant 0 : index
    %c0_14 = arith.constant 0 : index
    %47 = vector.load %arg6[%c0_11, %c0_12, %c0_13, %c0_14] : memref<1x3x128x8xf32, #tpu.memory_space<vmem>>, vector<1x1x128x8xf32>
    %48 = vector.shape_cast %47 : vector<1x1x128x8xf32> to vector<128x8xf32>
    %49 = vector.shape_cast %46 : vector<128x8xf32> to vector<1x1x128x8xf32>
    tpu.vector_store %arg6[%c0_11, %c0_12, %c0_13, %c0_14], %49 {strides = array<i32>} : memref<1x3x128x8xf32, #tpu.memory_space<vmem>>, vector<1x1x128x8xf32>,
    %50 = vector.extract_strided_slice %45 {offsets = [0, 24], sizes = [128, 8], strides = [1, 1]} : vector<128x128xf32> to vector<128x8xf32>
    %c0_15 = arith.constant 0 : index
    %c0_16 = arith.constant 0 : index
    %c0_17 = arith.constant 0 : index
    %c0_18 = arith.constant 0 : index
    %51 = vector.load %arg7[%c0_15, %c0_16, %c0_17, %c0_18] : memref<1x3x128x8xf32, #tpu.memory_space<vmem>>, vector<1x1x128x8xf32>
    %52 = vector.shape_cast %51 : vector<1x1x128x8xf32> to vector<128x8xf32>
    %53 = vector.shape_cast %50 : vector<128x8xf32> to vector<1x1x128x8xf32>
    tpu.vector_store %arg7[%c0_15, %c0_16, %c0_17, %c0_18], %53 {strides = array<i32>} : memref<1x3x128x8xf32, #tpu.memory_space<vmem>>, vector<1x1x128x8xf32>,
    %54 = vector.extract_strided_slice %45 {offsets = [0, 8], sizes = [128, 8], strides = [1, 1]} : vector<128x128xf32> to vector<128x8xf32>
    %c0_19 = arith.constant 0 : index
    %c1 = arith.constant 1 : index
    %c0_20 = arith.constant 0 : index
    %c0_21 = arith.constant 0 : index
    %55 = vector.load %arg6[%c0_19, %c1, %c0_20, %c0_21] : memref<1x3x128x8xf32, #tpu.memory_space<vmem>>, vector<1x1x128x8xf32>
    %56 = vector.shape_cast %55 : vector<1x1x128x8xf32> to vector<128x8xf32>
    %57 = vector.shape_cast %54 : vector<128x8xf32> to vector<1x1x128x8xf32>
    tpu.vector_store %arg6[%c0_19, %c1, %c0_20, %c0_21], %57 {strides = array<i32>} : memref<1x3x128x8xf32, #tpu.memory_space<vmem>>, vector<1x1x128x8xf32>,
    %58 = vector.extract_strided_slice %45 {offsets = [0, 32], sizes = [128, 8], strides = [1, 1]} : vector<128x128xf32> to vector<128x8xf32>
    %c0_22 = arith.constant 0 : index
    %c1_23 = arith.constant 1 : index
    %c0_24 = arith.constant 0 : index
    %c0_25 = arith.constant 0 : index
    %59 = vector.load %arg7[%c0_22, %c1_23, %c0_24, %c0_25] : memref<1x3x128x8xf32, #tpu.memory_space<vmem>>, vector<1x1x128x8xf32>
    %60 = vector.shape_cast %59 : vector<1x1x128x8xf32> to vector<128x8xf32>
    %61 = vector.shape_cast %58 : vector<128x8xf32> to vector<1x1x128x8xf32>
    tpu.vector_store %arg7[%c0_22, %c1_23, %c0_24, %c0_25], %61 {strides = array<i32>} : memref<1x3x128x8xf32, #tpu.memory_space<vmem>>, vector<1x1x128x8xf32>,
    %62 = vector.extract_strided_slice %45 {offsets = [0, 16], sizes = [128, 8], strides = [1, 1]} : vector<128x128xf32> to vector<128x8xf32>
    %c0_26 = arith.constant 0 : index
    %c2 = arith.constant 2 : index
    %c0_27 = arith.constant 0 : index
    %c0_28 = arith.constant 0 : index
    %63 = vector.load %arg6[%c0_26, %c2, %c0_27, %c0_28] : memref<1x3x128x8xf32, #tpu.memory_space<vmem>>, vector<1x1x128x8xf32>
    %64 = vector.shape_cast %63 : vector<1x1x128x8xf32> to vector<128x8xf32>
    %65 = vector.shape_cast %62 : vector<128x8xf32> to vector<1x1x128x8xf32>
    tpu.vector_store %arg6[%c0_26, %c2, %c0_27, %c0_28], %65 {strides = array<i32>} : memref<1x3x128x8xf32, #tpu.memory_space<vmem>>, vector<1x1x128x8xf32>,
    %66 = vector.extract_strided_slice %45 {offsets = [0, 40], sizes = [128, 8], strides = [1, 1]} : vector<128x128xf32> to vector<128x8xf32>
    %c0_29 = arith.constant 0 : index
    %c2_30 = arith.constant 2 : index
    %c0_31 = arith.constant 0 : index
    %c0_32 = arith.constant 0 : index
    %67 = vector.load %arg7[%c0_29, %c2_30, %c0_31, %c0_32] : memref<1x3x128x8xf32, #tpu.memory_space<vmem>>, vector<1x1x128x8xf32>
    %68 = vector.shape_cast %67 : vector<1x1x128x8xf32> to vector<128x8xf32>
    %69 = vector.shape_cast %66 : vector<128x8xf32> to vector<1x1x128x8xf32>
    tpu.vector_store %arg7[%c0_29, %c2_30, %c0_31, %c0_32], %69 {strides = array<i32>} : memref<1x3x128x8xf32, #tpu.memory_space<vmem>>, vector<1x1x128x8xf32>,
    return
  }
  func.func @transform_0(%arg0: i32, %arg1: i32) -> (i32, i32, i32) {
    %c0_i32 = arith.constant 0 : i32
    %c0_i32_0 = arith.constant 0 : i32
    return %arg0, %c0_i32, %arg1 : i32, i32, i32
  }
  func.func @transform_1(%arg0: i32, %arg1: i32) -> (i32, i32) {
    %c0_i32 = arith.constant 0 : i32
    %c0_i32_0 = arith.constant 0 : i32
    %c0_i32_1 = arith.constant 0 : i32
    return %c0_i32, %c0_i32_0 : i32, i32
  }
  func.func @transform_2(%arg0: i32, %arg1: i32) -> (i32, i32) {
    %c0_i32 = arith.constant 0 : i32
    %c0_i32_0 = arith.constant 0 : i32
    %c0_i32_1 = arith.constant 0 : i32
    return %c0_i32, %c0_i32_0 : i32, i32
  }
  func.func @transform_3(%arg0: i32, %arg1: i32) -> (i32, i32) {
    %c0_i32 = arith.constant 0 : i32
    %c0_i32_0 = arith.constant 0 : i32
    return %c0_i32, %arg1 : i32, i32
  }
  func.func @transform_4(%arg0: i32, %arg1: i32) -> (i32, i32, i32, i32) {
    %c0_i32 = arith.constant 0 : i32
    %c0_i32_0 = arith.constant 0 : i32
    %c0_i32_1 = arith.constant 0 : i32
    return %arg0, %c0_i32, %arg1, %c0_i32_0 : i32, i32, i32, i32
  }
  func.func @transform_5(%arg0: i32, %arg1: i32) -> (i32, i32, i32, i32) {
    %c0_i32 = arith.constant 0 : i32
    %c0_i32_0 = arith.constant 0 : i32
    %c0_i32_1 = arith.constant 0 : i32
    return %arg0, %c0_i32, %arg1, %c0_i32_0 : i32, i32, i32, i32
  }
}

module attributes {stable_mosaic.version = 11 : i64} {
  func.func @_yolo_layer_kernel(%arg0: i32, %arg1: i32, %arg2: memref<1x32x128xf32, #tpu.memory_space<vmem>>, %arg3: memref<24x32xf32, #tpu.memory_space<vmem>>, %arg4: memref<24x8xf32, #tpu.memory_space<vmem>>, %arg5: memref<2x128xf32, #tpu.memory_space<vmem>>, %arg6: memref<1x3x128x8xf32, #tpu.memory_space<vmem>>, %arg7: memref<1x3x128x8xf32, #tpu.memory_space<vmem>>) attributes {dimension_semantics = [#tpu.dimension_semantics<parallel>, #tpu.dimension_semantics<parallel>], iteration_bounds = array<i64: 2, 1>, scalar_prefetch = 0 : i64, scratch_operands = 0 : i64, tpu.core_type = #tpu.core_type<tc>, window_params = [{transform_indices = @transform_0, window_bounds = array<i64: 1, 32, 128>}, {pipeline_mode = #tpu.pipeline_mode<synchronous>, transform_indices = @transform_1, window_bounds = array<i64: 24, 32>}, {pipeline_mode = #tpu.pipeline_mode<synchronous>, transform_indices = @transform_2, window_bounds = array<i64: 24, 8>}, {transform_indices = @transform_3, window_bounds = array<i64: 2, 128>}, {transform_indices = @transform_4, window_bounds = array<i64: 1, 3, 128, 8>}, {transform_indices = @transform_5, window_bounds = array<i64: 1, 3, 128, 8>}]} {
    %c0 = arith.constant 0 : index
    %c0_0 = arith.constant 0 : index
    %c0_1 = arith.constant 0 : index
    %0 = vector.load %arg2[%c0, %c0_0, %c0_1] : memref<1x32x128xf32, #tpu.memory_space<vmem>>, vector<1x32x128xf32>
    %1 = vector.shape_cast %0 : vector<1x32x128xf32> to vector<32x128xf32>
    %c0_2 = arith.constant 0 : index
    %c0_3 = arith.constant 0 : index
    %2 = vector.load %arg3[%c0_2, %c0_3] : memref<24x32xf32, #tpu.memory_space<vmem>>, vector<24x32xf32>
    %c0_4 = arith.constant 0 : index
    %c0_5 = arith.constant 0 : index
    %3 = vector.load %arg4[%c0_4, %c0_5] : memref<24x8xf32, #tpu.memory_space<vmem>>, vector<24x8xf32>
    %c0_6 = arith.constant 0 : index
    %c0_7 = arith.constant 0 : index
    %4 = vector.load %arg5[%c0_6, %c0_7] : memref<2x128xf32, #tpu.memory_space<vmem>>, vector<2x128xf32>
    %cst = arith.constant dense<0.000000e+00> : vector<24x128xf32>
    %5 = tpu.matmul %2, %1, %cst {dimension_numbers = #tpu.dot_dimension_numbers<[1], [0], [0], [1], [0, 0, 1, 1], [], []>} : vector<24x32xf32>, vector<32x128xf32>, vector<24x128xf32> -> vector<24x128xf32>
    %6 = vector.extract_strided_slice %3 {offsets = [0, 0], sizes = [24, 1], strides = [1, 1]} : vector<24x8xf32> to vector<24x1xf32>
    %7 = vector.broadcast %6 : vector<24x1xf32> to vector<24x128xf32>
    %8 = arith.addf %5, %7 : vector<24x128xf32>
    %9 = arith.negf %8 : vector<24x128xf32>
    %10 = math.exp %9 : vector<24x128xf32>
    %cst_8 = arith.constant 1.000000e+00 : f32
    %11 = vector.broadcast %cst_8 : f32 to vector<24x128xf32>
    %12 = arith.addf %11, %10 : vector<24x128xf32>
    %13 = arith.divf %11, %12 : vector<24x128xf32>
    %14 = arith.addf %13, %13 : vector<24x128xf32>
    %15 = vector.extract_strided_slice %4 {offsets = [0, 0], sizes = [1, 128], strides = [1, 1]} : vector<2x128xf32> to vector<1x128xf32>
    %16 = vector.extract_strided_slice %4 {offsets = [1, 0], sizes = [1, 128], strides = [1, 1]} : vector<2x128xf32> to vector<1x128xf32>
    %17 = vector.extract_strided_slice %3 {offsets = [0, 1], sizes = [24, 1], strides = [1, 1]} : vector<24x8xf32> to vector<24x1xf32>
    %18 = vector.broadcast %17 : vector<24x1xf32> to vector<24x128xf32>
    %19 = arith.mulf %14, %18 : vector<24x128xf32>
    %20 = vector.extract_strided_slice %3 {offsets = [0, 3], sizes = [24, 1], strides = [1, 1]} : vector<24x8xf32> to vector<24x1xf32>
    %21 = vector.broadcast %15 : vector<1x128xf32> to vector<24x128xf32>
    %22 = vector.broadcast %20 : vector<24x1xf32> to vector<24x128xf32>
    %23 = arith.mulf %21, %22 : vector<24x128xf32>
    %24 = vector.extract_strided_slice %3 {offsets = [0, 4], sizes = [24, 1], strides = [1, 1]} : vector<24x8xf32> to vector<24x1xf32>
    %25 = vector.broadcast %16 : vector<1x128xf32> to vector<24x128xf32>
    %26 = vector.broadcast %24 : vector<24x1xf32> to vector<24x128xf32>
    %27 = arith.mulf %25, %26 : vector<24x128xf32>
    %28 = arith.addf %23, %27 : vector<24x128xf32>
    %29 = vector.extract_strided_slice %3 {offsets = [0, 2], sizes = [24, 1], strides = [1, 1]} : vector<24x8xf32> to vector<24x1xf32>
    %30 = vector.broadcast %29 : vector<24x1xf32> to vector<24x128xf32>
    %31 = arith.addf %28, %30 : vector<24x128xf32>
    %32 = arith.addf %19, %31 : vector<24x128xf32>
    %33 = arith.mulf %14, %14 : vector<24x128xf32>
    %34 = vector.extract_strided_slice %3 {offsets = [0, 5], sizes = [24, 1], strides = [1, 1]} : vector<24x8xf32> to vector<24x1xf32>
    %35 = vector.broadcast %34 : vector<24x1xf32> to vector<24x128xf32>
    %36 = arith.mulf %33, %35 : vector<24x128xf32>
    %37 = vector.extract_strided_slice %3 {offsets = [0, 6], sizes = [24, 1], strides = [1, 1]} : vector<24x8xf32> to vector<24x1xf32>
    %cst_9 = arith.constant 0.000000e+00 : f32
    %38 = vector.broadcast %cst_9 : f32 to vector<24x1xf32>
    %39 = arith.cmpf ogt, %37, %38 : vector<24x1xf32>
    %40 = vector.shape_cast %39 : vector<24x1xi1> to vector<24x1xi1>
    %41 = vector.broadcast %40 : vector<24x1xi1> to vector<24x128xi1>
    %42 = arith.select %41, %36, %32 : vector<24x128xi1>, vector<24x128xf32>
    %cst_10 = arith.constant 0.000000e+00 : f32
    %43 = vector.broadcast %cst_10 : f32 to vector<80x128xf32>
    %44 = tpu.concatenate %42, %8, %43 in 0 : vector<24x128xf32>, vector<24x128xf32>, vector<80x128xf32> -> vector<128x128xf32>
    %45 = tpu.transpose %44, [1, 0] : vector<128x128xf32> -> vector<128x128xf32>
    %46 = vector.extract_strided_slice %45 {offsets = [0, 0], sizes = [128, 8], strides = [1, 1]} : vector<128x128xf32> to vector<128x8xf32>
    %c0_11 = arith.constant 0 : index
    %c0_12 = arith.constant 0 : index
    %c0_13 = arith.constant 0 : index
    %c0_14 = arith.constant 0 : index
    %47 = vector.load %arg6[%c0_11, %c0_12, %c0_13, %c0_14] : memref<1x3x128x8xf32, #tpu.memory_space<vmem>>, vector<1x1x128x8xf32>
    %48 = vector.shape_cast %47 : vector<1x1x128x8xf32> to vector<128x8xf32>
    %49 = vector.shape_cast %46 : vector<128x8xf32> to vector<1x1x128x8xf32>
    tpu.vector_store %arg6[%c0_11, %c0_12, %c0_13, %c0_14], %49 {strides = array<i32>} : memref<1x3x128x8xf32, #tpu.memory_space<vmem>>, vector<1x1x128x8xf32>,
    %50 = vector.extract_strided_slice %45 {offsets = [0, 24], sizes = [128, 8], strides = [1, 1]} : vector<128x128xf32> to vector<128x8xf32>
    %c0_15 = arith.constant 0 : index
    %c0_16 = arith.constant 0 : index
    %c0_17 = arith.constant 0 : index
    %c0_18 = arith.constant 0 : index
    %51 = vector.load %arg7[%c0_15, %c0_16, %c0_17, %c0_18] : memref<1x3x128x8xf32, #tpu.memory_space<vmem>>, vector<1x1x128x8xf32>
    %52 = vector.shape_cast %51 : vector<1x1x128x8xf32> to vector<128x8xf32>
    %53 = vector.shape_cast %50 : vector<128x8xf32> to vector<1x1x128x8xf32>
    tpu.vector_store %arg7[%c0_15, %c0_16, %c0_17, %c0_18], %53 {strides = array<i32>} : memref<1x3x128x8xf32, #tpu.memory_space<vmem>>, vector<1x1x128x8xf32>,
    %54 = vector.extract_strided_slice %45 {offsets = [0, 8], sizes = [128, 8], strides = [1, 1]} : vector<128x128xf32> to vector<128x8xf32>
    %c0_19 = arith.constant 0 : index
    %c1 = arith.constant 1 : index
    %c0_20 = arith.constant 0 : index
    %c0_21 = arith.constant 0 : index
    %55 = vector.load %arg6[%c0_19, %c1, %c0_20, %c0_21] : memref<1x3x128x8xf32, #tpu.memory_space<vmem>>, vector<1x1x128x8xf32>
    %56 = vector.shape_cast %55 : vector<1x1x128x8xf32> to vector<128x8xf32>
    %57 = vector.shape_cast %54 : vector<128x8xf32> to vector<1x1x128x8xf32>
    tpu.vector_store %arg6[%c0_19, %c1, %c0_20, %c0_21], %57 {strides = array<i32>} : memref<1x3x128x8xf32, #tpu.memory_space<vmem>>, vector<1x1x128x8xf32>,
    %58 = vector.extract_strided_slice %45 {offsets = [0, 32], sizes = [128, 8], strides = [1, 1]} : vector<128x128xf32> to vector<128x8xf32>
    %c0_22 = arith.constant 0 : index
    %c1_23 = arith.constant 1 : index
    %c0_24 = arith.constant 0 : index
    %c0_25 = arith.constant 0 : index
    %59 = vector.load %arg7[%c0_22, %c1_23, %c0_24, %c0_25] : memref<1x3x128x8xf32, #tpu.memory_space<vmem>>, vector<1x1x128x8xf32>
    %60 = vector.shape_cast %59 : vector<1x1x128x8xf32> to vector<128x8xf32>
    %61 = vector.shape_cast %58 : vector<128x8xf32> to vector<1x1x128x8xf32>
    tpu.vector_store %arg7[%c0_22, %c1_23, %c0_24, %c0_25], %61 {strides = array<i32>} : memref<1x3x128x8xf32, #tpu.memory_space<vmem>>, vector<1x1x128x8xf32>,
    %62 = vector.extract_strided_slice %45 {offsets = [0, 16], sizes = [128, 8], strides = [1, 1]} : vector<128x128xf32> to vector<128x8xf32>
    %c0_26 = arith.constant 0 : index
    %c2 = arith.constant 2 : index
    %c0_27 = arith.constant 0 : index
    %c0_28 = arith.constant 0 : index
    %63 = vector.load %arg6[%c0_26, %c2, %c0_27, %c0_28] : memref<1x3x128x8xf32, #tpu.memory_space<vmem>>, vector<1x1x128x8xf32>
    %64 = vector.shape_cast %63 : vector<1x1x128x8xf32> to vector<128x8xf32>
    %65 = vector.shape_cast %62 : vector<128x8xf32> to vector<1x1x128x8xf32>
    tpu.vector_store %arg6[%c0_26, %c2, %c0_27, %c0_28], %65 {strides = array<i32>} : memref<1x3x128x8xf32, #tpu.memory_space<vmem>>, vector<1x1x128x8xf32>,
    %66 = vector.extract_strided_slice %45 {offsets = [0, 40], sizes = [128, 8], strides = [1, 1]} : vector<128x128xf32> to vector<128x8xf32>
    %c0_29 = arith.constant 0 : index
    %c2_30 = arith.constant 2 : index
    %c0_31 = arith.constant 0 : index
    %c0_32 = arith.constant 0 : index
    %67 = vector.load %arg7[%c0_29, %c2_30, %c0_31, %c0_32] : memref<1x3x128x8xf32, #tpu.memory_space<vmem>>, vector<1x1x128x8xf32>
    %68 = vector.shape_cast %67 : vector<1x1x128x8xf32> to vector<128x8xf32>
    %69 = vector.shape_cast %66 : vector<128x8xf32> to vector<1x1x128x8xf32>
    tpu.vector_store %arg7[%c0_29, %c2_30, %c0_31, %c0_32], %69 {strides = array<i32>} : memref<1x3x128x8xf32, #tpu.memory_space<vmem>>, vector<1x1x128x8xf32>,
    return
  }
  func.func @transform_0(%arg0: i32, %arg1: i32) -> (i32, i32, i32) {
    %c0_i32 = arith.constant 0 : i32
    %c0_i32_0 = arith.constant 0 : i32
    return %arg0, %c0_i32, %arg1 : i32, i32, i32
  }
  func.func @transform_1(%arg0: i32, %arg1: i32) -> (i32, i32) {
    %c0_i32 = arith.constant 0 : i32
    %c0_i32_0 = arith.constant 0 : i32
    %c0_i32_1 = arith.constant 0 : i32
    return %c0_i32, %c0_i32_0 : i32, i32
  }
  func.func @transform_2(%arg0: i32, %arg1: i32) -> (i32, i32) {
    %c0_i32 = arith.constant 0 : i32
    %c0_i32_0 = arith.constant 0 : i32
    %c0_i32_1 = arith.constant 0 : i32
    return %c0_i32, %c0_i32_0 : i32, i32
  }
  func.func @transform_3(%arg0: i32, %arg1: i32) -> (i32, i32) {
    %c0_i32 = arith.constant 0 : i32
    %c0_i32_0 = arith.constant 0 : i32
    return %c0_i32, %arg1 : i32, i32
  }
  func.func @transform_4(%arg0: i32, %arg1: i32) -> (i32, i32, i32, i32) {
    %c0_i32 = arith.constant 0 : i32
    %c0_i32_0 = arith.constant 0 : i32
    %c0_i32_1 = arith.constant 0 : i32
    return %arg0, %c0_i32, %arg1, %c0_i32_0 : i32, i32, i32, i32
  }
  func.func @transform_5(%arg0: i32, %arg1: i32) -> (i32, i32, i32, i32) {
    %c0_i32 = arith.constant 0 : i32
    %c0_i32_0 = arith.constant 0 : i32
    %c0_i32_1 = arith.constant 0 : i32
    return %arg0, %c0_i32, %arg1, %c0_i32_0 : i32, i32, i32, i32
  }
}

module attributes {stable_mosaic.version = 11 : i64} {
  func.func @_yolo_layer_kernel(%arg0: i32, %arg1: i32, %arg2: memref<1x16x128xf32, #tpu.memory_space<vmem>>, %arg3: memref<24x16xf32, #tpu.memory_space<vmem>>, %arg4: memref<24x8xf32, #tpu.memory_space<vmem>>, %arg5: memref<2x128xf32, #tpu.memory_space<vmem>>, %arg6: memref<1x3x128x8xf32, #tpu.memory_space<vmem>>, %arg7: memref<1x3x128x8xf32, #tpu.memory_space<vmem>>) attributes {dimension_semantics = [#tpu.dimension_semantics<parallel>, #tpu.dimension_semantics<parallel>], iteration_bounds = array<i64: 2, 1>, scalar_prefetch = 0 : i64, scratch_operands = 0 : i64, tpu.core_type = #tpu.core_type<tc>, window_params = [{transform_indices = @transform_0, window_bounds = array<i64: 1, 16, 128>}, {pipeline_mode = #tpu.pipeline_mode<synchronous>, transform_indices = @transform_1, window_bounds = array<i64: 24, 16>}, {pipeline_mode = #tpu.pipeline_mode<synchronous>, transform_indices = @transform_2, window_bounds = array<i64: 24, 8>}, {transform_indices = @transform_3, window_bounds = array<i64: 2, 128>}, {transform_indices = @transform_4, window_bounds = array<i64: 1, 3, 128, 8>}, {transform_indices = @transform_5, window_bounds = array<i64: 1, 3, 128, 8>}]} {
    %c0 = arith.constant 0 : index
    %c0_0 = arith.constant 0 : index
    %c0_1 = arith.constant 0 : index
    %0 = vector.load %arg2[%c0, %c0_0, %c0_1] : memref<1x16x128xf32, #tpu.memory_space<vmem>>, vector<1x16x128xf32>
    %1 = vector.shape_cast %0 : vector<1x16x128xf32> to vector<16x128xf32>
    %c0_2 = arith.constant 0 : index
    %c0_3 = arith.constant 0 : index
    %2 = vector.load %arg3[%c0_2, %c0_3] : memref<24x16xf32, #tpu.memory_space<vmem>>, vector<24x16xf32>
    %c0_4 = arith.constant 0 : index
    %c0_5 = arith.constant 0 : index
    %3 = vector.load %arg4[%c0_4, %c0_5] : memref<24x8xf32, #tpu.memory_space<vmem>>, vector<24x8xf32>
    %c0_6 = arith.constant 0 : index
    %c0_7 = arith.constant 0 : index
    %4 = vector.load %arg5[%c0_6, %c0_7] : memref<2x128xf32, #tpu.memory_space<vmem>>, vector<2x128xf32>
    %cst = arith.constant dense<0.000000e+00> : vector<24x128xf32>
    %5 = tpu.matmul %2, %1, %cst {dimension_numbers = #tpu.dot_dimension_numbers<[1], [0], [0], [1], [0, 0, 1, 1], [], []>} : vector<24x16xf32>, vector<16x128xf32>, vector<24x128xf32> -> vector<24x128xf32>
    %6 = vector.extract_strided_slice %3 {offsets = [0, 0], sizes = [24, 1], strides = [1, 1]} : vector<24x8xf32> to vector<24x1xf32>
    %7 = vector.broadcast %6 : vector<24x1xf32> to vector<24x128xf32>
    %8 = arith.addf %5, %7 : vector<24x128xf32>
    %9 = arith.negf %8 : vector<24x128xf32>
    %10 = math.exp %9 : vector<24x128xf32>
    %cst_8 = arith.constant 1.000000e+00 : f32
    %11 = vector.broadcast %cst_8 : f32 to vector<24x128xf32>
    %12 = arith.addf %11, %10 : vector<24x128xf32>
    %13 = arith.divf %11, %12 : vector<24x128xf32>
    %14 = arith.addf %13, %13 : vector<24x128xf32>
    %15 = vector.extract_strided_slice %4 {offsets = [0, 0], sizes = [1, 128], strides = [1, 1]} : vector<2x128xf32> to vector<1x128xf32>
    %16 = vector.extract_strided_slice %4 {offsets = [1, 0], sizes = [1, 128], strides = [1, 1]} : vector<2x128xf32> to vector<1x128xf32>
    %17 = vector.extract_strided_slice %3 {offsets = [0, 1], sizes = [24, 1], strides = [1, 1]} : vector<24x8xf32> to vector<24x1xf32>
    %18 = vector.broadcast %17 : vector<24x1xf32> to vector<24x128xf32>
    %19 = arith.mulf %14, %18 : vector<24x128xf32>
    %20 = vector.extract_strided_slice %3 {offsets = [0, 3], sizes = [24, 1], strides = [1, 1]} : vector<24x8xf32> to vector<24x1xf32>
    %21 = vector.broadcast %15 : vector<1x128xf32> to vector<24x128xf32>
    %22 = vector.broadcast %20 : vector<24x1xf32> to vector<24x128xf32>
    %23 = arith.mulf %21, %22 : vector<24x128xf32>
    %24 = vector.extract_strided_slice %3 {offsets = [0, 4], sizes = [24, 1], strides = [1, 1]} : vector<24x8xf32> to vector<24x1xf32>
    %25 = vector.broadcast %16 : vector<1x128xf32> to vector<24x128xf32>
    %26 = vector.broadcast %24 : vector<24x1xf32> to vector<24x128xf32>
    %27 = arith.mulf %25, %26 : vector<24x128xf32>
    %28 = arith.addf %23, %27 : vector<24x128xf32>
    %29 = vector.extract_strided_slice %3 {offsets = [0, 2], sizes = [24, 1], strides = [1, 1]} : vector<24x8xf32> to vector<24x1xf32>
    %30 = vector.broadcast %29 : vector<24x1xf32> to vector<24x128xf32>
    %31 = arith.addf %28, %30 : vector<24x128xf32>
    %32 = arith.addf %19, %31 : vector<24x128xf32>
    %33 = arith.mulf %14, %14 : vector<24x128xf32>
    %34 = vector.extract_strided_slice %3 {offsets = [0, 5], sizes = [24, 1], strides = [1, 1]} : vector<24x8xf32> to vector<24x1xf32>
    %35 = vector.broadcast %34 : vector<24x1xf32> to vector<24x128xf32>
    %36 = arith.mulf %33, %35 : vector<24x128xf32>
    %37 = vector.extract_strided_slice %3 {offsets = [0, 6], sizes = [24, 1], strides = [1, 1]} : vector<24x8xf32> to vector<24x1xf32>
    %cst_9 = arith.constant 0.000000e+00 : f32
    %38 = vector.broadcast %cst_9 : f32 to vector<24x1xf32>
    %39 = arith.cmpf ogt, %37, %38 : vector<24x1xf32>
    %40 = vector.shape_cast %39 : vector<24x1xi1> to vector<24x1xi1>
    %41 = vector.broadcast %40 : vector<24x1xi1> to vector<24x128xi1>
    %42 = arith.select %41, %36, %32 : vector<24x128xi1>, vector<24x128xf32>
    %cst_10 = arith.constant 0.000000e+00 : f32
    %43 = vector.broadcast %cst_10 : f32 to vector<80x128xf32>
    %44 = tpu.concatenate %42, %8, %43 in 0 : vector<24x128xf32>, vector<24x128xf32>, vector<80x128xf32> -> vector<128x128xf32>
    %45 = tpu.transpose %44, [1, 0] : vector<128x128xf32> -> vector<128x128xf32>
    %46 = vector.extract_strided_slice %45 {offsets = [0, 0], sizes = [128, 8], strides = [1, 1]} : vector<128x128xf32> to vector<128x8xf32>
    %c0_11 = arith.constant 0 : index
    %c0_12 = arith.constant 0 : index
    %c0_13 = arith.constant 0 : index
    %c0_14 = arith.constant 0 : index
    %47 = vector.load %arg6[%c0_11, %c0_12, %c0_13, %c0_14] : memref<1x3x128x8xf32, #tpu.memory_space<vmem>>, vector<1x1x128x8xf32>
    %48 = vector.shape_cast %47 : vector<1x1x128x8xf32> to vector<128x8xf32>
    %49 = vector.shape_cast %46 : vector<128x8xf32> to vector<1x1x128x8xf32>
    tpu.vector_store %arg6[%c0_11, %c0_12, %c0_13, %c0_14], %49 {strides = array<i32>} : memref<1x3x128x8xf32, #tpu.memory_space<vmem>>, vector<1x1x128x8xf32>,
    %50 = vector.extract_strided_slice %45 {offsets = [0, 24], sizes = [128, 8], strides = [1, 1]} : vector<128x128xf32> to vector<128x8xf32>
    %c0_15 = arith.constant 0 : index
    %c0_16 = arith.constant 0 : index
    %c0_17 = arith.constant 0 : index
    %c0_18 = arith.constant 0 : index
    %51 = vector.load %arg7[%c0_15, %c0_16, %c0_17, %c0_18] : memref<1x3x128x8xf32, #tpu.memory_space<vmem>>, vector<1x1x128x8xf32>
    %52 = vector.shape_cast %51 : vector<1x1x128x8xf32> to vector<128x8xf32>
    %53 = vector.shape_cast %50 : vector<128x8xf32> to vector<1x1x128x8xf32>
    tpu.vector_store %arg7[%c0_15, %c0_16, %c0_17, %c0_18], %53 {strides = array<i32>} : memref<1x3x128x8xf32, #tpu.memory_space<vmem>>, vector<1x1x128x8xf32>,
    %54 = vector.extract_strided_slice %45 {offsets = [0, 8], sizes = [128, 8], strides = [1, 1]} : vector<128x128xf32> to vector<128x8xf32>
    %c0_19 = arith.constant 0 : index
    %c1 = arith.constant 1 : index
    %c0_20 = arith.constant 0 : index
    %c0_21 = arith.constant 0 : index
    %55 = vector.load %arg6[%c0_19, %c1, %c0_20, %c0_21] : memref<1x3x128x8xf32, #tpu.memory_space<vmem>>, vector<1x1x128x8xf32>
    %56 = vector.shape_cast %55 : vector<1x1x128x8xf32> to vector<128x8xf32>
    %57 = vector.shape_cast %54 : vector<128x8xf32> to vector<1x1x128x8xf32>
    tpu.vector_store %arg6[%c0_19, %c1, %c0_20, %c0_21], %57 {strides = array<i32>} : memref<1x3x128x8xf32, #tpu.memory_space<vmem>>, vector<1x1x128x8xf32>,
    %58 = vector.extract_strided_slice %45 {offsets = [0, 32], sizes = [128, 8], strides = [1, 1]} : vector<128x128xf32> to vector<128x8xf32>
    %c0_22 = arith.constant 0 : index
    %c1_23 = arith.constant 1 : index
    %c0_24 = arith.constant 0 : index
    %c0_25 = arith.constant 0 : index
    %59 = vector.load %arg7[%c0_22, %c1_23, %c0_24, %c0_25] : memref<1x3x128x8xf32, #tpu.memory_space<vmem>>, vector<1x1x128x8xf32>
    %60 = vector.shape_cast %59 : vector<1x1x128x8xf32> to vector<128x8xf32>
    %61 = vector.shape_cast %58 : vector<128x8xf32> to vector<1x1x128x8xf32>
    tpu.vector_store %arg7[%c0_22, %c1_23, %c0_24, %c0_25], %61 {strides = array<i32>} : memref<1x3x128x8xf32, #tpu.memory_space<vmem>>, vector<1x1x128x8xf32>,
    %62 = vector.extract_strided_slice %45 {offsets = [0, 16], sizes = [128, 8], strides = [1, 1]} : vector<128x128xf32> to vector<128x8xf32>
    %c0_26 = arith.constant 0 : index
    %c2 = arith.constant 2 : index
    %c0_27 = arith.constant 0 : index
    %c0_28 = arith.constant 0 : index
    %63 = vector.load %arg6[%c0_26, %c2, %c0_27, %c0_28] : memref<1x3x128x8xf32, #tpu.memory_space<vmem>>, vector<1x1x128x8xf32>
    %64 = vector.shape_cast %63 : vector<1x1x128x8xf32> to vector<128x8xf32>
    %65 = vector.shape_cast %62 : vector<128x8xf32> to vector<1x1x128x8xf32>
    tpu.vector_store %arg6[%c0_26, %c2, %c0_27, %c0_28], %65 {strides = array<i32>} : memref<1x3x128x8xf32, #tpu.memory_space<vmem>>, vector<1x1x128x8xf32>,
    %66 = vector.extract_strided_slice %45 {offsets = [0, 40], sizes = [128, 8], strides = [1, 1]} : vector<128x128xf32> to vector<128x8xf32>
    %c0_29 = arith.constant 0 : index
    %c2_30 = arith.constant 2 : index
    %c0_31 = arith.constant 0 : index
    %c0_32 = arith.constant 0 : index
    %67 = vector.load %arg7[%c0_29, %c2_30, %c0_31, %c0_32] : memref<1x3x128x8xf32, #tpu.memory_space<vmem>>, vector<1x1x128x8xf32>
    %68 = vector.shape_cast %67 : vector<1x1x128x8xf32> to vector<128x8xf32>
    %69 = vector.shape_cast %66 : vector<128x8xf32> to vector<1x1x128x8xf32>
    tpu.vector_store %arg7[%c0_29, %c2_30, %c0_31, %c0_32], %69 {strides = array<i32>} : memref<1x3x128x8xf32, #tpu.memory_space<vmem>>, vector<1x1x128x8xf32>,
    return
  }
  func.func @transform_0(%arg0: i32, %arg1: i32) -> (i32, i32, i32) {
    %c0_i32 = arith.constant 0 : i32
    %c0_i32_0 = arith.constant 0 : i32
    return %arg0, %c0_i32, %arg1 : i32, i32, i32
  }
  func.func @transform_1(%arg0: i32, %arg1: i32) -> (i32, i32) {
    %c0_i32 = arith.constant 0 : i32
    %c0_i32_0 = arith.constant 0 : i32
    %c0_i32_1 = arith.constant 0 : i32
    return %c0_i32, %c0_i32_0 : i32, i32
  }
  func.func @transform_2(%arg0: i32, %arg1: i32) -> (i32, i32) {
    %c0_i32 = arith.constant 0 : i32
    %c0_i32_0 = arith.constant 0 : i32
    %c0_i32_1 = arith.constant 0 : i32
    return %c0_i32, %c0_i32_0 : i32, i32
  }
  func.func @transform_3(%arg0: i32, %arg1: i32) -> (i32, i32) {
    %c0_i32 = arith.constant 0 : i32
    %c0_i32_0 = arith.constant 0 : i32
    return %c0_i32, %arg1 : i32, i32
  }
  func.func @transform_4(%arg0: i32, %arg1: i32) -> (i32, i32, i32, i32) {
    %c0_i32 = arith.constant 0 : i32
    %c0_i32_0 = arith.constant 0 : i32
    %c0_i32_1 = arith.constant 0 : i32
    return %arg0, %c0_i32, %arg1, %c0_i32_0 : i32, i32, i32, i32
  }
  func.func @transform_5(%arg0: i32, %arg1: i32) -> (i32, i32, i32, i32) {
    %c0_i32 = arith.constant 0 : i32
    %c0_i32_0 = arith.constant 0 : i32
    %c0_i32_1 = arith.constant 0 : i32
    return %arg0, %c0_i32, %arg1, %c0_i32_0 : i32, i32, i32, i32
  }
}

</mosaic_0001>

<llo_original>
// kernel: yolo_head_forward.5
$region0: #{yolo_head_forward.5}
  #allocation0 [shape = 'u32[]', space=smem, size = 0x4, offset = 0x4, fixed_abs, tag = 'smem constant byte address 0x4 - core index']
  #allocation1 [shape = 'u32[144,128]{1,0:T(1,128)}', space=vmem, size = 0x12000, scoped, tag = 'internal scratch']
  %s0 = inlined_call_operand.vmem [shape: f32[2,64,128], index: 0, kind: input, shape index: {}]
  %s1 = inlined_call_operand.vmem [shape: f32[24,64], index: 1, kind: input, shape index: {}]
  %s2 = inlined_call_operand.vmem [shape: f32[24,8], index: 2, kind: input, shape index: {}]
  %s3 = inlined_call_operand.vmem [shape: f32[2,128], index: 3, kind: input, shape index: {}]
  %s4 = inlined_call_operand.vmem [shape: f32[2,3,128,8], index: 4, kind: output, shape index: {0}]
  %s5 = inlined_call_operand.vmem [shape: f32[2,3,128,8], index: 5, kind: output, shape index: {1}]
  %6 = xla_tuple %s4, %s5
  %s7 = sld [smem:[#allocation0]]
  $region57: #{yolo_head_forward.5} parent=0
    _
  %s9 = ssub.s32 1, %s7
  %s10 = scalar_select 0, %s9, %s7
  loop: start=0, step=1, limit=4
  $region2: #{yolo_head_forward.5} parent=0 // loop_pre_header
    _
  $region3: #{yolo_head_forward.5} parent=0 // loop_header
    %s12 = sphi 0, %s16
    %p13 = scmp.ge.s32.totalorder %s12, 4
    %s19 = sphi 0, %s31
    %s20 = sphi 0, %s27
    %s21 = sphi 0, %s19
    %s22 = sphi 0, %s20
    %s23 = sphi 0, %s21
    %s24 = sphi 0, %s22
    %s36 = sphi 0, %s38
    %s39 = sphi 0, %s36
    %s40 = sphi 0, %s39
    %s56 = sphi 0, %s40
    %s60 = sphi 0, %s60
    %s62 = sphi 0, %s60
    %s63 = sphi 0, %s62
    %s77 = sphi 0, %s63
    %s81 = sphi 0, %s81
    %s83 = sphi 0, %s81
    %s84 = sphi 0, %s83
    %s98 = sphi 0, %s84
    %s104 = sphi 0, %s106
    %s107 = sphi 0, %s104
    %s108 = sphi 0, %s107
    %s124 = sphi 0, %s108
    %s132 = sphi 0, %s134
    %s135 = sphi 0, %s132
    %s136 = sphi 0, %s135
    %s152 = sphi 0, %s136
    %s160 = sphi 0, %s162
    %s163 = sphi 0, %s160
    %s164 = sphi 0, %s163
    %s180 = sphi 0, %s164
  $region4: #{yolo_head_forward.5} parent=0 // loop_header_branch
    %15 = sbr.rel (%p13) target = $region8
  $region5: #{yolo_head_forward.5} parent=0 // loop_body
    %s17 = ssub.s32 %s12, 1
    %s18 = ssub.s32 %s12, 2
    %s25 = sadd.s32 1, %s20
    %p26 = scmp.ge.s32.totalorder %s25, 1
    %s27 = scalar_select %p26, 0, %s25
    %s28 = sadd.s32 1, %s19
    %s29 = scalar_select %p26, %s28, %s19
    %p30 = scmp.ge.s32.totalorder %s29, 2
    %s31 = scalar_select %p30, 0, %s29
    %s32 = ssub.s32 %s19, %s31
    %s33 = ssub.s32 %s20, %s27
    %s34 = sor.u32 %s32, %s33
    %p35 = scmp.eq.s32.totalorder %s34, 0
    %s37 = sadd.s32 %s36, 1
    %s38 = scalar_select %p35, %s36, %s37
    %p41 = pneg %p35
    %p42 = scmp.eq.s32.totalorder %s12, 1
    %p43 = por %p41, %p42
    %p44 = scmp.ne.s32.totalorder %s36, %s39
    %p45 = scmp.eq.s32.totalorder %s12, 0
    %p46 = por %p44, %p45
    %p47 = scmp.ne.s32.totalorder %s36, %s39
    %p48 = scmp.eq.s32.totalorder %s17, 1
    %p49 = por %p47, %p48
    %p50 = scmp.ne.s32.totalorder %s39, %s40
    %p51 = scmp.eq.s32.totalorder %s17, 0
    %p52 = por %p50, %p51
    %p53 = scmp.ne.s32.totalorder %s39, %s40
    %p54 = scmp.eq.s32.totalorder %s18, 1
    %p55 = por %p53, %p54
    %p57 = scmp.ne.s32.totalorder %s40, %s56
    %p58 = scmp.eq.s32.totalorder %s18, 0
    %p59 = por %p57, %p58
    %s61 = sadd.s32 %s60, 1
    %p64 = scmp.eq.s32.totalorder %s12, 1
    %p65 = scmp.ne.s32.totalorder %s60, %s62
    %p66 = scmp.eq.s32.totalorder %s12, 0
    %p67 = por %p65, %p66
    %p68 = scmp.ne.s32.totalorder %s60, %s62
    %p69 = scmp.eq.s32.totalorder %s17, 1
    %p70 = por %p68, %p69
    %p71 = scmp.ne.s32.totalorder %s62, %s63
    %p72 = scmp.eq.s32.totalorder %s17, 0
    %p73 = por %p71, %p72
    %p74 = scmp.ne.s32.totalorder %s62, %s63
    %p75 = scmp.eq.s32.totalorder %s18, 1
    %p76 = por %p74, %p75
    %p78 = scmp.ne.s32.totalorder %s63, %s77
    %p79 = scmp.eq.s32.totalorder %s18, 0
    %p80 = por %p78, %p79
    %s82 = sadd.s32 %s81, 1
    %p85 = scmp.eq.s32.totalorder %s12, 1
    %p86 = scmp.ne.s32.totalorder %s81, %s83
    %p87 = scmp.eq.s32.totalorder %s12, 0
    %p88 = por %p86, %p87
    %p89 = scmp.ne.s32.totalorder %s81, %s83
    %p90 = scmp.eq.s32.totalorder %s17, 1
    %p91 = por %p89, %p90
    %p92 = scmp.ne.s32.totalorder %s83, %s84
    %p93 = scmp.eq.s32.totalorder %s17, 0
    %p94 = por %p92, %p93
    %p95 = scmp.ne.s32.totalorder %s83, %s84
    %p96 = scmp.eq.s32.totalorder %s18, 1
    %p97 = por %p95, %p96
    %p99 = scmp.ne.s32.totalorder %s84, %s98
    %p100 = scmp.eq.s32.totalorder %s18, 0
    %p101 = por %p99, %p100
    %s102 = ssub.s32 %s20, %s27
    %p103 = scmp.eq.s32.totalorder %s102, 0
    %s105 = sadd.s32 %s104, 1
    %s106 = scalar_select %p103, %s104, %s105
    %p109 = pneg %p103
    %p110 = scmp.eq.s32.totalorder %s12, 1
    %p111 = por %p109, %p110
    %p112 = scmp.ne.s32.totalorder %s104, %s107
    %p113 = scmp.eq.s32.totalorder %s12, 0
    %p114 = por %p112, %p113
    %p115 = scmp.ne.s32.totalorder %s104, %s107
    %p116 = scmp.eq.s32.totalorder %s17, 1
    %p117 = por %p115, %p116
    %p118 = scmp.ne.s32.totalorder %s107, %s108
    %p119 = scmp.eq.s32.totalorder %s17, 0
    %p120 = por %p118, %p119
    %p121 = scmp.ne.s32.totalorder %s107, %s108
    %p122 = scmp.eq.s32.totalorder %s18, 1
    %p123 = por %p121, %p122
    %p125 = scmp.ne.s32.totalorder %s108, %s124
    %p126 = scmp.eq.s32.totalorder %s18, 0
    %p127 = por %p125, %p126
    %s128 = ssub.s32 %s19, %s31
    %s129 = ssub.s32 %s20, %s27
    %s130 = sor.u32 %s128, %s129
    %p131 = scmp.eq.s32.totalorder %s130, 0
    %s133 = sadd.s32 %s132, 1
    %s134 = scalar_select %p131, %s132, %s133
    %p137 = pneg %p131
    %p138 = scmp.eq.s32.totalorder %s12, 1
    %p139 = por %p137, %p138
    %p140 = scmp.ne.s32.totalorder %s132, %s135
    %p141 = scmp.eq.s32.totalorder %s12, 0
    %p142 = por %p140, %p141
    %p143 = scmp.ne.s32.totalorder %s132, %s135
    %p144 = scmp.eq.s32.totalorder %s17, 1
    %p145 = por %p143, %p144
    %p146 = scmp.ne.s32.totalorder %s135, %s136
    %p147 = scmp.eq.s32.totalorder %s17, 0
    %p148 = por %p146, %p147
    %p149 = scmp.ne.s32.totalorder %s135, %s136
    %p150 = scmp.eq.s32.totalorder %s18, 1
    %p151 = por %p149, %p150
    %p153 = scmp.ne.s32.totalorder %s136, %s152
    %p154 = scmp.eq.s32.totalorder %s18, 0
    %p155 = por %p153, %p154
    %s156 = ssub.s32 %s19, %s31
    %s157 = ssub.s32 %s20, %s27
    %s158 = sor.u32 %s156, %s157
    %p159 = scmp.eq.s32.totalorder %s158, 0
    %s161 = sadd.s32 %s160, 1
    %s162 = scalar_select %p159, %s160, %s161
    %p165 = pneg %p159
    %p166 = scmp.eq.s32.totalorder %s12, 1
    %p167 = por %p165, %p166
    %p168 = scmp.ne.s32.totalorder %s160, %s163
    %p169 = scmp.eq.s32.totalorder %s12, 0
    %p170 = por %p168, %p169
    %p171 = scmp.ne.s32.totalorder %s160, %s163
    %p172 = scmp.eq.s32.totalorder %s17, 1
    %p173 = por %p171, %p172
    %p174 = scmp.ne.s32.totalorder %s163, %s164
    %p175 = scmp.eq.s32.totalorder %s17, 0
    %p176 = por %p174, %p175
    %p177 = scmp.ne.s32.totalorder %s163, %s164
    %p178 = scmp.eq.s32.totalorder %s18, 1
    %p179 = por %p177, %p178
    %p181 = scmp.ne.s32.totalorder %s164, %s180
    %p182 = scmp.eq.s32.totalorder %s18, 0
    %p183 = por %p181, %p182
    %p184 = scmp.le.s32.totalorder 1, %s12
    %p185 = scmp.lt.s32.totalorder %s12, 3
    %p186 = pnand %p184, %p185
    %p187 = pneg %p186
    // Predicated region
    $region9: #{yolo_head_forward.5} parent=5 // pred_check
      _
    $region10: #{yolo_head_forward.5} parent=5 // pred_check_branch
      %189 = sbr.rel (%p186) target = $region12
    $region11: #{yolo_head_forward.5} parent=5 // pred_region
      %s190 = ssub.s32 %s12, 1
      // Predicated region
      $region13: #{yolo_head_forward.5} parent=11 // pred_check
        %p191 = pneg %p73
      $region14: #{yolo_head_forward.5} parent=11 // pred_check_branch
        %193 = sbr.rel (%p191) target = $region16
      $region15: #{yolo_head_forward.5} parent=11 // pred_region
        _
      $region16: #{yolo_head_forward.5} parent=11 // pred_fallthru
        _
      // Predicated region
      $region17: #{yolo_head_forward.5} parent=11 // pred_check
        %p194 = pneg %p94
      $region18: #{yolo_head_forward.5} parent=11 // pred_check_branch
        %196 = sbr.rel (%p194) target = $region20
      $region19: #{yolo_head_forward.5} parent=11 // pred_region
        _
      $region20: #{yolo_head_forward.5} parent=11 // pred_fallthru
        _
      // Predicated region
      $region21: #{yolo_head_forward.5} parent=11 // pred_check
        %p197 = pneg %p120
      $region22: #{yolo_head_forward.5} parent=11 // pred_check_branch
        %199 = sbr.rel (%p197) target = $region24
      $region23: #{yolo_head_forward.5} parent=11 // pred_region
        %p200 = scmp.lt.s32.totalorder %s22, 0
        %s201 = scalar_select %p200, %s22, 0
        %s202 = smul.addr %s201, 2
        %s203 = scalar_lea.vmem %s3, %s202
      $region24: #{yolo_head_forward.5} parent=11 // pred_fallthru
        _
    $region12: #{yolo_head_forward.5} parent=5 // pred_fallthru
      _
    %p204 = scmp.lt.s32.totalorder %s12, 2
    // Predicated region
    $region25: #{yolo_head_forward.5} parent=5 // pred_check
      %p205 = pneg %p204
    $region26: #{yolo_head_forward.5} parent=5 // pred_check_branch
      %207 = sbr.rel (%p205) target = $region28
    $region27: #{yolo_head_forward.5} parent=5 // pred_region
      // Predicated region
      $region29: #{yolo_head_forward.5} parent=27 // pred_check
        %p208 = pneg %p46
      $region30: #{yolo_head_forward.5} parent=27 // pred_check_branch
        %210 = sbr.rel (%p208) target = $region32
      $region31: #{yolo_head_forward.5} parent=27 // pred_region
        %p211 = scmp.lt.s32.totalorder %s19, 1
        %s212 = scalar_select %p211, %s19, 1
        %p213 = scmp.lt.s32.totalorder %s20, 0
        %s214 = scalar_select %p213, %s20, 0
        %s215 = smul.addr %s212, 8
        %s216 = sadd.s32 %s214, %s215
        %s217 = smul.addr %s216, 8
        %s218 = scalar_lea.vmem %s0, %s217
      $region32: #{yolo_head_forward.5} parent=27 // pred_fallthru
        _
    $region28: #{yolo_head_forward.5} parent=5 // pred_fallthru
      _
    %p219 = scmp.le.s32.totalorder 1, %s12
    %p220 = scmp.lt.s32.totalorder %s12, 3
    %p221 = pnand %p219, %p220
    %p222 = pneg %p221
    // Predicated region
    $region33: #{yolo_head_forward.5} parent=5 // pred_check
      _
    $region34: #{yolo_head_forward.5} parent=5 // pred_check_branch
      %224 = sbr.rel (%p221) target = $region36
    $region35: #{yolo_head_forward.5} parent=5 // pred_region
      %s225 = ssub.s32 %s12, 1
      %p226 = scmp.lt.s32.totalorder %s21, 1
      %s227 = scalar_select %p226, %s21, 1
      %p228 = scmp.lt.s32.totalorder %s22, 0
      %s229 = scalar_select %p228, %s22, 0
      %s230 = smul.addr %s227, 8
      %s231 = sadd.s32 %s229, %s230
      %s232 = smul.addr %s231, 8
      %s233 = scalar_lea.vmem %s0, %s232
      %p234 = pneg %p52
      %p235 = pneg %p49
      %p236 = pneg %p73
      %p237 = pneg %p70
      %p238 = pneg %p94
      %p239 = pneg %p91
      %p240 = scmp.lt.s32.totalorder %s22, 0
      %s241 = scalar_select %p240, %s22, 0
      %s242 = smul.addr %s241, 2
      %s243 = scalar_lea.vmem %s3, %s242
      %p244 = pneg %p120
      %p245 = pneg %p117
      %p246 = pneg %p148
      %p247 = pneg %p145
      %s248 = smul.u32 16, %s22
      %p249 = scmp.lt.s32.totalorder %s21, 1
      %s250 = scalar_select %p249, %s21, 1
      %p251 = scmp.lt.s32.totalorder %s248, 15
      %s252 = scalar_select %p251, %s248, 15
      %s253 = smul.addr %s250, 48
      %s254 = sadd.s32 %s252, %s253
      %s255 = smul.addr %s254, 8
      %s256 = scalar_lea.vmem %s4, %s255
      %p257 = pneg %p176
      %p258 = pneg %p173
      %s259 = smul.u32 16, %s22
      %p260 = scmp.lt.s32.totalorder %s21, 1
      %s261 = scalar_select %p260, %s21, 1
      %p262 = scmp.lt.s32.totalorder %s259, 15
      %s263 = scalar_select %p262, %s259, 15
      %s264 = smul.addr %s261, 48
      %s265 = sadd.s32 %s263, %s264
      %s266 = smul.addr %s265, 8
      %s267 = scalar_lea.vmem %s5, %s266
      %p268 = scmp.lt.s32.totalorder %s21, 1
      %s269 = scalar_select %p268, %s21, 1
      %p270 = scmp.lt.s32.totalorder %s22, 0
      %s271 = scalar_select %p270, %s22, 0
      %s272 = smul.addr %s269, 8
      %s273 = sadd.s32 %s271, %s272
      %s274 = smul.addr %s273, 8
      %s275 = scalar_lea.vmem %s0, %s274
      %p276 = scmp.lt.s32.totalorder %s22, 0
      %s277 = scalar_select %p276, %s22, 0
      %s278 = smul.addr %s277, 2
      %s279 = scalar_lea.vmem %s3, %s278
      %s280 = smul.u32 16, %s22
      %p281 = scmp.lt.s32.totalorder %s21, 1
      %s282 = scalar_select %p281, %s21, 1
      %p283 = scmp.lt.s32.totalorder %s280, 15
      %s284 = scalar_select %p283, %s280, 15
      %s285 = smul.addr %s282, 48
      %s286 = sadd.s32 %s284, %s285
      %s287 = smul.addr %s286, 8
      %s288 = scalar_lea.vmem %s4, %s287
      %s289 = smul.u32 16, %s22
      %s290 = smul.u32 16, %s22
      %p291 = scmp.lt.s32.totalorder %s21, 1
      %s292 = scalar_select %p291, %s21, 1
      %p293 = scmp.lt.s32.totalorder %s290, 15
      %s294 = scalar_select %p293, %s290, 15
      %s295 = smul.addr %s292, 48
      %s296 = sadd.s32 %s294, %s295
      %s297 = smul.addr %s296, 8
      %s298 = scalar_lea.vmem %s5, %s297
      %s299 = smul.u32 16, %s22
      %v300 = vld [vmem:[%s275] sm:$0xff]
      %v301 = vld [vmem:[%s275 + $0x8] sm:$0xff]
      %v302 = vld [vmem:[%s275 + $0x10] sm:$0xff]
      %v303 = vld [vmem:[%s275 + $0x18] sm:$0xff]
      %v304 = vld [vmem:[%s275 + $0x20] sm:$0xff]
      %v305 = vld [vmem:[%s275 + $0x28] sm:$0xff]
      %v306 = vld [vmem:[%s275 + $0x30] sm:$0xff]
      %v307 = vld [vmem:[%s275 + $0x38] sm:$0xff]
      %v308 = vld [vmem:[%s1] sm:$0xff]
      %v309 = vld [vmem:[%s1 + $0x8] sm:$0xff]
      %v310 = vld [vmem:[%s1 + $0x10] sm:$0xff]
      %v311 = vld [vmem:[%s2] sm:$0xff]
      %v312 = vld [vmem:[%s2 + $0x8] sm:$0xff]
      %v313 = vld [vmem:[%s2 + $0x10] sm:$0xff]
      %v314 = vld [vmem:[%s279] sm:$0x3]
      %316 = vset.pattern.permute.xlu0 0
      %317 = vperm.xlu0 %316, %v311
      %v318 = vpop.permute.xlu0 %317
      %321 = vset.pattern.permute.xlu0 0
      %322 = vperm.xlu0 %321, %v312
      %v323 = vpop.permute.xlu0 %322
      %326 = vset.pattern.permute.xlu0 0
      %327 = vperm.xlu0 %326, %v313
      %v328 = vpop.permute.xlu0 %327
      %vm330 = vcmask 523264
      %v332 = vsel %vm330, %v308, 0
      %v335 = vsel %vm330, %v309, 0
      %v338 = vsel %vm330, %v310, 0
      %340 = vmatprep.subr.mxu0 0.0
      %341 = vmatpush1.msra.mxu0 0.0
      %342 = vmatprep.subr.mxu0 0.0
      %343 = vmatpush1.msra.mxu0 0.0
      %344 = vmatprep.subr.mxu0 0.0
      %345 = vmatpush1.msra.mxu0 0.0
      %346 = vmatprep.subr.mxu0 0.0
      %347 = vmatpush1.msra.mxu0 0.0
      %348 = vmatprep.subr.mxu0 0.0
      %349 = vmatpush1.msra.mxu0 0.0
      %350 = vmatprep.subr.mxu0 0.0
      %351 = vmatpush1.msra.mxu0 0.0
      %352 = vmatprep.subr.mxu0 0.0
      %353 = vmatpush1.msra.mxu0 0.0
      %354 = vmatprep.subr.mxu0 0.0
      %355 = vmatpush1.msra.mxu0 0.0
      %356 = vmatprep.subr.mxu0 0.0
      %357 = vmatpush1.msra.mxu0 %v307
      %358 = vmatprep.subr.mxu0 0.0
      %359 = vmatpush1.msra.mxu0 %v306
      %360 = vmatprep.subr.mxu0 0.0
      %361 = vmatpush1.msra.mxu0 %v305
      %362 = vmatprep.subr.mxu0 0.0
      %363 = vmatpush1.msra.mxu0 %v304
      %364 = vmatprep.subr.mxu0 0.0
      %365 = vmatpush1.msra.mxu0 %v303
      %366 = vmatprep.subr.mxu0 0.0
      %367 = vmatpush1.msra.mxu0 %v302
      %368 = vmatprep.subr.mxu0 0.0
      %369 = vmatpush1.msra.mxu0 %v301
      %370 = vmatprep.subr.mxu0 0.0
      %371 = vmatpush1.msra.mxu0 %v300
      %372 = vmatprep.subr.mxu0 0.0
      %373 = vmatpush2.msra.mxu0 0.0
      %374 = vmatprep.subr.mxu0 0.0
      %375 = vmatpush2.msra.mxu0 0.0
      %376 = vmatprep.subr.mxu0 0.0
      %377 = vmatpush2.msra.mxu0 0.0
      %378 = vmatprep.subr.mxu0 0.0
      %379 = vmatpush2.msra.mxu0 0.0
      %380 = vmatprep.subr.mxu0 0.0
      %381 = vmatpush2.msra.mxu0 0.0
      %382 = vmatprep.subr.mxu0 0.0
      %383 = vmatpush2.msra.mxu0 0.0
      %384 = vmatprep.subr.mxu0 0.0
      %385 = vmatpush2.msra.mxu0 0.0
      %386 = vmatprep.subr.mxu0 0.0
      %387 = vmatpush2.msra.mxu0 0.0
      %388 = vmatprep.subr.mxu0 0.0
      %389 = vmatpush2.msra.mxu0 0.0
      %390 = vmatprep.subr.mxu0 0.0
      %391 = vmatpush2.msra.mxu0 0.0
      %392 = vmatprep.subr.mxu0 0.0
      %393 = vmatpush2.msra.mxu0 0.0
      %394 = vmatprep.subr.mxu0 0.0
      %395 = vmatpush2.msra.mxu0 0.0
      %396 = vmatprep.subr.mxu0 0.0
      %397 = vmatpush2.msra.mxu0 0.0
      %398 = vmatprep.subr.mxu0 0.0
      %399 = vmatpush2.msra.mxu0 0.0
      %400 = vmatprep.subr.mxu0 0.0
      %401 = vmatpush2.msra.mxu0 0.0
      %402 = vmatprep.subr.mxu0 0.0
      %403 = vmatpush2.msra.mxu0 0.0
      %404 = vmatprep.mubr.f32.mxu0 0.0
      %405 = vmatmul.mubr.f32.gmra.mxu0 %v332
      %v406 = vpop.f32.mrf.mxu0
      %v407 = vadd.f32 %v318, %v406
      %v408 = vpop.f32.mrf.mxu0
      %409 = vmatprep.mubr.f32.mxu0 0.0
      %410 = vmatmul.mubr.f32.gmra.mxu0 %v335
      %v411 = vpop.f32.mrf.mxu0
      %v412 = vadd.f32 %v323, %v411
      %v413 = vpop.f32.mrf.mxu0
      %414 = vmatprep.mubr.f32.mxu0 0.0
      %415 = vmatmul.mubr.f32.gmra.mxu0 %v338
      %v416 = vpop.f32.mrf.mxu0
      %v417 = vadd.f32 %v328, %v416
      %v418 = vpop.f32.mrf.mxu0
      %419 = vdwg.mxu0
      %v420 = vxor.u32 %v407, 2147483648
      %v421 = vxor.u32 %v412, 2147483648
      %v422 = vxor.u32 %v417, 2147483648
      %v423 = vmul.f32 %v420, 1.442695
      %v424 = vpow.pop %v423
      %v425 = vmul.f32 %v421, 1.442695
      %v426 = vpow.pop %v425
      %v427 = vmul.f32 %v422, 1.442695
      %v428 = vpow.pop %v427
      %v429 = vadd.f32 %v424, 1.0
      %v430 = vadd.f32 %v426, 1.0
      %v431 = vadd.f32 %v428, 1.0
      %v432 = vrcp.pop %v429
      %v433 = vmul.f32 1.0, %v432
      %v434 = vrcp.pop %v430
      %v435 = vmul.f32 1.0, %v434
      %v436 = vrcp.pop %v431
      %v437 = vmul.f32 1.0, %v436
      %v438 = vadd.f32 %v433, %v433
      %v439 = vadd.f32 %v435, %v435
      %v440 = vadd.f32 %v437, %v437
      %441 = vset.pattern.permute.xlu0 1
      %442 = vperm.xlu0 %441, %v311
      %v443 = vpop.permute.xlu0 %442
      %445 = vset.pattern.permute.xlu0 1
      %446 = vperm.xlu0 %445, %v312
      %v447 = vpop.permute.xlu0 %446
      %449 = vset.pattern.permute.xlu0 1
      %450 = vperm.xlu0 %449, %v313
      %v451 = vpop.permute.xlu0 %450
      %v453 = vmul.f32 %v438, %v443
      %v454 = vmul.f32 %v439, %v447
      %v455 = vmul.f32 %v440, %v451
      %v456 = vlaneseq
      %v457 = vshrl.u32 %v456, 7
      %v458 = vsub.s32 0, %v457
      %v459 = vrot.slane %v314, %v458
      %460 = vset.pattern.permute.xlu0 3
      %461 = vperm.xlu0 %460, %v311
      %v462 = vpop.permute.xlu0 %461
      %464 = vset.pattern.permute.xlu0 3
      %465 = vperm.xlu0 %464, %v312
      %v466 = vpop.permute.xlu0 %465
      %468 = vset.pattern.permute.xlu0 3
      %469 = vperm.xlu0 %468, %v313
      %v470 = vpop.permute.xlu0 %469
      %v472 = vmul.f32 %v459, %v462
      %v473 = vmul.f32 %v459, %v466
      %v474 = vmul.f32 %v459, %v470
      %v475 = vlaneseq
      %v476 = vshrl.u32 %v475, 7
      %v477 = vsub.s32 1, %v476
      %v478 = vrot.slane %v314, %v477
      %479 = vset.pattern.permute.xlu0 4
      %480 = vperm.xlu0 %479, %v311
      %v481 = vpop.permute.xlu0 %480
      %483 = vset.pattern.permute.xlu0 4
      %484 = vperm.xlu0 %483, %v312
      %v485 = vpop.permute.xlu0 %484
      %487 = vset.pattern.permute.xlu0 4
      %488 = vperm.xlu0 %487, %v313
      %v489 = vpop.permute.xlu0 %488
      %v491 = vmul.f32 %v478, %v481
      %v492 = vmul.f32 %v478, %v485
      %v493 = vmul.f32 %v478, %v489
      %v494 = vadd.f32 %v472, %v491
      %v495 = vadd.f32 %v473, %v492
      %v496 = vadd.f32 %v474, %v493
      %497 = vset.pattern.permute.xlu0 2
      %498 = vperm.xlu0 %497, %v311
      %v499 = vpop.permute.xlu0 %498
      %501 = vset.pattern.permute.xlu0 2
      %502 = vperm.xlu0 %501, %v312
      %v503 = vpop.permute.xlu0 %502
      %505 = vset.pattern.permute.xlu0 2
      %506 = vperm.xlu0 %505, %v313
      %v507 = vpop.permute.xlu0 %506
      %v509 = vadd.f32 %v494, %v499
      %v510 = vadd.f32 %v495, %v503
      %v511 = vadd.f32 %v496, %v507
      %v512 = vadd.f32 %v453, %v509
      %v513 = vadd.f32 %v454, %v510
      %v514 = vadd.f32 %v455, %v511
      %v515 = vmul.f32 %v438, %v438
      %v516 = vmul.f32 %v439, %v439
      %v517 = vmul.f32 %v440, %v440
      %518 = vset.pattern.permute.xlu0 5
      %519 = vperm.xlu0 %518, %v311
      %v520 = vpop.permute.xlu0 %519
      %522 = vset.pattern.permute.xlu0 5
      %523 = vperm.xlu0 %522, %v312
      %v524 = vpop.permute.xlu0 %523
      %526 = vset.pattern.permute.xlu0 5
      %527 = vperm.xlu0 %526, %v313
      %v528 = vpop.permute.xlu0 %527
      %v530 = vmul.f32 %v515, %v520
      %v531 = vmul.f32 %v516, %v524
      %v532 = vmul.f32 %v517, %v528
      %vm533 = vcmp.gt.f32.partialorder %v311, 0.0
      %vm534 = vcmp.gt.f32.partialorder %v312, 0.0
      %vm535 = vcmp.gt.f32.partialorder %v313, 0.0
      %v536 = vsel %vm533, 1, 0
      %v537 = vsel %vm534, 1, 0
      %v538 = vsel %vm535, 1, 0
      %539 = vset.pattern.permute.xlu0 6
      %540 = vperm.xlu0 %539, %v536
      %v541 = vpop.permute.xlu0 %540
      %542 = vset.pattern.permute.xlu0 6
      %543 = vperm.xlu0 %542, %v537
      %v544 = vpop.permute.xlu0 %543
      %545 = vset.pattern.permute.xlu0 6
      %546 = vperm.xlu0 %545, %v538
      %v547 = vpop.permute.xlu0 %546
      %vm548 = vcmp.eq.s32.totalorder %v541, 1
      %vm549 = vcmp.eq.s32.totalorder %v544, 1
      %vm550 = vcmp.eq.s32.totalorder %v547, 1
      %v551 = vsel %vm548, %v530, %v512
      %v552 = vsel %vm549, %v531, %v513
      %v553 = vsel %vm550, %v532, %v514
      %554 = vxpose.xlu0.b32.start [1/16] %v551, 128
      %555 = vxpose.xlu0.b32.cont [2/16] %v552, 128
      %556 = vxpose.xlu0.b32.cont [3/16] %v553, 128
      %557 = vxpose.xlu0.b32.cont [4/16] %v407, 128
      %558 = vxpose.xlu0.b32.cont [5/16] %v412, 128
      %559 = vxpose.xlu0.b32.cont [6/16] %v417, 128
      %560 = vxpose.xlu0.b32.cont [7/16] 0.0, 128
      %561 = vxpose.xlu0.b32.cont [8/16] 0.0, 128
      %562 = vxpose.xlu0.b32.cont [9/16] 0.0, 128
      %563 = vxpose.xlu0.b32.cont [10/16] 0.0, 128
      %564 = vxpose.xlu0.b32.cont [11/16] 0.0, 128
      %565 = vxpose.xlu0.b32.cont [12/16] 0.0, 128
      %566 = vxpose.xlu0.b32.cont [13/16] 0.0, 128
      %567 = vxpose.xlu0.b32.cont [14/16] 0.0, 128
      %568 = vxpose.xlu0.b32.cont [15/16] 0.0, 128
      %569 = vxpose.xlu0.b32.end [16/16] 0.0, 128
      %v570 = vpop.trf.xlu0
      %v571 = vpop.trf.xlu0
      %v572 = vpop.trf.xlu0
      %v573 = vpop.trf.xlu0
      %v574 = vpop.trf.xlu0
      %v575 = vpop.trf.xlu0
      %v576 = vpop.trf.xlu0
      %v577 = vpop.trf.xlu0
      %v578 = vpop.trf.xlu0
      %v579 = vpop.trf.xlu0
      %v580 = vpop.trf.xlu0
      %v581 = vpop.trf.xlu0
      %v582 = vpop.trf.xlu0
      %v583 = vpop.trf.xlu0
      %v584 = vpop.trf.xlu0
      %v585 = vpop.trf.xlu0
      %vm586 = vcmask 64512
      %587 = vst.msk [vmem:[%s288] sm:$0xff] %vm586, %v570
      %588 = vst.msk [vmem:[%s288 + $0x8] sm:$0xff] %vm586, %v571
      %589 = vst.msk [vmem:[%s288 + $0x10] sm:$0xff] %vm586, %v572
      %590 = vst.msk [vmem:[%s288 + $0x18] sm:$0xff] %vm586, %v573
      %591 = vst.msk [vmem:[%s288 + $0x20] sm:$0xff] %vm586, %v574
      %592 = vst.msk [vmem:[%s288 + $0x28] sm:$0xff] %vm586, %v575
      %593 = vst.msk [vmem:[%s288 + $0x30] sm:$0xff] %vm586, %v576
      %594 = vst.msk [vmem:[%s288 + $0x38] sm:$0xff] %vm586, %v577
      %595 = vst.msk [vmem:[%s288 + $0x40] sm:$0xff] %vm586, %v578
      %596 = vst.msk [vmem:[%s288 + $0x48] sm:$0xff] %vm586, %v579
      %597 = vst.msk [vmem:[%s288 + $0x50] sm:$0xff] %vm586, %v580
      %598 = vst.msk [vmem:[%s288 + $0x58] sm:$0xff] %vm586, %v581
      %599 = vst.msk [vmem:[%s288 + $0x60] sm:$0xff] %vm586, %v582
      %600 = vst.msk [vmem:[%s288 + $0x68] sm:$0xff] %vm586, %v583
      %601 = vst.msk [vmem:[%s288 + $0x70] sm:$0xff] %vm586, %v584
      %602 = vst.msk [vmem:[%s288 + $0x78] sm:$0xff] %vm586, %v585
      %619 = vrot.lane.b32.xlu0 %v570, 104
      %v620 = vpop.permute.xlu0 %619
      %621 = vrot.lane.b32.xlu0 %v571, 104
      %v622 = vpop.permute.xlu0 %621
      %623 = vrot.lane.b32.xlu0 %v572, 104
      %v624 = vpop.permute.xlu0 %623
      %625 = vrot.lane.b32.xlu0 %v573, 104
      %v626 = vpop.permute.xlu0 %625
      %627 = vrot.lane.b32.xlu0 %v574, 104
      %v628 = vpop.permute.xlu0 %627
      %629 = vrot.lane.b32.xlu0 %v575, 104
      %v630 = vpop.permute.xlu0 %629
      %631 = vrot.lane.b32.xlu0 %v576, 104
      %v632 = vpop.permute.xlu0 %631
      %633 = vrot.lane.b32.xlu0 %v577, 104
      %v634 = vpop.permute.xlu0 %633
      %635 = vrot.lane.b32.xlu0 %v578, 104
      %v636 = vpop.permute.xlu0 %635
      %637 = vrot.lane.b32.xlu0 %v579, 104
      %v638 = vpop.permute.xlu0 %637
      %639 = vrot.lane.b32.xlu0 %v580, 104
      %v640 = vpop.permute.xlu0 %639
      %641 = vrot.lane.b32.xlu0 %v581, 104
      %v642 = vpop.permute.xlu0 %641
      %643 = vrot.lane.b32.xlu0 %v582, 104
      %v644 = vpop.permute.xlu0 %643
      %645 = vrot.lane.b32.xlu0 %v583, 104
      %v646 = vpop.permute.xlu0 %645
      %647 = vrot.lane.b32.xlu0 %v584, 104
      %v648 = vpop.permute.xlu0 %647
      %649 = vrot.lane.b32.xlu0 %v585, 104
      %v650 = vpop.permute.xlu0 %649
      %667 = vst.msk [vmem:[%s298] sm:$0xff] %vm586, %v620
      %668 = vst.msk [vmem:[%s298 + $0x8] sm:$0xff] %vm586, %v622
      %669 = vst.msk [vmem:[%s298 + $0x10] sm:$0xff] %vm586, %v624
      %670 = vst.msk [vmem:[%s298 + $0x18] sm:$0xff] %vm586, %v626
      %671 = vst.msk [vmem:[%s298 + $0x20] sm:$0xff] %vm586, %v628
      %672 = vst.msk [vmem:[%s298 + $0x28] sm:$0xff] %vm586, %v630
      %673 = vst.msk [vmem:[%s298 + $0x30] sm:$0xff] %vm586, %v632
      %674 = vst.msk [vmem:[%s298 + $0x38] sm:$0xff] %vm586, %v634
      %675 = vst.msk [vmem:[%s298 + $0x40] sm:$0xff] %vm586, %v636
      %676 = vst.msk [vmem:[%s298 + $0x48] sm:$0xff] %vm586, %v638
      %677 = vst.msk [vmem:[%s298 + $0x50] sm:$0xff] %vm586, %v640
      %678 = vst.msk [vmem:[%s298 + $0x58] sm:$0xff] %vm586, %v642
      %679 = vst.msk [vmem:[%s298 + $0x60] sm:$0xff] %vm586, %v644
      %680 = vst.msk [vmem:[%s298 + $0x68] sm:$0xff] %vm586, %v646
      %681 = vst.msk [vmem:[%s298 + $0x70] sm:$0xff] %vm586, %v648
      %682 = vst.msk [vmem:[%s298 + $0x78] sm:$0xff] %vm586, %v650
      %683 = vrot.lane.b32.xlu0 %v570, 120
      %v684 = vpop.permute.xlu0 %683
      %685 = vrot.lane.b32.xlu0 %v571, 120
      %v686 = vpop.permute.xlu0 %685
      %687 = vrot.lane.b32.xlu0 %v572, 120
      %v688 = vpop.permute.xlu0 %687
      %689 = vrot.lane.b32.xlu0 %v573, 120
      %v690 = vpop.permute.xlu0 %689
      %691 = vrot.lane.b32.xlu0 %v574, 120
      %v692 = vpop.permute.xlu0 %691
      %693 = vrot.lane.b32.xlu0 %v575, 120
      %v694 = vpop.permute.xlu0 %693
      %695 = vrot.lane.b32.xlu0 %v576, 120
      %v696 = vpop.permute.xlu0 %695
      %697 = vrot.lane.b32.xlu0 %v577, 120
      %v698 = vpop.permute.xlu0 %697
      %699 = vrot.lane.b32.xlu0 %v578, 120
      %v700 = vpop.permute.xlu0 %699
      %701 = vrot.lane.b32.xlu0 %v579, 120
      %v702 = vpop.permute.xlu0 %701
      %703 = vrot.lane.b32.xlu0 %v580, 120
      %v704 = vpop.permute.xlu0 %703
      %705 = vrot.lane.b32.xlu0 %v581, 120
      %v706 = vpop.permute.xlu0 %705
      %707 = vrot.lane.b32.xlu0 %v582, 120
      %v708 = vpop.permute.xlu0 %707
      %709 = vrot.lane.b32.xlu0 %v583, 120
      %v710 = vpop.permute.xlu0 %709
      %711 = vrot.lane.b32.xlu0 %v584, 120
      %v712 = vpop.permute.xlu0 %711
      %713 = vrot.lane.b32.xlu0 %v585, 120
      %v714 = vpop.permute.xlu0 %713
      %s731 = scalar_lea.vmem %s288, 128
      %732 = vst.msk [vmem:[%s731] sm:$0xff] %vm586, %v684
      %733 = vst.msk [vmem:[%s731 + $0x8] sm:$0xff] %vm586, %v686
      %734 = vst.msk [vmem:[%s731 + $0x10] sm:$0xff] %vm586, %v688
      %735 = vst.msk [vmem:[%s731 + $0x18] sm:$0xff] %vm586, %v690
      %736 = vst.msk [vmem:[%s731 + $0x20] sm:$0xff] %vm586, %v692
      %737 = vst.msk [vmem:[%s731 + $0x28] sm:$0xff] %vm586, %v694
      %738 = vst.msk [vmem:[%s731 + $0x30] sm:$0xff] %vm586, %v696
      %739 = vst.msk [vmem:[%s731 + $0x38] sm:$0xff] %vm586, %v698
      %740 = vst.msk [vmem:[%s731 + $0x40] sm:$0xff] %vm586, %v700
      %741 = vst.msk [vmem:[%s731 + $0x48] sm:$0xff] %vm586, %v702
      %742 = vst.msk [vmem:[%s731 + $0x50] sm:$0xff] %vm586, %v704
      %743 = vst.msk [vmem:[%s731 + $0x58] sm:$0xff] %vm586, %v706
      %744 = vst.msk [vmem:[%s731 + $0x60] sm:$0xff] %vm586, %v708
      %745 = vst.msk [vmem:[%s731 + $0x68] sm:$0xff] %vm586, %v710
      %746 = vst.msk [vmem:[%s731 + $0x70] sm:$0xff] %vm586, %v712
      %747 = vst.msk [vmem:[%s731 + $0x78] sm:$0xff] %vm586, %v714
      %748 = vrot.lane.b32.xlu0 %v570, 96
      %v749 = vpop.permute.xlu0 %748
      %750 = vrot.lane.b32.xlu0 %v571, 96
      %v751 = vpop.permute.xlu0 %750
      %752 = vrot.lane.b32.xlu0 %v572, 96
      %v753 = vpop.permute.xlu0 %752
      %754 = vrot.lane.b32.xlu0 %v573, 96
      %v755 = vpop.permute.xlu0 %754
      %756 = vrot.lane.b32.xlu0 %v574, 96
      %v757 = vpop.permute.xlu0 %756
      %758 = vrot.lane.b32.xlu0 %v575, 96
      %v759 = vpop.permute.xlu0 %758
      %760 = vrot.lane.b32.xlu0 %v576, 96
      %v761 = vpop.permute.xlu0 %760
      %762 = vrot.lane.b32.xlu0 %v577, 96
      %v763 = vpop.permute.xlu0 %762
      %764 = vrot.lane.b32.xlu0 %v578, 96
      %v765 = vpop.permute.xlu0 %764
      %766 = vrot.lane.b32.xlu0 %v579, 96
      %v767 = vpop.permute.xlu0 %766
      %768 = vrot.lane.b32.xlu0 %v580, 96
      %v769 = vpop.permute.xlu0 %768
      %770 = vrot.lane.b32.xlu0 %v581, 96
      %v771 = vpop.permute.xlu0 %770
      %772 = vrot.lane.b32.xlu0 %v582, 96
      %v773 = vpop.permute.xlu0 %772
      %774 = vrot.lane.b32.xlu0 %v583, 96
      %v775 = vpop.permute.xlu0 %774
      %776 = vrot.lane.b32.xlu0 %v584, 96
      %v777 = vpop.permute.xlu0 %776
      %778 = vrot.lane.b32.xlu0 %v585, 96
      %v779 = vpop.permute.xlu0 %778
      %s796 = scalar_lea.vmem %s298, 128
      %797 = vst.msk [vmem:[%s796] sm:$0xff] %vm586, %v749
      %798 = vst.msk [vmem:[%s796 + $0x8] sm:$0xff] %vm586, %v751
      %799 = vst.msk [vmem:[%s796 + $0x10] sm:$0xff] %vm586, %v753
      %800 = vst.msk [vmem:[%s796 + $0x18] sm:$0xff] %vm586, %v755
      %801 = vst.msk [vmem:[%s796 + $0x20] sm:$0xff] %vm586, %v757
      %802 = vst.msk [vmem:[%s796 + $0x28] sm:$0xff] %vm586, %v759
      %803 = vst.msk [vmem:[%s796 + $0x30] sm:$0xff] %vm586, %v761
      %804 = vst.msk [vmem:[%s796 + $0x38] sm:$0xff] %vm586, %v763
      %805 = vst.msk [vmem:[%s796 + $0x40] sm:$0xff] %vm586, %v765
      %806 = vst.msk [vmem:[%s796 + $0x48] sm:$0xff] %vm586, %v767
      %807 = vst.msk [vmem:[%s796 + $0x50] sm:$0xff] %vm586, %v769
      %808 = vst.msk [vmem:[%s796 + $0x58] sm:$0xff] %vm586, %v771
      %809 = vst.msk [vmem:[%s796 + $0x60] sm:$0xff] %vm586, %v773
      %810 = vst.msk [vmem:[%s796 + $0x68] sm:$0xff] %vm586, %v775
      %811 = vst.msk [vmem:[%s796 + $0x70] sm:$0xff] %vm586, %v777
      %812 = vst.msk [vmem:[%s796 + $0x78] sm:$0xff] %vm586, %v779
      %813 = vrot.lane.b32.xlu0 %v570, 112
      %v814 = vpop.permute.xlu0 %813
      %815 = vrot.lane.b32.xlu0 %v571, 112
      %v816 = vpop.permute.xlu0 %815
      %817 = vrot.lane.b32.xlu0 %v572, 112
      %v818 = vpop.permute.xlu0 %817
      %819 = vrot.lane.b32.xlu0 %v573, 112
      %v820 = vpop.permute.xlu0 %819
      %821 = vrot.lane.b32.xlu0 %v574, 112
      %v822 = vpop.permute.xlu0 %821
      %823 = vrot.lane.b32.xlu0 %v575, 112
      %v824 = vpop.permute.xlu0 %823
      %825 = vrot.lane.b32.xlu0 %v576, 112
      %v826 = vpop.permute.xlu0 %825
      %827 = vrot.lane.b32.xlu0 %v577, 112
      %v828 = vpop.permute.xlu0 %827
      %829 = vrot.lane.b32.xlu0 %v578, 112
      %v830 = vpop.permute.xlu0 %829
      %831 = vrot.lane.b32.xlu0 %v579, 112
      %v832 = vpop.permute.xlu0 %831
      %833 = vrot.lane.b32.xlu0 %v580, 112
      %v834 = vpop.permute.xlu0 %833
      %835 = vrot.lane.b32.xlu0 %v581, 112
      %v836 = vpop.permute.xlu0 %835
      %837 = vrot.lane.b32.xlu0 %v582, 112
      %v838 = vpop.permute.xlu0 %837
      %839 = vrot.lane.b32.xlu0 %v583, 112
      %v840 = vpop.permute.xlu0 %839
      %841 = vrot.lane.b32.xlu0 %v584, 112
      %v842 = vpop.permute.xlu0 %841
      %843 = vrot.lane.b32.xlu0 %v585, 112
      %v844 = vpop.permute.xlu0 %843
      %s861 = scalar_lea.vmem %s288, 256
      %862 = vst.msk [vmem:[%s861] sm:$0xff] %vm586, %v814
      %863 = vst.msk [vmem:[%s861 + $0x8] sm:$0xff] %vm586, %v816
      %864 = vst.msk [vmem:[%s861 + $0x10] sm:$0xff] %vm586, %v818
      %865 = vst.msk [vmem:[%s861 + $0x18] sm:$0xff] %vm586, %v820
      %866 = vst.msk [vmem:[%s861 + $0x20] sm:$0xff] %vm586, %v822
      %867 = vst.msk [vmem:[%s861 + $0x28] sm:$0xff] %vm586, %v824
      %868 = vst.msk [vmem:[%s861 + $0x30] sm:$0xff] %vm586, %v826
      %869 = vst.msk [vmem:[%s861 + $0x38] sm:$0xff] %vm586, %v828
      %870 = vst.msk [vmem:[%s861 + $0x40] sm:$0xff] %vm586, %v830
      %871 = vst.msk [vmem:[%s861 + $0x48] sm:$0xff] %vm586, %v832
      %872 = vst.msk [vmem:[%s861 + $0x50] sm:$0xff] %vm586, %v834
      %873 = vst.msk [vmem:[%s861 + $0x58] sm:$0xff] %vm586, %v836
      %874 = vst.msk [vmem:[%s861 + $0x60] sm:$0xff] %vm586, %v838
      %875 = vst.msk [vmem:[%s861 + $0x68] sm:$0xff] %vm586, %v840
      %876 = vst.msk [vmem:[%s861 + $0x70] sm:$0xff] %vm586, %v842
      %877 = vst.msk [vmem:[%s861 + $0x78] sm:$0xff] %vm586, %v844
      %878 = vrot.lane.b32.xlu0 %v570, 88
      %v879 = vpop.permute.xlu0 %878
      %880 = vrot.lane.b32.xlu0 %v571, 88
      %v881 = vpop.permute.xlu0 %880
      %882 = vrot.lane.b32.xlu0 %v572, 88
      %v883 = vpop.permute.xlu0 %882
      %884 = vrot.lane.b32.xlu0 %v573, 88
      %v885 = vpop.permute.xlu0 %884
      %886 = vrot.lane.b32.xlu0 %v574, 88
      %v887 = vpop.permute.xlu0 %886
      %888 = vrot.lane.b32.xlu0 %v575, 88
      %v889 = vpop.permute.xlu0 %888
      %890 = vrot.lane.b32.xlu0 %v576, 88
      %v891 = vpop.permute.xlu0 %890
      %892 = vrot.lane.b32.xlu0 %v577, 88
      %v893 = vpop.permute.xlu0 %892
      %894 = vrot.lane.b32.xlu0 %v578, 88
      %v895 = vpop.permute.xlu0 %894
      %896 = vrot.lane.b32.xlu0 %v579, 88
      %v897 = vpop.permute.xlu0 %896
      %898 = vrot.lane.b32.xlu0 %v580, 88
      %v899 = vpop.permute.xlu0 %898
      %900 = vrot.lane.b32.xlu0 %v581, 88
      %v901 = vpop.permute.xlu0 %900
      %902 = vrot.lane.b32.xlu0 %v582, 88
      %v903 = vpop.permute.xlu0 %902
      %904 = vrot.lane.b32.xlu0 %v583, 88
      %v905 = vpop.permute.xlu0 %904
      %906 = vrot.lane.b32.xlu0 %v584, 88
      %v907 = vpop.permute.xlu0 %906
      %908 = vrot.lane.b32.xlu0 %v585, 88
      %v909 = vpop.permute.xlu0 %908
      %s926 = scalar_lea.vmem %s298, 256
      %927 = vst.msk [vmem:[%s926] sm:$0xff] %vm586, %v879
      %928 = vst.msk [vmem:[%s926 + $0x8] sm:$0xff] %vm586, %v881
      %929 = vst.msk [vmem:[%s926 + $0x10] sm:$0xff] %vm586, %v883
      %930 = vst.msk [vmem:[%s926 + $0x18] sm:$0xff] %vm586, %v885
      %931 = vst.msk [vmem:[%s926 + $0x20] sm:$0xff] %vm586, %v887
      %932 = vst.msk [vmem:[%s926 + $0x28] sm:$0xff] %vm586, %v889
      %933 = vst.msk [vmem:[%s926 + $0x30] sm:$0xff] %vm586, %v891
      %934 = vst.msk [vmem:[%s926 + $0x38] sm:$0xff] %vm586, %v893
      %935 = vst.msk [vmem:[%s926 + $0x40] sm:$0xff] %vm586, %v895
      %936 = vst.msk [vmem:[%s926 + $0x48] sm:$0xff] %vm586, %v897
      %937 = vst.msk [vmem:[%s926 + $0x50] sm:$0xff] %vm586, %v899
      %938 = vst.msk [vmem:[%s926 + $0x58] sm:$0xff] %vm586, %v901
      %939 = vst.msk [vmem:[%s926 + $0x60] sm:$0xff] %vm586, %v903
      %940 = vst.msk [vmem:[%s926 + $0x68] sm:$0xff] %vm586, %v905
      %941 = vst.msk [vmem:[%s926 + $0x70] sm:$0xff] %vm586, %v907
      %942 = vst.msk [vmem:[%s926 + $0x78] sm:$0xff] %vm586, %v909
      %s943 = smul.u32 16, %s22
      %p944 = scmp.lt.s32.totalorder %s21, 1
      %s945 = scalar_select %p944, %s21, 1
      %p946 = scmp.lt.s32.totalorder %s943, 15
      %s947 = scalar_select %p946, %s943, 15
      %s948 = smul.addr %s945, 48
      %s949 = sadd.s32 %s947, %s948
      %s950 = smul.addr %s949, 8
      %s951 = scalar_lea.vmem %s4, %s950
      %s952 = smul.u32 16, %s22
      %p953 = scmp.lt.s32.totalorder %s21, 1
      %s954 = scalar_select %p953, %s21, 1
      %p955 = scmp.lt.s32.totalorder %s952, 15
      %s956 = scalar_select %p955, %s952, 15
      %s957 = smul.addr %s954, 48
      %s958 = sadd.s32 %s956, %s957
      %s959 = smul.addr %s958, 8
      %s960 = scalar_lea.vmem %s5, %s959
      // Predicated region
      $region37: #{yolo_head_forward.5} parent=35 // pred_check
        %p961 = pneg %p145
      $region38: #{yolo_head_forward.5} parent=35 // pred_check_branch
        %963 = sbr.rel (%p961) target = $region40
      $region39: #{yolo_head_forward.5} parent=35 // pred_region
        %s964 = smul.u32 16, %s22
      $region40: #{yolo_head_forward.5} parent=35 // pred_fallthru
        _
      // Predicated region
      $region41: #{yolo_head_forward.5} parent=35 // pred_check
        %p965 = pneg %p173
      $region42: #{yolo_head_forward.5} parent=35 // pred_check_branch
        %967 = sbr.rel (%p965) target = $region44
      $region43: #{yolo_head_forward.5} parent=35 // pred_region
        %s968 = smul.u32 16, %s22
      $region44: #{yolo_head_forward.5} parent=35 // pred_fallthru
        _
    $region36: #{yolo_head_forward.5} parent=5 // pred_fallthru
      _
    %p969 = scmp.le.s32.totalorder 2, %s12
    // Predicated region
    $region45: #{yolo_head_forward.5} parent=5 // pred_check
      %p970 = pneg %p969
    $region46: #{yolo_head_forward.5} parent=5 // pred_check_branch
      %972 = sbr.rel (%p970) target = $region48
    $region47: #{yolo_head_forward.5} parent=5 // pred_region
      %s973 = ssub.s32 %s12, 2
      // Predicated region
      $region49: #{yolo_head_forward.5} parent=47 // pred_check
        %p974 = pneg %p151
      $region50: #{yolo_head_forward.5} parent=47 // pred_check_branch
        %976 = sbr.rel (%p974) target = $region52
      $region51: #{yolo_head_forward.5} parent=47 // pred_region
        %s977 = smul.u32 16, %s24
        %p978 = scmp.lt.s32.totalorder %s23, 1
        %s979 = scalar_select %p978, %s23, 1
        %p980 = scmp.lt.s32.totalorder %s977, 15
        %s981 = scalar_select %p980, %s977, 15
        %s982 = smul.addr %s979, 48
        %s983 = sadd.s32 %s981, %s982
        %s984 = smul.addr %s983, 8
        %s985 = scalar_lea.vmem %s4, %s984
      $region52: #{yolo_head_forward.5} parent=47 // pred_fallthru
        _
      // Predicated region
      $region53: #{yolo_head_forward.5} parent=47 // pred_check
        %p986 = pneg %p179
      $region54: #{yolo_head_forward.5} parent=47 // pred_check_branch
        %988 = sbr.rel (%p986) target = $region56
      $region55: #{yolo_head_forward.5} parent=47 // pred_region
        %s989 = smul.u32 16, %s24
        %p990 = scmp.lt.s32.totalorder %s23, 1
        %s991 = scalar_select %p990, %s23, 1
        %p992 = scmp.lt.s32.totalorder %s989, 15
        %s993 = scalar_select %p992, %s989, 15
        %s994 = smul.addr %s991, 48
        %s995 = sadd.s32 %s993, %s994
        %s996 = smul.addr %s995, 8
        %s997 = scalar_lea.vmem %s5, %s996
      $region56: #{yolo_head_forward.5} parent=47 // pred_fallthru
        _
    $region48: #{yolo_head_forward.5} parent=5 // pred_fallthru
      _
  $region6: #{yolo_head_forward.5} parent=0 // loop_footer
    %s16 = sadd.s32 1, %s12
  $region7: #{yolo_head_forward.5} parent=0 // loop_footer_branch
    %11 = sbr.rel target = $region3
  $region8: #{yolo_head_forward.5} parent=0 // loop_exit
    _

// kernel: yolo_head_forward.4
$region0: #{yolo_head_forward.4}
  #allocation0 [shape = 'u32[]', space=smem, size = 0x4, offset = 0x4, fixed_abs, tag = 'smem constant byte address 0x4 - core index']
  #allocation1 [shape = 'u32[144,128]{1,0:T(1,128)}', space=vmem, size = 0x12000, scoped, tag = 'internal scratch']
  %s0 = inlined_call_operand.vmem [shape: f32[2,32,128], index: 0, kind: input, shape index: {}]
  %s1 = inlined_call_operand.vmem [shape: f32[24,32], index: 1, kind: input, shape index: {}]
  %s2 = inlined_call_operand.vmem [shape: f32[24,8], index: 2, kind: input, shape index: {}]
  %s3 = inlined_call_operand.vmem [shape: f32[2,128], index: 3, kind: input, shape index: {}]
  %s4 = inlined_call_operand.vmem [shape: f32[2,3,128,8], index: 4, kind: output, shape index: {0}]
  %s5 = inlined_call_operand.vmem [shape: f32[2,3,128,8], index: 5, kind: output, shape index: {1}]
  %6 = xla_tuple %s4, %s5
  %s7 = sld [smem:[#allocation0]]
  $region57: #{yolo_head_forward.4} parent=0
    _
  %s9 = ssub.s32 1, %s7
  %s10 = scalar_select 0, %s9, %s7
  loop: start=0, step=1, limit=4
  $region2: #{yolo_head_forward.4} parent=0 // loop_pre_header
    _
  $region3: #{yolo_head_forward.4} parent=0 // loop_header
    %s12 = sphi 0, %s16
    %p13 = scmp.ge.s32.totalorder %s12, 4
    %s19 = sphi 0, %s31
    %s20 = sphi 0, %s27
    %s21 = sphi 0, %s19
    %s22 = sphi 0, %s20
    %s23 = sphi 0, %s21
    %s24 = sphi 0, %s22
    %s36 = sphi 0, %s38
    %s39 = sphi 0, %s36
    %s40 = sphi 0, %s39
    %s56 = sphi 0, %s40
    %s60 = sphi 0, %s60
    %s62 = sphi 0, %s60
    %s63 = sphi 0, %s62
    %s77 = sphi 0, %s63
    %s81 = sphi 0, %s81
    %s83 = sphi 0, %s81
    %s84 = sphi 0, %s83
    %s98 = sphi 0, %s84
    %s104 = sphi 0, %s106
    %s107 = sphi 0, %s104
    %s108 = sphi 0, %s107
    %s124 = sphi 0, %s108
    %s132 = sphi 0, %s134
    %s135 = sphi 0, %s132
    %s136 = sphi 0, %s135
    %s152 = sphi 0, %s136
    %s160 = sphi 0, %s162
    %s163 = sphi 0, %s160
    %s164 = sphi 0, %s163
    %s180 = sphi 0, %s164
  $region4: #{yolo_head_forward.4} parent=0 // loop_header_branch
    %15 = sbr.rel (%p13) target = $region8
  $region5: #{yolo_head_forward.4} parent=0 // loop_body
    %s17 = ssub.s32 %s12, 1
    %s18 = ssub.s32 %s12, 2
    %s25 = sadd.s32 1, %s20
    %p26 = scmp.ge.s32.totalorder %s25, 1
    %s27 = scalar_select %p26, 0, %s25
    %s28 = sadd.s32 1, %s19
    %s29 = scalar_select %p26, %s28, %s19
    %p30 = scmp.ge.s32.totalorder %s29, 2
    %s31 = scalar_select %p30, 0, %s29
    %s32 = ssub.s32 %s19, %s31
    %s33 = ssub.s32 %s20, %s27
    %s34 = sor.u32 %s32, %s33
    %p35 = scmp.eq.s32.totalorder %s34, 0
    %s37 = sadd.s32 %s36, 1
    %s38 = scalar_select %p35, %s36, %s37
    %p41 = pneg %p35
    %p42 = scmp.eq.s32.totalorder %s12, 1
    %p43 = por %p41, %p42
    %p44 = scmp.ne.s32.totalorder %s36, %s39
    %p45 = scmp.eq.s32.totalorder %s12, 0
    %p46 = por %p44, %p45
    %p47 = scmp.ne.s32.totalorder %s36, %s39
    %p48 = scmp.eq.s32.totalorder %s17, 1
    %p49 = por %p47, %p48
    %p50 = scmp.ne.s32.totalorder %s39, %s40
    %p51 = scmp.eq.s32.totalorder %s17, 0
    %p52 = por %p50, %p51
    %p53 = scmp.ne.s32.totalorder %s39, %s40
    %p54 = scmp.eq.s32.totalorder %s18, 1
    %p55 = por %p53, %p54
    %p57 = scmp.ne.s32.totalorder %s40, %s56
    %p58 = scmp.eq.s32.totalorder %s18, 0
    %p59 = por %p57, %p58
    %s61 = sadd.s32 %s60, 1
    %p64 = scmp.eq.s32.totalorder %s12, 1
    %p65 = scmp.ne.s32.totalorder %s60, %s62
    %p66 = scmp.eq.s32.totalorder %s12, 0
    %p67 = por %p65, %p66
    %p68 = scmp.ne.s32.totalorder %s60, %s62
    %p69 = scmp.eq.s32.totalorder %s17, 1
    %p70 = por %p68, %p69
    %p71 = scmp.ne.s32.totalorder %s62, %s63
    %p72 = scmp.eq.s32.totalorder %s17, 0
    %p73 = por %p71, %p72
    %p74 = scmp.ne.s32.totalorder %s62, %s63
    %p75 = scmp.eq.s32.totalorder %s18, 1
    %p76 = por %p74, %p75
    %p78 = scmp.ne.s32.totalorder %s63, %s77
    %p79 = scmp.eq.s32.totalorder %s18, 0
    %p80 = por %p78, %p79
    %s82 = sadd.s32 %s81, 1
    %p85 = scmp.eq.s32.totalorder %s12, 1
    %p86 = scmp.ne.s32.totalorder %s81, %s83
    %p87 = scmp.eq.s32.totalorder %s12, 0
    %p88 = por %p86, %p87
    %p89 = scmp.ne.s32.totalorder %s81, %s83
    %p90 = scmp.eq.s32.totalorder %s17, 1
    %p91 = por %p89, %p90
    %p92 = scmp.ne.s32.totalorder %s83, %s84
    %p93 = scmp.eq.s32.totalorder %s17, 0
    %p94 = por %p92, %p93
    %p95 = scmp.ne.s32.totalorder %s83, %s84
    %p96 = scmp.eq.s32.totalorder %s18, 1
    %p97 = por %p95, %p96
    %p99 = scmp.ne.s32.totalorder %s84, %s98
    %p100 = scmp.eq.s32.totalorder %s18, 0
    %p101 = por %p99, %p100
    %s102 = ssub.s32 %s20, %s27
    %p103 = scmp.eq.s32.totalorder %s102, 0
    %s105 = sadd.s32 %s104, 1
    %s106 = scalar_select %p103, %s104, %s105
    %p109 = pneg %p103
    %p110 = scmp.eq.s32.totalorder %s12, 1
    %p111 = por %p109, %p110
    %p112 = scmp.ne.s32.totalorder %s104, %s107
    %p113 = scmp.eq.s32.totalorder %s12, 0
    %p114 = por %p112, %p113
    %p115 = scmp.ne.s32.totalorder %s104, %s107
    %p116 = scmp.eq.s32.totalorder %s17, 1
    %p117 = por %p115, %p116
    %p118 = scmp.ne.s32.totalorder %s107, %s108
    %p119 = scmp.eq.s32.totalorder %s17, 0
    %p120 = por %p118, %p119
    %p121 = scmp.ne.s32.totalorder %s107, %s108
    %p122 = scmp.eq.s32.totalorder %s18, 1
    %p123 = por %p121, %p122
    %p125 = scmp.ne.s32.totalorder %s108, %s124
    %p126 = scmp.eq.s32.totalorder %s18, 0
    %p127 = por %p125, %p126
    %s128 = ssub.s32 %s19, %s31
    %s129 = ssub.s32 %s20, %s27
    %s130 = sor.u32 %s128, %s129
    %p131 = scmp.eq.s32.totalorder %s130, 0
    %s133 = sadd.s32 %s132, 1
    %s134 = scalar_select %p131, %s132, %s133
    %p137 = pneg %p131
    %p138 = scmp.eq.s32.totalorder %s12, 1
    %p139 = por %p137, %p138
    %p140 = scmp.ne.s32.totalorder %s132, %s135
    %p141 = scmp.eq.s32.totalorder %s12, 0
    %p142 = por %p140, %p141
    %p143 = scmp.ne.s32.totalorder %s132, %s135
    %p144 = scmp.eq.s32.totalorder %s17, 1
    %p145 = por %p143, %p144
    %p146 = scmp.ne.s32.totalorder %s135, %s136
    %p147 = scmp.eq.s32.totalorder %s17, 0
    %p148 = por %p146, %p147
    %p149 = scmp.ne.s32.totalorder %s135, %s136
    %p150 = scmp.eq.s32.totalorder %s18, 1
    %p151 = por %p149, %p150
    %p153 = scmp.ne.s32.totalorder %s136, %s152
    %p154 = scmp.eq.s32.totalorder %s18, 0
    %p155 = por %p153, %p154
    %s156 = ssub.s32 %s19, %s31
    %s157 = ssub.s32 %s20, %s27
    %s158 = sor.u32 %s156, %s157
    %p159 = scmp.eq.s32.totalorder %s158, 0
    %s161 = sadd.s32 %s160, 1
    %s162 = scalar_select %p159, %s160, %s161
    %p165 = pneg %p159
    %p166 = scmp.eq.s32.totalorder %s12, 1
    %p167 = por %p165, %p166
    %p168 = scmp.ne.s32.totalorder %s160, %s163
    %p169 = scmp.eq.s32.totalorder %s12, 0
    %p170 = por %p168, %p169
    %p171 = scmp.ne.s32.totalorder %s160, %s163
    %p172 = scmp.eq.s32.totalorder %s17, 1
    %p173 = por %p171, %p172
    %p174 = scmp.ne.s32.totalorder %s163, %s164
    %p175 = scmp.eq.s32.totalorder %s17, 0
    %p176 = por %p174, %p175
    %p177 = scmp.ne.s32.totalorder %s163, %s164
    %p178 = scmp.eq.s32.totalorder %s18, 1
    %p179 = por %p177, %p178
    %p181 = scmp.ne.s32.totalorder %s164, %s180
    %p182 = scmp.eq.s32.totalorder %s18, 0
    %p183 = por %p181, %p182
    %p184 = scmp.le.s32.totalorder 1, %s12
    %p185 = scmp.lt.s32.totalorder %s12, 3
    %p186 = pnand %p184, %p185
    %p187 = pneg %p186
    // Predicated region
    $region9: #{yolo_head_forward.4} parent=5 // pred_check
      _
    $region10: #{yolo_head_forward.4} parent=5 // pred_check_branch
      %189 = sbr.rel (%p186) target = $region12
    $region11: #{yolo_head_forward.4} parent=5 // pred_region
      %s190 = ssub.s32 %s12, 1
      // Predicated region
      $region13: #{yolo_head_forward.4} parent=11 // pred_check
        %p191 = pneg %p73
      $region14: #{yolo_head_forward.4} parent=11 // pred_check_branch
        %193 = sbr.rel (%p191) target = $region16
      $region15: #{yolo_head_forward.4} parent=11 // pred_region
        _
      $region16: #{yolo_head_forward.4} parent=11 // pred_fallthru
        _
      // Predicated region
      $region17: #{yolo_head_forward.4} parent=11 // pred_check
        %p194 = pneg %p94
      $region18: #{yolo_head_forward.4} parent=11 // pred_check_branch
        %196 = sbr.rel (%p194) target = $region20
      $region19: #{yolo_head_forward.4} parent=11 // pred_region
        _
      $region20: #{yolo_head_forward.4} parent=11 // pred_fallthru
        _
      // Predicated region
      $region21: #{yolo_head_forward.4} parent=11 // pred_check
        %p197 = pneg %p120
      $region22: #{yolo_head_forward.4} parent=11 // pred_check_branch
        %199 = sbr.rel (%p197) target = $region24
      $region23: #{yolo_head_forward.4} parent=11 // pred_region
        %p200 = scmp.lt.s32.totalorder %s22, 0
        %s201 = scalar_select %p200, %s22, 0
        %s202 = smul.addr %s201, 2
        %s203 = scalar_lea.vmem %s3, %s202
      $region24: #{yolo_head_forward.4} parent=11 // pred_fallthru
        _
    $region12: #{yolo_head_forward.4} parent=5 // pred_fallthru
      _
    %p204 = scmp.lt.s32.totalorder %s12, 2
    // Predicated region
    $region25: #{yolo_head_forward.4} parent=5 // pred_check
      %p205 = pneg %p204
    $region26: #{yolo_head_forward.4} parent=5 // pred_check_branch
      %207 = sbr.rel (%p205) target = $region28
    $region27: #{yolo_head_forward.4} parent=5 // pred_region
      // Predicated region
      $region29: #{yolo_head_forward.4} parent=27 // pred_check
        %p208 = pneg %p46
      $region30: #{yolo_head_forward.4} parent=27 // pred_check_branch
        %210 = sbr.rel (%p208) target = $region32
      $region31: #{yolo_head_forward.4} parent=27 // pred_region
        %p211 = scmp.lt.s32.totalorder %s19, 1
        %s212 = scalar_select %p211, %s19, 1
        %p213 = scmp.lt.s32.totalorder %s20, 0
        %s214 = scalar_select %p213, %s20, 0
        %s215 = smul.addr %s212, 4
        %s216 = sadd.s32 %s214, %s215
        %s217 = smul.addr %s216, 8
        %s218 = scalar_lea.vmem %s0, %s217
      $region32: #{yolo_head_forward.4} parent=27 // pred_fallthru
        _
    $region28: #{yolo_head_forward.4} parent=5 // pred_fallthru
      _
    %p219 = scmp.le.s32.totalorder 1, %s12
    %p220 = scmp.lt.s32.totalorder %s12, 3
    %p221 = pnand %p219, %p220
    %p222 = pneg %p221
    // Predicated region
    $region33: #{yolo_head_forward.4} parent=5 // pred_check
      _
    $region34: #{yolo_head_forward.4} parent=5 // pred_check_branch
      %224 = sbr.rel (%p221) target = $region36
    $region35: #{yolo_head_forward.4} parent=5 // pred_region
      %s225 = ssub.s32 %s12, 1
      %p226 = scmp.lt.s32.totalorder %s21, 1
      %s227 = scalar_select %p226, %s21, 1
      %p228 = scmp.lt.s32.totalorder %s22, 0
      %s229 = scalar_select %p228, %s22, 0
      %s230 = smul.addr %s227, 4
      %s231 = sadd.s32 %s229, %s230
      %s232 = smul.addr %s231, 8
      %s233 = scalar_lea.vmem %s0, %s232
      %p234 = pneg %p52
      %p235 = pneg %p49
      %p236 = pneg %p73
      %p237 = pneg %p70
      %p238 = pneg %p94
      %p239 = pneg %p91
      %p240 = scmp.lt.s32.totalorder %s22, 0
      %s241 = scalar_select %p240, %s22, 0
      %s242 = smul.addr %s241, 2
      %s243 = scalar_lea.vmem %s3, %s242
      %p244 = pneg %p120
      %p245 = pneg %p117
      %p246 = pneg %p148
      %p247 = pneg %p145
      %s248 = smul.u32 16, %s22
      %p249 = scmp.lt.s32.totalorder %s21, 1
      %s250 = scalar_select %p249, %s21, 1
      %p251 = scmp.lt.s32.totalorder %s248, 15
      %s252 = scalar_select %p251, %s248, 15
      %s253 = smul.addr %s250, 48
      %s254 = sadd.s32 %s252, %s253
      %s255 = smul.addr %s254, 8
      %s256 = scalar_lea.vmem %s4, %s255
      %p257 = pneg %p176
      %p258 = pneg %p173
      %s259 = smul.u32 16, %s22
      %p260 = scmp.lt.s32.totalorder %s21, 1
      %s261 = scalar_select %p260, %s21, 1
      %p262 = scmp.lt.s32.totalorder %s259, 15
      %s263 = scalar_select %p262, %s259, 15
      %s264 = smul.addr %s261, 48
      %s265 = sadd.s32 %s263, %s264
      %s266 = smul.addr %s265, 8
      %s267 = scalar_lea.vmem %s5, %s266
      %p268 = scmp.lt.s32.totalorder %s21, 1
      %s269 = scalar_select %p268, %s21, 1
      %p270 = scmp.lt.s32.totalorder %s22, 0
      %s271 = scalar_select %p270, %s22, 0
      %s272 = smul.addr %s269, 4
      %s273 = sadd.s32 %s271, %s272
      %s274 = smul.addr %s273, 8
      %s275 = scalar_lea.vmem %s0, %s274
      %p276 = scmp.lt.s32.totalorder %s22, 0
      %s277 = scalar_select %p276, %s22, 0
      %s278 = smul.addr %s277, 2
      %s279 = scalar_lea.vmem %s3, %s278
      %s280 = smul.u32 16, %s22
      %p281 = scmp.lt.s32.totalorder %s21, 1
      %s282 = scalar_select %p281, %s21, 1
      %p283 = scmp.lt.s32.totalorder %s280, 15
      %s284 = scalar_select %p283, %s280, 15
      %s285 = smul.addr %s282, 48
      %s286 = sadd.s32 %s284, %s285
      %s287 = smul.addr %s286, 8
      %s288 = scalar_lea.vmem %s4, %s287
      %s289 = smul.u32 16, %s22
      %s290 = smul.u32 16, %s22
      %p291 = scmp.lt.s32.totalorder %s21, 1
      %s292 = scalar_select %p291, %s21, 1
      %p293 = scmp.lt.s32.totalorder %s290, 15
      %s294 = scalar_select %p293, %s290, 15
      %s295 = smul.addr %s292, 48
      %s296 = sadd.s32 %s294, %s295
      %s297 = smul.addr %s296, 8
      %s298 = scalar_lea.vmem %s5, %s297
      %s299 = smul.u32 16, %s22
      %v300 = vld [vmem:[%s275] sm:$0xff]
      %v301 = vld [vmem:[%s275 + $0x8] sm:$0xff]
      %v302 = vld [vmem:[%s275 + $0x10] sm:$0xff]
      %v303 = vld [vmem:[%s275 + $0x18] sm:$0xff]
      %v304 = vld [vmem:[%s1] sm:$0xff]
      %v305 = vld [vmem:[%s1 + $0x8] sm:$0xff]
      %v306 = vld [vmem:[%s1 + $0x10] sm:$0xff]
      %v307 = vld [vmem:[%s2] sm:$0xff]
      %v308 = vld [vmem:[%s2 + $0x8] sm:$0xff]
      %v309 = vld [vmem:[%s2 + $0x10] sm:$0xff]
      %v310 = vld [vmem:[%s279] sm:$0x3]
      %312 = vset.pattern.permute.xlu0 0
      %313 = vperm.xlu0 %312, %v307
      %v314 = vpop.permute.xlu0 %313
      %317 = vset.pattern.permute.xlu0 0
      %318 = vperm.xlu0 %317, %v308
      %v319 = vpop.permute.xlu0 %318
      %322 = vset.pattern.permute.xlu0 0
      %323 = vperm.xlu0 %322, %v309
      %v324 = vpop.permute.xlu0 %323
      %vm326 = vcmask 261120
      %v328 = vsel %vm326, %v304, 0
      %v331 = vsel %vm326, %v305, 0
      %v334 = vsel %vm326, %v306, 0
      %336 = vmatprep.subr.mxu0 0.0
      %337 = vmatpush1.msra.mxu0 0.0
      %338 = vmatprep.subr.mxu0 0.0
      %339 = vmatpush1.msra.mxu0 0.0
      %340 = vmatprep.subr.mxu0 0.0
      %341 = vmatpush1.msra.mxu0 0.0
      %342 = vmatprep.subr.mxu0 0.0
      %343 = vmatpush1.msra.mxu0 0.0
      %344 = vmatprep.subr.mxu0 0.0
      %345 = vmatpush1.msra.mxu0 0.0
      %346 = vmatprep.subr.mxu0 0.0
      %347 = vmatpush1.msra.mxu0 0.0
      %348 = vmatprep.subr.mxu0 0.0
      %349 = vmatpush1.msra.mxu0 0.0
      %350 = vmatprep.subr.mxu0 0.0
      %351 = vmatpush1.msra.mxu0 0.0
      %352 = vmatprep.subr.mxu0 0.0
      %353 = vmatpush1.msra.mxu0 0.0
      %354 = vmatprep.subr.mxu0 0.0
      %355 = vmatpush1.msra.mxu0 0.0
      %356 = vmatprep.subr.mxu0 0.0
      %357 = vmatpush1.msra.mxu0 0.0
      %358 = vmatprep.subr.mxu0 0.0
      %359 = vmatpush1.msra.mxu0 0.0
      %360 = vmatprep.subr.mxu0 0.0
      %361 = vmatpush1.msra.mxu0 %v303
      %362 = vmatprep.subr.mxu0 0.0
      %363 = vmatpush1.msra.mxu0 %v302
      %364 = vmatprep.subr.mxu0 0.0
      %365 = vmatpush1.msra.mxu0 %v301
      %366 = vmatprep.subr.mxu0 0.0
      %367 = vmatpush1.msra.mxu0 %v300
      %368 = vmatprep.subr.mxu0 0.0
      %369 = vmatpush2.msra.mxu0 0.0
      %370 = vmatprep.subr.mxu0 0.0
      %371 = vmatpush2.msra.mxu0 0.0
      %372 = vmatprep.subr.mxu0 0.0
      %373 = vmatpush2.msra.mxu0 0.0
      %374 = vmatprep.subr.mxu0 0.0
      %375 = vmatpush2.msra.mxu0 0.0
      %376 = vmatprep.subr.mxu0 0.0
      %377 = vmatpush2.msra.mxu0 0.0
      %378 = vmatprep.subr.mxu0 0.0
      %379 = vmatpush2.msra.mxu0 0.0
      %380 = vmatprep.subr.mxu0 0.0
      %381 = vmatpush2.msra.mxu0 0.0
      %382 = vmatprep.subr.mxu0 0.0
      %383 = vmatpush2.msra.mxu0 0.0
      %384 = vmatprep.subr.mxu0 0.0
      %385 = vmatpush2.msra.mxu0 0.0
      %386 = vmatprep.subr.mxu0 0.0
      %387 = vmatpush2.msra.mxu0 0.0
      %388 = vmatprep.subr.mxu0 0.0
      %389 = vmatpush2.msra.mxu0 0.0
      %390 = vmatprep.subr.mxu0 0.0
      %391 = vmatpush2.msra.mxu0 0.0
      %392 = vmatprep.subr.mxu0 0.0
      %393 = vmatpush2.msra.mxu0 0.0
      %394 = vmatprep.subr.mxu0 0.0
      %395 = vmatpush2.msra.mxu0 0.0
      %396 = vmatprep.subr.mxu0 0.0
      %397 = vmatpush2.msra.mxu0 0.0
      %398 = vmatprep.subr.mxu0 0.0
      %399 = vmatpush2.msra.mxu0 0.0
      %400 = vmatprep.mubr.f32.mxu0 0.0
      %401 = vmatmul.mubr.f32.gmra.mxu0 %v328
      %v402 = vpop.f32.mrf.mxu0
      %v403 = vadd.f32 %v314, %v402
      %v404 = vpop.f32.mrf.mxu0
      %405 = vmatprep.mubr.f32.mxu0 0.0
      %406 = vmatmul.mubr.f32.gmra.mxu0 %v331
      %v407 = vpop.f32.mrf.mxu0
      %v408 = vadd.f32 %v319, %v407
      %v409 = vpop.f32.mrf.mxu0
      %410 = vmatprep.mubr.f32.mxu0 0.0
      %411 = vmatmul.mubr.f32.gmra.mxu0 %v334
      %v412 = vpop.f32.mrf.mxu0
      %v413 = vadd.f32 %v324, %v412
      %v414 = vpop.f32.mrf.mxu0
      %415 = vdwg.mxu0
      %v416 = vxor.u32 %v403, 2147483648
      %v417 = vxor.u32 %v408, 2147483648
      %v418 = vxor.u32 %v413, 2147483648
      %v419 = vmul.f32 %v416, 1.442695
      %v420 = vpow.pop %v419
      %v421 = vmul.f32 %v417, 1.442695
      %v422 = vpow.pop %v421
      %v423 = vmul.f32 %v418, 1.442695
      %v424 = vpow.pop %v423
      %v425 = vadd.f32 %v420, 1.0
      %v426 = vadd.f32 %v422, 1.0
      %v427 = vadd.f32 %v424, 1.0
      %v428 = vrcp.pop %v425
      %v429 = vmul.f32 1.0, %v428
      %v430 = vrcp.pop %v426
      %v431 = vmul.f32 1.0, %v430
      %v432 = vrcp.pop %v427
      %v433 = vmul.f32 1.0, %v432
      %v434 = vadd.f32 %v429, %v429
      %v435 = vadd.f32 %v431, %v431
      %v436 = vadd.f32 %v433, %v433
      %437 = vset.pattern.permute.xlu0 1
      %438 = vperm.xlu0 %437, %v307
      %v439 = vpop.permute.xlu0 %438
      %441 = vset.pattern.permute.xlu0 1
      %442 = vperm.xlu0 %441, %v308
      %v443 = vpop.permute.xlu0 %442
      %445 = vset.pattern.permute.xlu0 1
      %446 = vperm.xlu0 %445, %v309
      %v447 = vpop.permute.xlu0 %446
      %v449 = vmul.f32 %v434, %v439
      %v450 = vmul.f32 %v435, %v443
      %v451 = vmul.f32 %v436, %v447
      %v452 = vlaneseq
      %v453 = vshrl.u32 %v452, 7
      %v454 = vsub.s32 0, %v453
      %v455 = vrot.slane %v310, %v454
      %456 = vset.pattern.permute.xlu0 3
      %457 = vperm.xlu0 %456, %v307
      %v458 = vpop.permute.xlu0 %457
      %460 = vset.pattern.permute.xlu0 3
      %461 = vperm.xlu0 %460, %v308
      %v462 = vpop.permute.xlu0 %461
      %464 = vset.pattern.permute.xlu0 3
      %465 = vperm.xlu0 %464, %v309
      %v466 = vpop.permute.xlu0 %465
      %v468 = vmul.f32 %v455, %v458
      %v469 = vmul.f32 %v455, %v462
      %v470 = vmul.f32 %v455, %v466
      %v471 = vlaneseq
      %v472 = vshrl.u32 %v471, 7
      %v473 = vsub.s32 1, %v472
      %v474 = vrot.slane %v310, %v473
      %475 = vset.pattern.permute.xlu0 4
      %476 = vperm.xlu0 %475, %v307
      %v477 = vpop.permute.xlu0 %476
      %479 = vset.pattern.permute.xlu0 4
      %480 = vperm.xlu0 %479, %v308
      %v481 = vpop.permute.xlu0 %480
      %483 = vset.pattern.permute.xlu0 4
      %484 = vperm.xlu0 %483, %v309
      %v485 = vpop.permute.xlu0 %484
      %v487 = vmul.f32 %v474, %v477
      %v488 = vmul.f32 %v474, %v481
      %v489 = vmul.f32 %v474, %v485
      %v490 = vadd.f32 %v468, %v487
      %v491 = vadd.f32 %v469, %v488
      %v492 = vadd.f32 %v470, %v489
      %493 = vset.pattern.permute.xlu0 2
      %494 = vperm.xlu0 %493, %v307
      %v495 = vpop.permute.xlu0 %494
      %497 = vset.pattern.permute.xlu0 2
      %498 = vperm.xlu0 %497, %v308
      %v499 = vpop.permute.xlu0 %498
      %501 = vset.pattern.permute.xlu0 2
      %502 = vperm.xlu0 %501, %v309
      %v503 = vpop.permute.xlu0 %502
      %v505 = vadd.f32 %v490, %v495
      %v506 = vadd.f32 %v491, %v499
      %v507 = vadd.f32 %v492, %v503
      %v508 = vadd.f32 %v449, %v505
      %v509 = vadd.f32 %v450, %v506
      %v510 = vadd.f32 %v451, %v507
      %v511 = vmul.f32 %v434, %v434
      %v512 = vmul.f32 %v435, %v435
      %v513 = vmul.f32 %v436, %v436
      %514 = vset.pattern.permute.xlu0 5
      %515 = vperm.xlu0 %514, %v307
      %v516 = vpop.permute.xlu0 %515
      %518 = vset.pattern.permute.xlu0 5
      %519 = vperm.xlu0 %518, %v308
      %v520 = vpop.permute.xlu0 %519
      %522 = vset.pattern.permute.xlu0 5
      %523 = vperm.xlu0 %522, %v309
      %v524 = vpop.permute.xlu0 %523
      %v526 = vmul.f32 %v511, %v516
      %v527 = vmul.f32 %v512, %v520
      %v528 = vmul.f32 %v513, %v524
      %vm529 = vcmp.gt.f32.partialorder %v307, 0.0
      %vm530 = vcmp.gt.f32.partialorder %v308, 0.0
      %vm531 = vcmp.gt.f32.partialorder %v309, 0.0
      %v532 = vsel %vm529, 1, 0
      %v533 = vsel %vm530, 1, 0
      %v534 = vsel %vm531, 1, 0
      %535 = vset.pattern.permute.xlu0 6
      %536 = vperm.xlu0 %535, %v532
      %v537 = vpop.permute.xlu0 %536
      %538 = vset.pattern.permute.xlu0 6
      %539 = vperm.xlu0 %538, %v533
      %v540 = vpop.permute.xlu0 %539
      %541 = vset.pattern.permute.xlu0 6
      %542 = vperm.xlu0 %541, %v534
      %v543 = vpop.permute.xlu0 %542
      %vm544 = vcmp.eq.s32.totalorder %v537, 1
      %vm545 = vcmp.eq.s32.totalorder %v540, 1
      %vm546 = vcmp.eq.s32.totalorder %v543, 1
      %v547 = vsel %vm544, %v526, %v508
      %v548 = vsel %vm545, %v527, %v509
      %v549 = vsel %vm546, %v528, %v510
      %550 = vxpose.xlu0.b32.start [1/16] %v547, 128
      %551 = vxpose.xlu0.b32.cont [2/16] %v548, 128
      %552 = vxpose.xlu0.b32.cont [3/16] %v549, 128
      %553 = vxpose.xlu0.b32.cont [4/16] %v403, 128
      %554 = vxpose.xlu0.b32.cont [5/16] %v408, 128
      %555 = vxpose.xlu0.b32.cont [6/16] %v413, 128
      %556 = vxpose.xlu0.b32.cont [7/16] 0.0, 128
      %557 = vxpose.xlu0.b32.cont [8/16] 0.0, 128
      %558 = vxpose.xlu0.b32.cont [9/16] 0.0, 128
      %559 = vxpose.xlu0.b32.cont [10/16] 0.0, 128
      %560 = vxpose.xlu0.b32.cont [11/16] 0.0, 128
      %561 = vxpose.xlu0.b32.cont [12/16] 0.0, 128
      %562 = vxpose.xlu0.b32.cont [13/16] 0.0, 128
      %563 = vxpose.xlu0.b32.cont [14/16] 0.0, 128
      %564 = vxpose.xlu0.b32.cont [15/16] 0.0, 128
      %565 = vxpose.xlu0.b32.end [16/16] 0.0, 128
      %v566 = vpop.trf.xlu0
      %v567 = vpop.trf.xlu0
      %v568 = vpop.trf.xlu0
      %v569 = vpop.trf.xlu0
      %v570 = vpop.trf.xlu0
      %v571 = vpop.trf.xlu0
      %v572 = vpop.trf.xlu0
      %v573 = vpop.trf.xlu0
      %v574 = vpop.trf.xlu0
      %v575 = vpop.trf.xlu0
      %v576 = vpop.trf.xlu0
      %v577 = vpop.trf.xlu0
      %v578 = vpop.trf.xlu0
      %v579 = vpop.trf.xlu0
      %v580 = vpop.trf.xlu0
      %v581 = vpop.trf.xlu0
      %vm582 = vcmask 64512
      %583 = vst.msk [vmem:[%s288] sm:$0xff] %vm582, %v566
      %584 = vst.msk [vmem:[%s288 + $0x8] sm:$0xff] %vm582, %v567
      %585 = vst.msk [vmem:[%s288 + $0x10] sm:$0xff] %vm582, %v568
      %586 = vst.msk [vmem:[%s288 + $0x18] sm:$0xff] %vm582, %v569
      %587 = vst.msk [vmem:[%s288 + $0x20] sm:$0xff] %vm582, %v570
      %588 = vst.msk [vmem:[%s288 + $0x28] sm:$0xff] %vm582, %v571
      %589 = vst.msk [vmem:[%s288 + $0x30] sm:$0xff] %vm582, %v572
      %590 = vst.msk [vmem:[%s288 + $0x38] sm:$0xff] %vm582, %v573
      %591 = vst.msk [vmem:[%s288 + $0x40] sm:$0xff] %vm582, %v574
      %592 = vst.msk [vmem:[%s288 + $0x48] sm:$0xff] %vm582, %v575
      %593 = vst.msk [vmem:[%s288 + $0x50] sm:$0xff] %vm582, %v576
      %594 = vst.msk [vmem:[%s288 + $0x58] sm:$0xff] %vm582, %v577
      %595 = vst.msk [vmem:[%s288 + $0x60] sm:$0xff] %vm582, %v578
      %596 = vst.msk [vmem:[%s288 + $0x68] sm:$0xff] %vm582, %v579
      %597 = vst.msk [vmem:[%s288 + $0x70] sm:$0xff] %vm582, %v580
      %598 = vst.msk [vmem:[%s288 + $0x78] sm:$0xff] %vm582, %v581
      %615 = vrot.lane.b32.xlu0 %v566, 104
      %v616 = vpop.permute.xlu0 %615
      %617 = vrot.lane.b32.xlu0 %v567, 104
      %v618 = vpop.permute.xlu0 %617
      %619 = vrot.lane.b32.xlu0 %v568, 104
      %v620 = vpop.permute.xlu0 %619
      %621 = vrot.lane.b32.xlu0 %v569, 104
      %v622 = vpop.permute.xlu0 %621
      %623 = vrot.lane.b32.xlu0 %v570, 104
      %v624 = vpop.permute.xlu0 %623
      %625 = vrot.lane.b32.xlu0 %v571, 104
      %v626 = vpop.permute.xlu0 %625
      %627 = vrot.lane.b32.xlu0 %v572, 104
      %v628 = vpop.permute.xlu0 %627
      %629 = vrot.lane.b32.xlu0 %v573, 104
      %v630 = vpop.permute.xlu0 %629
      %631 = vrot.lane.b32.xlu0 %v574, 104
      %v632 = vpop.permute.xlu0 %631
      %633 = vrot.lane.b32.xlu0 %v575, 104
      %v634 = vpop.permute.xlu0 %633
      %635 = vrot.lane.b32.xlu0 %v576, 104
      %v636 = vpop.permute.xlu0 %635
      %637 = vrot.lane.b32.xlu0 %v577, 104
      %v638 = vpop.permute.xlu0 %637
      %639 = vrot.lane.b32.xlu0 %v578, 104
      %v640 = vpop.permute.xlu0 %639
      %641 = vrot.lane.b32.xlu0 %v579, 104
      %v642 = vpop.permute.xlu0 %641
      %643 = vrot.lane.b32.xlu0 %v580, 104
      %v644 = vpop.permute.xlu0 %643
      %645 = vrot.lane.b32.xlu0 %v581, 104
      %v646 = vpop.permute.xlu0 %645
      %663 = vst.msk [vmem:[%s298] sm:$0xff] %vm582, %v616
      %664 = vst.msk [vmem:[%s298 + $0x8] sm:$0xff] %vm582, %v618
      %665 = vst.msk [vmem:[%s298 + $0x10] sm:$0xff] %vm582, %v620
      %666 = vst.msk [vmem:[%s298 + $0x18] sm:$0xff] %vm582, %v622
      %667 = vst.msk [vmem:[%s298 + $0x20] sm:$0xff] %vm582, %v624
      %668 = vst.msk [vmem:[%s298 + $0x28] sm:$0xff] %vm582, %v626
      %669 = vst.msk [vmem:[%s298 + $0x30] sm:$0xff] %vm582, %v628
      %670 = vst.msk [vmem:[%s298 + $0x38] sm:$0xff] %vm582, %v630
      %671 = vst.msk [vmem:[%s298 + $0x40] sm:$0xff] %vm582, %v632
      %672 = vst.msk [vmem:[%s298 + $0x48] sm:$0xff] %vm582, %v634
      %673 = vst.msk [vmem:[%s298 + $0x50] sm:$0xff] %vm582, %v636
      %674 = vst.msk [vmem:[%s298 + $0x58] sm:$0xff] %vm582, %v638
      %675 = vst.msk [vmem:[%s298 + $0x60] sm:$0xff] %vm582, %v640
      %676 = vst.msk [vmem:[%s298 + $0x68] sm:$0xff] %vm582, %v642
      %677 = vst.msk [vmem:[%s298 + $0x70] sm:$0xff] %vm582, %v644
      %678 = vst.msk [vmem:[%s298 + $0x78] sm:$0xff] %vm582, %v646
      %679 = vrot.lane.b32.xlu0 %v566, 120
      %v680 = vpop.permute.xlu0 %679
      %681 = vrot.lane.b32.xlu0 %v567, 120
      %v682 = vpop.permute.xlu0 %681
      %683 = vrot.lane.b32.xlu0 %v568, 120
      %v684 = vpop.permute.xlu0 %683
      %685 = vrot.lane.b32.xlu0 %v569, 120
      %v686 = vpop.permute.xlu0 %685
      %687 = vrot.lane.b32.xlu0 %v570, 120
      %v688 = vpop.permute.xlu0 %687
      %689 = vrot.lane.b32.xlu0 %v571, 120
      %v690 = vpop.permute.xlu0 %689
      %691 = vrot.lane.b32.xlu0 %v572, 120
      %v692 = vpop.permute.xlu0 %691
      %693 = vrot.lane.b32.xlu0 %v573, 120
      %v694 = vpop.permute.xlu0 %693
      %695 = vrot.lane.b32.xlu0 %v574, 120
      %v696 = vpop.permute.xlu0 %695
      %697 = vrot.lane.b32.xlu0 %v575, 120
      %v698 = vpop.permute.xlu0 %697
      %699 = vrot.lane.b32.xlu0 %v576, 120
      %v700 = vpop.permute.xlu0 %699
      %701 = vrot.lane.b32.xlu0 %v577, 120
      %v702 = vpop.permute.xlu0 %701
      %703 = vrot.lane.b32.xlu0 %v578, 120
      %v704 = vpop.permute.xlu0 %703
      %705 = vrot.lane.b32.xlu0 %v579, 120
      %v706 = vpop.permute.xlu0 %705
      %707 = vrot.lane.b32.xlu0 %v580, 120
      %v708 = vpop.permute.xlu0 %707
      %709 = vrot.lane.b32.xlu0 %v581, 120
      %v710 = vpop.permute.xlu0 %709
      %s727 = scalar_lea.vmem %s288, 128
      %728 = vst.msk [vmem:[%s727] sm:$0xff] %vm582, %v680
      %729 = vst.msk [vmem:[%s727 + $0x8] sm:$0xff] %vm582, %v682
      %730 = vst.msk [vmem:[%s727 + $0x10] sm:$0xff] %vm582, %v684
      %731 = vst.msk [vmem:[%s727 + $0x18] sm:$0xff] %vm582, %v686
      %732 = vst.msk [vmem:[%s727 + $0x20] sm:$0xff] %vm582, %v688
      %733 = vst.msk [vmem:[%s727 + $0x28] sm:$0xff] %vm582, %v690
      %734 = vst.msk [vmem:[%s727 + $0x30] sm:$0xff] %vm582, %v692
      %735 = vst.msk [vmem:[%s727 + $0x38] sm:$0xff] %vm582, %v694
      %736 = vst.msk [vmem:[%s727 + $0x40] sm:$0xff] %vm582, %v696
      %737 = vst.msk [vmem:[%s727 + $0x48] sm:$0xff] %vm582, %v698
      %738 = vst.msk [vmem:[%s727 + $0x50] sm:$0xff] %vm582, %v700
      %739 = vst.msk [vmem:[%s727 + $0x58] sm:$0xff] %vm582, %v702
      %740 = vst.msk [vmem:[%s727 + $0x60] sm:$0xff] %vm582, %v704
      %741 = vst.msk [vmem:[%s727 + $0x68] sm:$0xff] %vm582, %v706
      %742 = vst.msk [vmem:[%s727 + $0x70] sm:$0xff] %vm582, %v708
      %743 = vst.msk [vmem:[%s727 + $0x78] sm:$0xff] %vm582, %v710
      %744 = vrot.lane.b32.xlu0 %v566, 96
      %v745 = vpop.permute.xlu0 %744
      %746 = vrot.lane.b32.xlu0 %v567, 96
      %v747 = vpop.permute.xlu0 %746
      %748 = vrot.lane.b32.xlu0 %v568, 96
      %v749 = vpop.permute.xlu0 %748
      %750 = vrot.lane.b32.xlu0 %v569, 96
      %v751 = vpop.permute.xlu0 %750
      %752 = vrot.lane.b32.xlu0 %v570, 96
      %v753 = vpop.permute.xlu0 %752
      %754 = vrot.lane.b32.xlu0 %v571, 96
      %v755 = vpop.permute.xlu0 %754
      %756 = vrot.lane.b32.xlu0 %v572, 96
      %v757 = vpop.permute.xlu0 %756
      %758 = vrot.lane.b32.xlu0 %v573, 96
      %v759 = vpop.permute.xlu0 %758
      %760 = vrot.lane.b32.xlu0 %v574, 96
      %v761 = vpop.permute.xlu0 %760
      %762 = vrot.lane.b32.xlu0 %v575, 96
      %v763 = vpop.permute.xlu0 %762
      %764 = vrot.lane.b32.xlu0 %v576, 96
      %v765 = vpop.permute.xlu0 %764
      %766 = vrot.lane.b32.xlu0 %v577, 96
      %v767 = vpop.permute.xlu0 %766
      %768 = vrot.lane.b32.xlu0 %v578, 96
      %v769 = vpop.permute.xlu0 %768
      %770 = vrot.lane.b32.xlu0 %v579, 96
      %v771 = vpop.permute.xlu0 %770
      %772 = vrot.lane.b32.xlu0 %v580, 96
      %v773 = vpop.permute.xlu0 %772
      %774 = vrot.lane.b32.xlu0 %v581, 96
      %v775 = vpop.permute.xlu0 %774
      %s792 = scalar_lea.vmem %s298, 128
      %793 = vst.msk [vmem:[%s792] sm:$0xff] %vm582, %v745
      %794 = vst.msk [vmem:[%s792 + $0x8] sm:$0xff] %vm582, %v747
      %795 = vst.msk [vmem:[%s792 + $0x10] sm:$0xff] %vm582, %v749
      %796 = vst.msk [vmem:[%s792 + $0x18] sm:$0xff] %vm582, %v751
      %797 = vst.msk [vmem:[%s792 + $0x20] sm:$0xff] %vm582, %v753
      %798 = vst.msk [vmem:[%s792 + $0x28] sm:$0xff] %vm582, %v755
      %799 = vst.msk [vmem:[%s792 + $0x30] sm:$0xff] %vm582, %v757
      %800 = vst.msk [vmem:[%s792 + $0x38] sm:$0xff] %vm582, %v759
      %801 = vst.msk [vmem:[%s792 + $0x40] sm:$0xff] %vm582, %v761
      %802 = vst.msk [vmem:[%s792 + $0x48] sm:$0xff] %vm582, %v763
      %803 = vst.msk [vmem:[%s792 + $0x50] sm:$0xff] %vm582, %v765
      %804 = vst.msk [vmem:[%s792 + $0x58] sm:$0xff] %vm582, %v767
      %805 = vst.msk [vmem:[%s792 + $0x60] sm:$0xff] %vm582, %v769
      %806 = vst.msk [vmem:[%s792 + $0x68] sm:$0xff] %vm582, %v771
      %807 = vst.msk [vmem:[%s792 + $0x70] sm:$0xff] %vm582, %v773
      %808 = vst.msk [vmem:[%s792 + $0x78] sm:$0xff] %vm582, %v775
      %809 = vrot.lane.b32.xlu0 %v566, 112
      %v810 = vpop.permute.xlu0 %809
      %811 = vrot.lane.b32.xlu0 %v567, 112
      %v812 = vpop.permute.xlu0 %811
      %813 = vrot.lane.b32.xlu0 %v568, 112
      %v814 = vpop.permute.xlu0 %813
      %815 = vrot.lane.b32.xlu0 %v569, 112
      %v816 = vpop.permute.xlu0 %815
      %817 = vrot.lane.b32.xlu0 %v570, 112
      %v818 = vpop.permute.xlu0 %817
      %819 = vrot.lane.b32.xlu0 %v571, 112
      %v820 = vpop.permute.xlu0 %819
      %821 = vrot.lane.b32.xlu0 %v572, 112
      %v822 = vpop.permute.xlu0 %821
      %823 = vrot.lane.b32.xlu0 %v573, 112
      %v824 = vpop.permute.xlu0 %823
      %825 = vrot.lane.b32.xlu0 %v574, 112
      %v826 = vpop.permute.xlu0 %825
      %827 = vrot.lane.b32.xlu0 %v575, 112
      %v828 = vpop.permute.xlu0 %827
      %829 = vrot.lane.b32.xlu0 %v576, 112
      %v830 = vpop.permute.xlu0 %829
      %831 = vrot.lane.b32.xlu0 %v577, 112
      %v832 = vpop.permute.xlu0 %831
      %833 = vrot.lane.b32.xlu0 %v578, 112
      %v834 = vpop.permute.xlu0 %833
      %835 = vrot.lane.b32.xlu0 %v579, 112
      %v836 = vpop.permute.xlu0 %835
      %837 = vrot.lane.b32.xlu0 %v580, 112
      %v838 = vpop.permute.xlu0 %837
      %839 = vrot.lane.b32.xlu0 %v581, 112
      %v840 = vpop.permute.xlu0 %839
      %s857 = scalar_lea.vmem %s288, 256
      %858 = vst.msk [vmem:[%s857] sm:$0xff] %vm582, %v810
      %859 = vst.msk [vmem:[%s857 + $0x8] sm:$0xff] %vm582, %v812
      %860 = vst.msk [vmem:[%s857 + $0x10] sm:$0xff] %vm582, %v814
      %861 = vst.msk [vmem:[%s857 + $0x18] sm:$0xff] %vm582, %v816
      %862 = vst.msk [vmem:[%s857 + $0x20] sm:$0xff] %vm582, %v818
      %863 = vst.msk [vmem:[%s857 + $0x28] sm:$0xff] %vm582, %v820
      %864 = vst.msk [vmem:[%s857 + $0x30] sm:$0xff] %vm582, %v822
      %865 = vst.msk [vmem:[%s857 + $0x38] sm:$0xff] %vm582, %v824
      %866 = vst.msk [vmem:[%s857 + $0x40] sm:$0xff] %vm582, %v826
      %867 = vst.msk [vmem:[%s857 + $0x48] sm:$0xff] %vm582, %v828
      %868 = vst.msk [vmem:[%s857 + $0x50] sm:$0xff] %vm582, %v830
      %869 = vst.msk [vmem:[%s857 + $0x58] sm:$0xff] %vm582, %v832
      %870 = vst.msk [vmem:[%s857 + $0x60] sm:$0xff] %vm582, %v834
      %871 = vst.msk [vmem:[%s857 + $0x68] sm:$0xff] %vm582, %v836
      %872 = vst.msk [vmem:[%s857 + $0x70] sm:$0xff] %vm582, %v838
      %873 = vst.msk [vmem:[%s857 + $0x78] sm:$0xff] %vm582, %v840
      %874 = vrot.lane.b32.xlu0 %v566, 88
      %v875 = vpop.permute.xlu0 %874
      %876 = vrot.lane.b32.xlu0 %v567, 88
      %v877 = vpop.permute.xlu0 %876
      %878 = vrot.lane.b32.xlu0 %v568, 88
      %v879 = vpop.permute.xlu0 %878
      %880 = vrot.lane.b32.xlu0 %v569, 88
      %v881 = vpop.permute.xlu0 %880
      %882 = vrot.lane.b32.xlu0 %v570, 88
      %v883 = vpop.permute.xlu0 %882
      %884 = vrot.lane.b32.xlu0 %v571, 88
      %v885 = vpop.permute.xlu0 %884
      %886 = vrot.lane.b32.xlu0 %v572, 88
      %v887 = vpop.permute.xlu0 %886
      %888 = vrot.lane.b32.xlu0 %v573, 88
      %v889 = vpop.permute.xlu0 %888
      %890 = vrot.lane.b32.xlu0 %v574, 88
      %v891 = vpop.permute.xlu0 %890
      %892 = vrot.lane.b32.xlu0 %v575, 88
      %v893 = vpop.permute.xlu0 %892
      %894 = vrot.lane.b32.xlu0 %v576, 88
      %v895 = vpop.permute.xlu0 %894
      %896 = vrot.lane.b32.xlu0 %v577, 88
      %v897 = vpop.permute.xlu0 %896
      %898 = vrot.lane.b32.xlu0 %v578, 88
      %v899 = vpop.permute.xlu0 %898
      %900 = vrot.lane.b32.xlu0 %v579, 88
      %v901 = vpop.permute.xlu0 %900
      %902 = vrot.lane.b32.xlu0 %v580, 88
      %v903 = vpop.permute.xlu0 %902
      %904 = vrot.lane.b32.xlu0 %v581, 88
      %v905 = vpop.permute.xlu0 %904
      %s922 = scalar_lea.vmem %s298, 256
      %923 = vst.msk [vmem:[%s922] sm:$0xff] %vm582, %v875
      %924 = vst.msk [vmem:[%s922 + $0x8] sm:$0xff] %vm582, %v877
      %925 = vst.msk [vmem:[%s922 + $0x10] sm:$0xff] %vm582, %v879
      %926 = vst.msk [vmem:[%s922 + $0x18] sm:$0xff] %vm582, %v881
      %927 = vst.msk [vmem:[%s922 + $0x20] sm:$0xff] %vm582, %v883
      %928 = vst.msk [vmem:[%s922 + $0x28] sm:$0xff] %vm582, %v885
      %929 = vst.msk [vmem:[%s922 + $0x30] sm:$0xff] %vm582, %v887
      %930 = vst.msk [vmem:[%s922 + $0x38] sm:$0xff] %vm582, %v889
      %931 = vst.msk [vmem:[%s922 + $0x40] sm:$0xff] %vm582, %v891
      %932 = vst.msk [vmem:[%s922 + $0x48] sm:$0xff] %vm582, %v893
      %933 = vst.msk [vmem:[%s922 + $0x50] sm:$0xff] %vm582, %v895
      %934 = vst.msk [vmem:[%s922 + $0x58] sm:$0xff] %vm582, %v897
      %935 = vst.msk [vmem:[%s922 + $0x60] sm:$0xff] %vm582, %v899
      %936 = vst.msk [vmem:[%s922 + $0x68] sm:$0xff] %vm582, %v901
      %937 = vst.msk [vmem:[%s922 + $0x70] sm:$0xff] %vm582, %v903
      %938 = vst.msk [vmem:[%s922 + $0x78] sm:$0xff] %vm582, %v905
      %s939 = smul.u32 16, %s22
      %p940 = scmp.lt.s32.totalorder %s21, 1
      %s941 = scalar_select %p940, %s21, 1
      %p942 = scmp.lt.s32.totalorder %s939, 15
      %s943 = scalar_select %p942, %s939, 15
      %s944 = smul.addr %s941, 48
      %s945 = sadd.s32 %s943, %s944
      %s946 = smul.addr %s945, 8
      %s947 = scalar_lea.vmem %s4, %s946
      %s948 = smul.u32 16, %s22
      %p949 = scmp.lt.s32.totalorder %s21, 1
      %s950 = scalar_select %p949, %s21, 1
      %p951 = scmp.lt.s32.totalorder %s948, 15
      %s952 = scalar_select %p951, %s948, 15
      %s953 = smul.addr %s950, 48
      %s954 = sadd.s32 %s952, %s953
      %s955 = smul.addr %s954, 8
      %s956 = scalar_lea.vmem %s5, %s955
      // Predicated region
      $region37: #{yolo_head_forward.4} parent=35 // pred_check
        %p957 = pneg %p145
      $region38: #{yolo_head_forward.4} parent=35 // pred_check_branch
        %959 = sbr.rel (%p957) target = $region40
      $region39: #{yolo_head_forward.4} parent=35 // pred_region
        %s960 = smul.u32 16, %s22
      $region40: #{yolo_head_forward.4} parent=35 // pred_fallthru
        _
      // Predicated region
      $region41: #{yolo_head_forward.4} parent=35 // pred_check
        %p961 = pneg %p173
      $region42: #{yolo_head_forward.4} parent=35 // pred_check_branch
        %963 = sbr.rel (%p961) target = $region44
      $region43: #{yolo_head_forward.4} parent=35 // pred_region
        %s964 = smul.u32 16, %s22
      $region44: #{yolo_head_forward.4} parent=35 // pred_fallthru
        _
    $region36: #{yolo_head_forward.4} parent=5 // pred_fallthru
      _
    %p965 = scmp.le.s32.totalorder 2, %s12
    // Predicated region
    $region45: #{yolo_head_forward.4} parent=5 // pred_check
      %p966 = pneg %p965
    $region46: #{yolo_head_forward.4} parent=5 // pred_check_branch
      %968 = sbr.rel (%p966) target = $region48
    $region47: #{yolo_head_forward.4} parent=5 // pred_region
      %s969 = ssub.s32 %s12, 2
      // Predicated region
      $region49: #{yolo_head_forward.4} parent=47 // pred_check
        %p970 = pneg %p151
      $region50: #{yolo_head_forward.4} parent=47 // pred_check_branch
        %972 = sbr.rel (%p970) target = $region52
      $region51: #{yolo_head_forward.4} parent=47 // pred_region
        %s973 = smul.u32 16, %s24
        %p974 = scmp.lt.s32.totalorder %s23, 1
        %s975 = scalar_select %p974, %s23, 1
        %p976 = scmp.lt.s32.totalorder %s973, 15
        %s977 = scalar_select %p976, %s973, 15
        %s978 = smul.addr %s975, 48
        %s979 = sadd.s32 %s977, %s978
        %s980 = smul.addr %s979, 8
        %s981 = scalar_lea.vmem %s4, %s980
      $region52: #{yolo_head_forward.4} parent=47 // pred_fallthru
        _
      // Predicated region
      $region53: #{yolo_head_forward.4} parent=47 // pred_check
        %p982 = pneg %p179
      $region54: #{yolo_head_forward.4} parent=47 // pred_check_branch
        %984 = sbr.rel (%p982) target = $region56
      $region55: #{yolo_head_forward.4} parent=47 // pred_region
        %s985 = smul.u32 16, %s24
        %p986 = scmp.lt.s32.totalorder %s23, 1
        %s987 = scalar_select %p986, %s23, 1
        %p988 = scmp.lt.s32.totalorder %s985, 15
        %s989 = scalar_select %p988, %s985, 15
        %s990 = smul.addr %s987, 48
        %s991 = sadd.s32 %s989, %s990
        %s992 = smul.addr %s991, 8
        %s993 = scalar_lea.vmem %s5, %s992
      $region56: #{yolo_head_forward.4} parent=47 // pred_fallthru
        _
    $region48: #{yolo_head_forward.4} parent=5 // pred_fallthru
      _
  $region6: #{yolo_head_forward.4} parent=0 // loop_footer
    %s16 = sadd.s32 1, %s12
  $region7: #{yolo_head_forward.4} parent=0 // loop_footer_branch
    %11 = sbr.rel target = $region3
  $region8: #{yolo_head_forward.4} parent=0 // loop_exit
    _

// kernel: yolo_head_forward.3
$region0: #{yolo_head_forward.3}
  #allocation0 [shape = 'u32[]', space=smem, size = 0x4, offset = 0x4, fixed_abs, tag = 'smem constant byte address 0x4 - core index']
  #allocation1 [shape = 'u32[144,128]{1,0:T(1,128)}', space=vmem, size = 0x12000, scoped, tag = 'internal scratch']
  %s0 = inlined_call_operand.vmem [shape: f32[2,16,128], index: 0, kind: input, shape index: {}]
  %s1 = inlined_call_operand.vmem [shape: f32[24,16], index: 1, kind: input, shape index: {}]
  %s2 = inlined_call_operand.vmem [shape: f32[24,8], index: 2, kind: input, shape index: {}]
  %s3 = inlined_call_operand.vmem [shape: f32[2,128], index: 3, kind: input, shape index: {}]
  %s4 = inlined_call_operand.vmem [shape: f32[2,3,128,8], index: 4, kind: output, shape index: {0}]
  %s5 = inlined_call_operand.vmem [shape: f32[2,3,128,8], index: 5, kind: output, shape index: {1}]
  %6 = xla_tuple %s4, %s5
  %s7 = sld [smem:[#allocation0]]
  $region57: #{yolo_head_forward.3} parent=0
    _
  %s9 = ssub.s32 1, %s7
  %s10 = scalar_select 0, %s9, %s7
  loop: start=0, step=1, limit=4
  $region2: #{yolo_head_forward.3} parent=0 // loop_pre_header
    _
  $region3: #{yolo_head_forward.3} parent=0 // loop_header
    %s12 = sphi 0, %s16
    %p13 = scmp.ge.s32.totalorder %s12, 4
    %s19 = sphi 0, %s31
    %s20 = sphi 0, %s27
    %s21 = sphi 0, %s19
    %s22 = sphi 0, %s20
    %s23 = sphi 0, %s21
    %s24 = sphi 0, %s22
    %s36 = sphi 0, %s38
    %s39 = sphi 0, %s36
    %s40 = sphi 0, %s39
    %s56 = sphi 0, %s40
    %s60 = sphi 0, %s60
    %s62 = sphi 0, %s60
    %s63 = sphi 0, %s62
    %s77 = sphi 0, %s63
    %s81 = sphi 0, %s81
    %s83 = sphi 0, %s81
    %s84 = sphi 0, %s83
    %s98 = sphi 0, %s84
    %s104 = sphi 0, %s106
    %s107 = sphi 0, %s104
    %s108 = sphi 0, %s107
    %s124 = sphi 0, %s108
    %s132 = sphi 0, %s134
    %s135 = sphi 0, %s132
    %s136 = sphi 0, %s135
    %s152 = sphi 0, %s136
    %s160 = sphi 0, %s162
    %s163 = sphi 0, %s160
    %s164 = sphi 0, %s163
    %s180 = sphi 0, %s164
  $region4: #{yolo_head_forward.3} parent=0 // loop_header_branch
    %15 = sbr.rel (%p13) target = $region8
  $region5: #{yolo_head_forward.3} parent=0 // loop_body
    %s17 = ssub.s32 %s12, 1
    %s18 = ssub.s32 %s12, 2
    %s25 = sadd.s32 1, %s20
    %p26 = scmp.ge.s32.totalorder %s25, 1
    %s27 = scalar_select %p26, 0, %s25
    %s28 = sadd.s32 1, %s19
    %s29 = scalar_select %p26, %s28, %s19
    %p30 = scmp.ge.s32.totalorder %s29, 2
    %s31 = scalar_select %p30, 0, %s29
    %s32 = ssub.s32 %s19, %s31
    %s33 = ssub.s32 %s20, %s27
    %s34 = sor.u32 %s32, %s33
    %p35 = scmp.eq.s32.totalorder %s34, 0
    %s37 = sadd.s32 %s36, 1
    %s38 = scalar_select %p35, %s36, %s37
    %p41 = pneg %p35
    %p42 = scmp.eq.s32.totalorder %s12, 1
    %p43 = por %p41, %p42
    %p44 = scmp.ne.s32.totalorder %s36, %s39
    %p45 = scmp.eq.s32.totalorder %s12, 0
    %p46 = por %p44, %p45
    %p47 = scmp.ne.s32.totalorder %s36, %s39
    %p48 = scmp.eq.s32.totalorder %s17, 1
    %p49 = por %p47, %p48
    %p50 = scmp.ne.s32.totalorder %s39, %s40
    %p51 = scmp.eq.s32.totalorder %s17, 0
    %p52 = por %p50, %p51
    %p53 = scmp.ne.s32.totalorder %s39, %s40
    %p54 = scmp.eq.s32.totalorder %s18, 1
    %p55 = por %p53, %p54
    %p57 = scmp.ne.s32.totalorder %s40, %s56
    %p58 = scmp.eq.s32.totalorder %s18, 0
    %p59 = por %p57, %p58
    %s61 = sadd.s32 %s60, 1
    %p64 = scmp.eq.s32.totalorder %s12, 1
    %p65 = scmp.ne.s32.totalorder %s60, %s62
    %p66 = scmp.eq.s32.totalorder %s12, 0
    %p67 = por %p65, %p66
    %p68 = scmp.ne.s32.totalorder %s60, %s62
    %p69 = scmp.eq.s32.totalorder %s17, 1
    %p70 = por %p68, %p69
    %p71 = scmp.ne.s32.totalorder %s62, %s63
    %p72 = scmp.eq.s32.totalorder %s17, 0
    %p73 = por %p71, %p72
    %p74 = scmp.ne.s32.totalorder %s62, %s63
    %p75 = scmp.eq.s32.totalorder %s18, 1
    %p76 = por %p74, %p75
    %p78 = scmp.ne.s32.totalorder %s63, %s77
    %p79 = scmp.eq.s32.totalorder %s18, 0
    %p80 = por %p78, %p79
    %s82 = sadd.s32 %s81, 1
    %p85 = scmp.eq.s32.totalorder %s12, 1
    %p86 = scmp.ne.s32.totalorder %s81, %s83
    %p87 = scmp.eq.s32.totalorder %s12, 0
    %p88 = por %p86, %p87
    %p89 = scmp.ne.s32.totalorder %s81, %s83
    %p90 = scmp.eq.s32.totalorder %s17, 1
    %p91 = por %p89, %p90
    %p92 = scmp.ne.s32.totalorder %s83, %s84
    %p93 = scmp.eq.s32.totalorder %s17, 0
    %p94 = por %p92, %p93
    %p95 = scmp.ne.s32.totalorder %s83, %s84
    %p96 = scmp.eq.s32.totalorder %s18, 1
    %p97 = por %p95, %p96
    %p99 = scmp.ne.s32.totalorder %s84, %s98
    %p100 = scmp.eq.s32.totalorder %s18, 0
    %p101 = por %p99, %p100
    %s102 = ssub.s32 %s20, %s27
    %p103 = scmp.eq.s32.totalorder %s102, 0
    %s105 = sadd.s32 %s104, 1
    %s106 = scalar_select %p103, %s104, %s105
    %p109 = pneg %p103
    %p110 = scmp.eq.s32.totalorder %s12, 1
    %p111 = por %p109, %p110
    %p112 = scmp.ne.s32.totalorder %s104, %s107
    %p113 = scmp.eq.s32.totalorder %s12, 0
    %p114 = por %p112, %p113
    %p115 = scmp.ne.s32.totalorder %s104, %s107
    %p116 = scmp.eq.s32.totalorder %s17, 1
    %p117 = por %p115, %p116
    %p118 = scmp.ne.s32.totalorder %s107, %s108
    %p119 = scmp.eq.s32.totalorder %s17, 0
    %p120 = por %p118, %p119
    %p121 = scmp.ne.s32.totalorder %s107, %s108
    %p122 = scmp.eq.s32.totalorder %s18, 1
    %p123 = por %p121, %p122
    %p125 = scmp.ne.s32.totalorder %s108, %s124
    %p126 = scmp.eq.s32.totalorder %s18, 0
    %p127 = por %p125, %p126
    %s128 = ssub.s32 %s19, %s31
    %s129 = ssub.s32 %s20, %s27
    %s130 = sor.u32 %s128, %s129
    %p131 = scmp.eq.s32.totalorder %s130, 0
    %s133 = sadd.s32 %s132, 1
    %s134 = scalar_select %p131, %s132, %s133
    %p137 = pneg %p131
    %p138 = scmp.eq.s32.totalorder %s12, 1
    %p139 = por %p137, %p138
    %p140 = scmp.ne.s32.totalorder %s132, %s135
    %p141 = scmp.eq.s32.totalorder %s12, 0
    %p142 = por %p140, %p141
    %p143 = scmp.ne.s32.totalorder %s132, %s135
    %p144 = scmp.eq.s32.totalorder %s17, 1
    %p145 = por %p143, %p144
    %p146 = scmp.ne.s32.totalorder %s135, %s136
    %p147 = scmp.eq.s32.totalorder %s17, 0
    %p148 = por %p146, %p147
    %p149 = scmp.ne.s32.totalorder %s135, %s136
    %p150 = scmp.eq.s32.totalorder %s18, 1
    %p151 = por %p149, %p150
    %p153 = scmp.ne.s32.totalorder %s136, %s152
    %p154 = scmp.eq.s32.totalorder %s18, 0
    %p155 = por %p153, %p154
    %s156 = ssub.s32 %s19, %s31
    %s157 = ssub.s32 %s20, %s27
    %s158 = sor.u32 %s156, %s157
    %p159 = scmp.eq.s32.totalorder %s158, 0
    %s161 = sadd.s32 %s160, 1
    %s162 = scalar_select %p159, %s160, %s161
    %p165 = pneg %p159
    %p166 = scmp.eq.s32.totalorder %s12, 1
    %p167 = por %p165, %p166
    %p168 = scmp.ne.s32.totalorder %s160, %s163
    %p169 = scmp.eq.s32.totalorder %s12, 0
    %p170 = por %p168, %p169
    %p171 = scmp.ne.s32.totalorder %s160, %s163
    %p172 = scmp.eq.s32.totalorder %s17, 1
    %p173 = por %p171, %p172
    %p174 = scmp.ne.s32.totalorder %s163, %s164
    %p175 = scmp.eq.s32.totalorder %s17, 0
    %p176 = por %p174, %p175
    %p177 = scmp.ne.s32.totalorder %s163, %s164
    %p178 = scmp.eq.s32.totalorder %s18, 1
    %p179 = por %p177, %p178
    %p181 = scmp.ne.s32.totalorder %s164, %s180
    %p182 = scmp.eq.s32.totalorder %s18, 0
    %p183 = por %p181, %p182
    %p184 = scmp.le.s32.totalorder 1, %s12
    %p185 = scmp.lt.s32.totalorder %s12, 3
    %p186 = pnand %p184, %p185
    %p187 = pneg %p186
    // Predicated region
    $region9: #{yolo_head_forward.3} parent=5 // pred_check
      _
    $region10: #{yolo_head_forward.3} parent=5 // pred_check_branch
      %189 = sbr.rel (%p186) target = $region12
    $region11: #{yolo_head_forward.3} parent=5 // pred_region
      %s190 = ssub.s32 %s12, 1
      // Predicated region
      $region13: #{yolo_head_forward.3} parent=11 // pred_check
        %p191 = pneg %p73
      $region14: #{yolo_head_forward.3} parent=11 // pred_check_branch
        %193 = sbr.rel (%p191) target = $region16
      $region15: #{yolo_head_forward.3} parent=11 // pred_region
        _
      $region16: #{yolo_head_forward.3} parent=11 // pred_fallthru
        _
      // Predicated region
      $region17: #{yolo_head_forward.3} parent=11 // pred_check
        %p194 = pneg %p94
      $region18: #{yolo_head_forward.3} parent=11 // pred_check_branch
        %196 = sbr.rel (%p194) target = $region20
      $region19: #{yolo_head_forward.3} parent=11 // pred_region
        _
      $region20: #{yolo_head_forward.3} parent=11 // pred_fallthru
        _
      // Predicated region
      $region21: #{yolo_head_forward.3} parent=11 // pred_check
        %p197 = pneg %p120
      $region22: #{yolo_head_forward.3} parent=11 // pred_check_branch
        %199 = sbr.rel (%p197) target = $region24
      $region23: #{yolo_head_forward.3} parent=11 // pred_region
        %p200 = scmp.lt.s32.totalorder %s22, 0
        %s201 = scalar_select %p200, %s22, 0
        %s202 = smul.addr %s201, 2
        %s203 = scalar_lea.vmem %s3, %s202
      $region24: #{yolo_head_forward.3} parent=11 // pred_fallthru
        _
    $region12: #{yolo_head_forward.3} parent=5 // pred_fallthru
      _
    %p204 = scmp.lt.s32.totalorder %s12, 2
    // Predicated region
    $region25: #{yolo_head_forward.3} parent=5 // pred_check
      %p205 = pneg %p204
    $region26: #{yolo_head_forward.3} parent=5 // pred_check_branch
      %207 = sbr.rel (%p205) target = $region28
    $region27: #{yolo_head_forward.3} parent=5 // pred_region
      // Predicated region
      $region29: #{yolo_head_forward.3} parent=27 // pred_check
        %p208 = pneg %p46
      $region30: #{yolo_head_forward.3} parent=27 // pred_check_branch
        %210 = sbr.rel (%p208) target = $region32
      $region31: #{yolo_head_forward.3} parent=27 // pred_region
        %p211 = scmp.lt.s32.totalorder %s19, 1
        %s212 = scalar_select %p211, %s19, 1
        %p213 = scmp.lt.s32.totalorder %s20, 0
        %s214 = scalar_select %p213, %s20, 0
        %s215 = smul.addr %s212, 2
        %s216 = sadd.s32 %s214, %s215
        %s217 = smul.addr %s216, 8
        %s218 = scalar_lea.vmem %s0, %s217
      $region32: #{yolo_head_forward.3} parent=27 // pred_fallthru
        _
    $region28: #{yolo_head_forward.3} parent=5 // pred_fallthru
      _
    %p219 = scmp.le.s32.totalorder 1, %s12
    %p220 = scmp.lt.s32.totalorder %s12, 3
    %p221 = pnand %p219, %p220
    %p222 = pneg %p221
    // Predicated region
    $region33: #{yolo_head_forward.3} parent=5 // pred_check
      _
    $region34: #{yolo_head_forward.3} parent=5 // pred_check_branch
      %224 = sbr.rel (%p221) target = $region36
    $region35: #{yolo_head_forward.3} parent=5 // pred_region
      %s225 = ssub.s32 %s12, 1
      %p226 = scmp.lt.s32.totalorder %s21, 1
      %s227 = scalar_select %p226, %s21, 1
      %p228 = scmp.lt.s32.totalorder %s22, 0
      %s229 = scalar_select %p228, %s22, 0
      %s230 = smul.addr %s227, 2
      %s231 = sadd.s32 %s229, %s230
      %s232 = smul.addr %s231, 8
      %s233 = scalar_lea.vmem %s0, %s232
      %p234 = pneg %p52
      %p235 = pneg %p49
      %p236 = pneg %p73
      %p237 = pneg %p70
      %p238 = pneg %p94
      %p239 = pneg %p91
      %p240 = scmp.lt.s32.totalorder %s22, 0
      %s241 = scalar_select %p240, %s22, 0
      %s242 = smul.addr %s241, 2
      %s243 = scalar_lea.vmem %s3, %s242
      %p244 = pneg %p120
      %p245 = pneg %p117
      %p246 = pneg %p148
      %p247 = pneg %p145
      %s248 = smul.u32 16, %s22
      %p249 = scmp.lt.s32.totalorder %s21, 1
      %s250 = scalar_select %p249, %s21, 1
      %p251 = scmp.lt.s32.totalorder %s248, 15
      %s252 = scalar_select %p251, %s248, 15
      %s253 = smul.addr %s250, 48
      %s254 = sadd.s32 %s252, %s253
      %s255 = smul.addr %s254, 8
      %s256 = scalar_lea.vmem %s4, %s255
      %p257 = pneg %p176
      %p258 = pneg %p173
      %s259 = smul.u32 16, %s22
      %p260 = scmp.lt.s32.totalorder %s21, 1
      %s261 = scalar_select %p260, %s21, 1
      %p262 = scmp.lt.s32.totalorder %s259, 15
      %s263 = scalar_select %p262, %s259, 15
      %s264 = smul.addr %s261, 48
      %s265 = sadd.s32 %s263, %s264
      %s266 = smul.addr %s265, 8
      %s267 = scalar_lea.vmem %s5, %s266
      %p268 = scmp.lt.s32.totalorder %s21, 1
      %s269 = scalar_select %p268, %s21, 1
      %p270 = scmp.lt.s32.totalorder %s22, 0
      %s271 = scalar_select %p270, %s22, 0
      %s272 = smul.addr %s269, 2
      %s273 = sadd.s32 %s271, %s272
      %s274 = smul.addr %s273, 8
      %s275 = scalar_lea.vmem %s0, %s274
      %p276 = scmp.lt.s32.totalorder %s22, 0
      %s277 = scalar_select %p276, %s22, 0
      %s278 = smul.addr %s277, 2
      %s279 = scalar_lea.vmem %s3, %s278
      %s280 = smul.u32 16, %s22
      %p281 = scmp.lt.s32.totalorder %s21, 1
      %s282 = scalar_select %p281, %s21, 1
      %p283 = scmp.lt.s32.totalorder %s280, 15
      %s284 = scalar_select %p283, %s280, 15
      %s285 = smul.addr %s282, 48
      %s286 = sadd.s32 %s284, %s285
      %s287 = smul.addr %s286, 8
      %s288 = scalar_lea.vmem %s4, %s287
      %s289 = smul.u32 16, %s22
      %s290 = smul.u32 16, %s22
      %p291 = scmp.lt.s32.totalorder %s21, 1
      %s292 = scalar_select %p291, %s21, 1
      %p293 = scmp.lt.s32.totalorder %s290, 15
      %s294 = scalar_select %p293, %s290, 15
      %s295 = smul.addr %s292, 48
      %s296 = sadd.s32 %s294, %s295
      %s297 = smul.addr %s296, 8
      %s298 = scalar_lea.vmem %s5, %s297
      %s299 = smul.u32 16, %s22
      %v300 = vld [vmem:[%s275] sm:$0xff]
      %v301 = vld [vmem:[%s275 + $0x8] sm:$0xff]
      %v302 = vld [vmem:[%s1] sm:$0xff]
      %v303 = vld [vmem:[%s1 + $0x8] sm:$0xff]
      %v304 = vld [vmem:[%s1 + $0x10] sm:$0xff]
      %v305 = vld [vmem:[%s2] sm:$0xff]
      %v306 = vld [vmem:[%s2 + $0x8] sm:$0xff]
      %v307 = vld [vmem:[%s2 + $0x10] sm:$0xff]
      %v308 = vld [vmem:[%s279] sm:$0x3]
      %310 = vset.pattern.permute.xlu0 0
      %311 = vperm.xlu0 %310, %v305
      %v312 = vpop.permute.xlu0 %311
      %315 = vset.pattern.permute.xlu0 0
      %316 = vperm.xlu0 %315, %v306
      %v317 = vpop.permute.xlu0 %316
      %320 = vset.pattern.permute.xlu0 0
      %321 = vperm.xlu0 %320, %v307
      %v322 = vpop.permute.xlu0 %321
      %vm324 = vcmask 130048
      %v326 = vsel %vm324, %v302, 0
      %v329 = vsel %vm324, %v303, 0
      %v332 = vsel %vm324, %v304, 0
      %334 = vmatprep.subr.mxu0 0.0
      %335 = vmatpush1.msra.mxu0 0.0
      %336 = vmatprep.subr.mxu0 0.0
      %337 = vmatpush1.msra.mxu0 0.0
      %338 = vmatprep.subr.mxu0 0.0
      %339 = vmatpush1.msra.mxu0 0.0
      %340 = vmatprep.subr.mxu0 0.0
      %341 = vmatpush1.msra.mxu0 0.0
      %342 = vmatprep.subr.mxu0 0.0
      %343 = vmatpush1.msra.mxu0 0.0
      %344 = vmatprep.subr.mxu0 0.0
      %345 = vmatpush1.msra.mxu0 0.0
      %346 = vmatprep.subr.mxu0 0.0
      %347 = vmatpush1.msra.mxu0 0.0
      %348 = vmatprep.subr.mxu0 0.0
      %349 = vmatpush1.msra.mxu0 0.0
      %350 = vmatprep.subr.mxu0 0.0
      %351 = vmatpush1.msra.mxu0 0.0
      %352 = vmatprep.subr.mxu0 0.0
      %353 = vmatpush1.msra.mxu0 0.0
      %354 = vmatprep.subr.mxu0 0.0
      %355 = vmatpush1.msra.mxu0 0.0
      %356 = vmatprep.subr.mxu0 0.0
      %357 = vmatpush1.msra.mxu0 0.0
      %358 = vmatprep.subr.mxu0 0.0
      %359 = vmatpush1.msra.mxu0 0.0
      %360 = vmatprep.subr.mxu0 0.0
      %361 = vmatpush1.msra.mxu0 0.0
      %362 = vmatprep.subr.mxu0 0.0
      %363 = vmatpush1.msra.mxu0 %v301
      %364 = vmatprep.subr.mxu0 0.0
      %365 = vmatpush1.msra.mxu0 %v300
      %366 = vmatprep.subr.mxu0 0.0
      %367 = vmatpush2.msra.mxu0 0.0
      %368 = vmatprep.subr.mxu0 0.0
      %369 = vmatpush2.msra.mxu0 0.0
      %370 = vmatprep.subr.mxu0 0.0
      %371 = vmatpush2.msra.mxu0 0.0
      %372 = vmatprep.subr.mxu0 0.0
      %373 = vmatpush2.msra.mxu0 0.0
      %374 = vmatprep.subr.mxu0 0.0
      %375 = vmatpush2.msra.mxu0 0.0
      %376 = vmatprep.subr.mxu0 0.0
      %377 = vmatpush2.msra.mxu0 0.0
      %378 = vmatprep.subr.mxu0 0.0
      %379 = vmatpush2.msra.mxu0 0.0
      %380 = vmatprep.subr.mxu0 0.0
      %381 = vmatpush2.msra.mxu0 0.0
      %382 = vmatprep.subr.mxu0 0.0
      %383 = vmatpush2.msra.mxu0 0.0
      %384 = vmatprep.subr.mxu0 0.0
      %385 = vmatpush2.msra.mxu0 0.0
      %386 = vmatprep.subr.mxu0 0.0
      %387 = vmatpush2.msra.mxu0 0.0
      %388 = vmatprep.subr.mxu0 0.0
      %389 = vmatpush2.msra.mxu0 0.0
      %390 = vmatprep.subr.mxu0 0.0
      %391 = vmatpush2.msra.mxu0 0.0
      %392 = vmatprep.subr.mxu0 0.0
      %393 = vmatpush2.msra.mxu0 0.0
      %394 = vmatprep.subr.mxu0 0.0
      %395 = vmatpush2.msra.mxu0 0.0
      %396 = vmatprep.subr.mxu0 0.0
      %397 = vmatpush2.msra.mxu0 0.0
      %398 = vmatprep.mubr.f32.mxu0 0.0
      %399 = vmatmul.mubr.f32.gmra.mxu0 %v326
      %v400 = vpop.f32.mrf.mxu0
      %v401 = vadd.f32 %v312, %v400
      %v402 = vpop.f32.mrf.mxu0
      %403 = vmatprep.mubr.f32.mxu0 0.0
      %404 = vmatmul.mubr.f32.gmra.mxu0 %v329
      %v405 = vpop.f32.mrf.mxu0
      %v406 = vadd.f32 %v317, %v405
      %v407 = vpop.f32.mrf.mxu0
      %408 = vmatprep.mubr.f32.mxu0 0.0
      %409 = vmatmul.mubr.f32.gmra.mxu0 %v332
      %v410 = vpop.f32.mrf.mxu0
      %v411 = vadd.f32 %v322, %v410
      %v412 = vpop.f32.mrf.mxu0
      %413 = vdwg.mxu0
      %v414 = vxor.u32 %v401, 2147483648
      %v415 = vxor.u32 %v406, 2147483648
      %v416 = vxor.u32 %v411, 2147483648
      %v417 = vmul.f32 %v414, 1.442695
      %v418 = vpow.pop %v417
      %v419 = vmul.f32 %v415, 1.442695
      %v420 = vpow.pop %v419
      %v421 = vmul.f32 %v416, 1.442695
      %v422 = vpow.pop %v421
      %v423 = vadd.f32 %v418, 1.0
      %v424 = vadd.f32 %v420, 1.0
      %v425 = vadd.f32 %v422, 1.0
      %v426 = vrcp.pop %v423
      %v427 = vmul.f32 1.0, %v426
      %v428 = vrcp.pop %v424
      %v429 = vmul.f32 1.0, %v428
      %v430 = vrcp.pop %v425
      %v431 = vmul.f32 1.0, %v430
      %v432 = vadd.f32 %v427, %v427
      %v433 = vadd.f32 %v429, %v429
      %v434 = vadd.f32 %v431, %v431
      %435 = vset.pattern.permute.xlu0 1
      %436 = vperm.xlu0 %435, %v305
      %v437 = vpop.permute.xlu0 %436
      %439 = vset.pattern.permute.xlu0 1
      %440 = vperm.xlu0 %439, %v306
      %v441 = vpop.permute.xlu0 %440
      %443 = vset.pattern.permute.xlu0 1
      %444 = vperm.xlu0 %443, %v307
      %v445 = vpop.permute.xlu0 %444
      %v447 = vmul.f32 %v432, %v437
      %v448 = vmul.f32 %v433, %v441
      %v449 = vmul.f32 %v434, %v445
      %v450 = vlaneseq
      %v451 = vshrl.u32 %v450, 7
      %v452 = vsub.s32 0, %v451
      %v453 = vrot.slane %v308, %v452
      %454 = vset.pattern.permute.xlu0 3
      %455 = vperm.xlu0 %454, %v305
      %v456 = vpop.permute.xlu0 %455
      %458 = vset.pattern.permute.xlu0 3
      %459 = vperm.xlu0 %458, %v306
      %v460 = vpop.permute.xlu0 %459
      %462 = vset.pattern.permute.xlu0 3
      %463 = vperm.xlu0 %462, %v307
      %v464 = vpop.permute.xlu0 %463
      %v466 = vmul.f32 %v453, %v456
      %v467 = vmul.f32 %v453, %v460
      %v468 = vmul.f32 %v453, %v464
      %v469 = vlaneseq
      %v470 = vshrl.u32 %v469, 7
      %v471 = vsub.s32 1, %v470
      %v472 = vrot.slane %v308, %v471
      %473 = vset.pattern.permute.xlu0 4
      %474 = vperm.xlu0 %473, %v305
      %v475 = vpop.permute.xlu0 %474
      %477 = vset.pattern.permute.xlu0 4
      %478 = vperm.xlu0 %477, %v306
      %v479 = vpop.permute.xlu0 %478
      %481 = vset.pattern.permute.xlu0 4
      %482 = vperm.xlu0 %481, %v307
      %v483 = vpop.permute.xlu0 %482
      %v485 = vmul.f32 %v472, %v475
      %v486 = vmul.f32 %v472, %v479
      %v487 = vmul.f32 %v472, %v483
      %v488 = vadd.f32 %v466, %v485
      %v489 = vadd.f32 %v467, %v486
      %v490 = vadd.f32 %v468, %v487
      %491 = vset.pattern.permute.xlu0 2
      %492 = vperm.xlu0 %491, %v305
      %v493 = vpop.permute.xlu0 %492
      %495 = vset.pattern.permute.xlu0 2
      %496 = vperm.xlu0 %495, %v306
      %v497 = vpop.permute.xlu0 %496
      %499 = vset.pattern.permute.xlu0 2
      %500 = vperm.xlu0 %499, %v307
      %v501 = vpop.permute.xlu0 %500
      %v503 = vadd.f32 %v488, %v493
      %v504 = vadd.f32 %v489, %v497
      %v505 = vadd.f32 %v490, %v501
      %v506 = vadd.f32 %v447, %v503
      %v507 = vadd.f32 %v448, %v504
      %v508 = vadd.f32 %v449, %v505
      %v509 = vmul.f32 %v432, %v432
      %v510 = vmul.f32 %v433, %v433
      %v511 = vmul.f32 %v434, %v434
      %512 = vset.pattern.permute.xlu0 5
      %513 = vperm.xlu0 %512, %v305
      %v514 = vpop.permute.xlu0 %513
      %516 = vset.pattern.permute.xlu0 5
      %517 = vperm.xlu0 %516, %v306
      %v518 = vpop.permute.xlu0 %517
      %520 = vset.pattern.permute.xlu0 5
      %521 = vperm.xlu0 %520, %v307
      %v522 = vpop.permute.xlu0 %521
      %v524 = vmul.f32 %v509, %v514
      %v525 = vmul.f32 %v510, %v518
      %v526 = vmul.f32 %v511, %v522
      %vm527 = vcmp.gt.f32.partialorder %v305, 0.0
      %vm528 = vcmp.gt.f32.partialorder %v306, 0.0
      %vm529 = vcmp.gt.f32.partialorder %v307, 0.0
      %v530 = vsel %vm527, 1, 0
      %v531 = vsel %vm528, 1, 0
      %v532 = vsel %vm529, 1, 0
      %533 = vset.pattern.permute.xlu0 6
      %534 = vperm.xlu0 %533, %v530
      %v535 = vpop.permute.xlu0 %534
      %536 = vset.pattern.permute.xlu0 6
      %537 = vperm.xlu0 %536, %v531
      %v538 = vpop.permute.xlu0 %537
      %539 = vset.pattern.permute.xlu0 6
      %540 = vperm.xlu0 %539, %v532
      %v541 = vpop.permute.xlu0 %540
      %vm542 = vcmp.eq.s32.totalorder %v535, 1
      %vm543 = vcmp.eq.s32.totalorder %v538, 1
      %vm544 = vcmp.eq.s32.totalorder %v541, 1
      %v545 = vsel %vm542, %v524, %v506
      %v546 = vsel %vm543, %v525, %v507
      %v547 = vsel %vm544, %v526, %v508
      %548 = vxpose.xlu0.b32.start [1/16] %v545, 128
      %549 = vxpose.xlu0.b32.cont [2/16] %v546, 128
      %550 = vxpose.xlu0.b32.cont [3/16] %v547, 128
      %551 = vxpose.xlu0.b32.cont [4/16] %v401, 128
      %552 = vxpose.xlu0.b32.cont [5/16] %v406, 128
      %553 = vxpose.xlu0.b32.cont [6/16] %v411, 128
      %554 = vxpose.xlu0.b32.cont [7/16] 0.0, 128
      %555 = vxpose.xlu0.b32.cont [8/16] 0.0, 128
      %556 = vxpose.xlu0.b32.cont [9/16] 0.0, 128
      %557 = vxpose.xlu0.b32.cont [10/16] 0.0, 128
      %558 = vxpose.xlu0.b32.cont [11/16] 0.0, 128
      %559 = vxpose.xlu0.b32.cont [12/16] 0.0, 128
      %560 = vxpose.xlu0.b32.cont [13/16] 0.0, 128
      %561 = vxpose.xlu0.b32.cont [14/16] 0.0, 128
      %562 = vxpose.xlu0.b32.cont [15/16] 0.0, 128
      %563 = vxpose.xlu0.b32.end [16/16] 0.0, 128
      %v564 = vpop.trf.xlu0
      %v565 = vpop.trf.xlu0
      %v566 = vpop.trf.xlu0
      %v567 = vpop.trf.xlu0
      %v568 = vpop.trf.xlu0
      %v569 = vpop.trf.xlu0
      %v570 = vpop.trf.xlu0
      %v571 = vpop.trf.xlu0
      %v572 = vpop.trf.xlu0
      %v573 = vpop.trf.xlu0
      %v574 = vpop.trf.xlu0
      %v575 = vpop.trf.xlu0
      %v576 = vpop.trf.xlu0
      %v577 = vpop.trf.xlu0
      %v578 = vpop.trf.xlu0
      %v579 = vpop.trf.xlu0
      %vm580 = vcmask 64512
      %581 = vst.msk [vmem:[%s288] sm:$0xff] %vm580, %v564
      %582 = vst.msk [vmem:[%s288 + $0x8] sm:$0xff] %vm580, %v565
      %583 = vst.msk [vmem:[%s288 + $0x10] sm:$0xff] %vm580, %v566
      %584 = vst.msk [vmem:[%s288 + $0x18] sm:$0xff] %vm580, %v567
      %585 = vst.msk [vmem:[%s288 + $0x20] sm:$0xff] %vm580, %v568
      %586 = vst.msk [vmem:[%s288 + $0x28] sm:$0xff] %vm580, %v569
      %587 = vst.msk [vmem:[%s288 + $0x30] sm:$0xff] %vm580, %v570
      %588 = vst.msk [vmem:[%s288 + $0x38] sm:$0xff] %vm580, %v571
      %589 = vst.msk [vmem:[%s288 + $0x40] sm:$0xff] %vm580, %v572
      %590 = vst.msk [vmem:[%s288 + $0x48] sm:$0xff] %vm580, %v573
      %591 = vst.msk [vmem:[%s288 + $0x50] sm:$0xff] %vm580, %v574
      %592 = vst.msk [vmem:[%s288 + $0x58] sm:$0xff] %vm580, %v575
      %593 = vst.msk [vmem:[%s288 + $0x60] sm:$0xff] %vm580, %v576
      %594 = vst.msk [vmem:[%s288 + $0x68] sm:$0xff] %vm580, %v577
      %595 = vst.msk [vmem:[%s288 + $0x70] sm:$0xff] %vm580, %v578
      %596 = vst.msk [vmem:[%s288 + $0x78] sm:$0xff] %vm580, %v579
      %613 = vrot.lane.b32.xlu0 %v564, 104
      %v614 = vpop.permute.xlu0 %613
      %615 = vrot.lane.b32.xlu0 %v565, 104
      %v616 = vpop.permute.xlu0 %615
      %617 = vrot.lane.b32.xlu0 %v566, 104
      %v618 = vpop.permute.xlu0 %617
      %619 = vrot.lane.b32.xlu0 %v567, 104
      %v620 = vpop.permute.xlu0 %619
      %621 = vrot.lane.b32.xlu0 %v568, 104
      %v622 = vpop.permute.xlu0 %621
      %623 = vrot.lane.b32.xlu0 %v569, 104
      %v624 = vpop.permute.xlu0 %623
      %625 = vrot.lane.b32.xlu0 %v570, 104
      %v626 = vpop.permute.xlu0 %625
      %627 = vrot.lane.b32.xlu0 %v571, 104
      %v628 = vpop.permute.xlu0 %627
      %629 = vrot.lane.b32.xlu0 %v572, 104
      %v630 = vpop.permute.xlu0 %629
      %631 = vrot.lane.b32.xlu0 %v573, 104
      %v632 = vpop.permute.xlu0 %631
      %633 = vrot.lane.b32.xlu0 %v574, 104
      %v634 = vpop.permute.xlu0 %633
      %635 = vrot.lane.b32.xlu0 %v575, 104
      %v636 = vpop.permute.xlu0 %635
      %637 = vrot.lane.b32.xlu0 %v576, 104
      %v638 = vpop.permute.xlu0 %637
      %639 = vrot.lane.b32.xlu0 %v577, 104
      %v640 = vpop.permute.xlu0 %639
      %641 = vrot.lane.b32.xlu0 %v578, 104
      %v642 = vpop.permute.xlu0 %641
      %643 = vrot.lane.b32.xlu0 %v579, 104
      %v644 = vpop.permute.xlu0 %643
      %661 = vst.msk [vmem:[%s298] sm:$0xff] %vm580, %v614
      %662 = vst.msk [vmem:[%s298 + $0x8] sm:$0xff] %vm580, %v616
      %663 = vst.msk [vmem:[%s298 + $0x10] sm:$0xff] %vm580, %v618
      %664 = vst.msk [vmem:[%s298 + $0x18] sm:$0xff] %vm580, %v620
      %665 = vst.msk [vmem:[%s298 + $0x20] sm:$0xff] %vm580, %v622
      %666 = vst.msk [vmem:[%s298 + $0x28] sm:$0xff] %vm580, %v624
      %667 = vst.msk [vmem:[%s298 + $0x30] sm:$0xff] %vm580, %v626
      %668 = vst.msk [vmem:[%s298 + $0x38] sm:$0xff] %vm580, %v628
      %669 = vst.msk [vmem:[%s298 + $0x40] sm:$0xff] %vm580, %v630
      %670 = vst.msk [vmem:[%s298 + $0x48] sm:$0xff] %vm580, %v632
      %671 = vst.msk [vmem:[%s298 + $0x50] sm:$0xff] %vm580, %v634
      %672 = vst.msk [vmem:[%s298 + $0x58] sm:$0xff] %vm580, %v636
      %673 = vst.msk [vmem:[%s298 + $0x60] sm:$0xff] %vm580, %v638
      %674 = vst.msk [vmem:[%s298 + $0x68] sm:$0xff] %vm580, %v640
      %675 = vst.msk [vmem:[%s298 + $0x70] sm:$0xff] %vm580, %v642
      %676 = vst.msk [vmem:[%s298 + $0x78] sm:$0xff] %vm580, %v644
      %677 = vrot.lane.b32.xlu0 %v564, 120
      %v678 = vpop.permute.xlu0 %677
      %679 = vrot.lane.b32.xlu0 %v565, 120
      %v680 = vpop.permute.xlu0 %679
      %681 = vrot.lane.b32.xlu0 %v566, 120
      %v682 = vpop.permute.xlu0 %681
      %683 = vrot.lane.b32.xlu0 %v567, 120
      %v684 = vpop.permute.xlu0 %683
      %685 = vrot.lane.b32.xlu0 %v568, 120
      %v686 = vpop.permute.xlu0 %685
      %687 = vrot.lane.b32.xlu0 %v569, 120
      %v688 = vpop.permute.xlu0 %687
      %689 = vrot.lane.b32.xlu0 %v570, 120
      %v690 = vpop.permute.xlu0 %689
      %691 = vrot.lane.b32.xlu0 %v571, 120
      %v692 = vpop.permute.xlu0 %691
      %693 = vrot.lane.b32.xlu0 %v572, 120
      %v694 = vpop.permute.xlu0 %693
      %695 = vrot.lane.b32.xlu0 %v573, 120
      %v696 = vpop.permute.xlu0 %695
      %697 = vrot.lane.b32.xlu0 %v574, 120
      %v698 = vpop.permute.xlu0 %697
      %699 = vrot.lane.b32.xlu0 %v575, 120
      %v700 = vpop.permute.xlu0 %699
      %701 = vrot.lane.b32.xlu0 %v576, 120
      %v702 = vpop.permute.xlu0 %701
      %703 = vrot.lane.b32.xlu0 %v577, 120
      %v704 = vpop.permute.xlu0 %703
      %705 = vrot.lane.b32.xlu0 %v578, 120
      %v706 = vpop.permute.xlu0 %705
      %707 = vrot.lane.b32.xlu0 %v579, 120
      %v708 = vpop.permute.xlu0 %707
      %s725 = scalar_lea.vmem %s288, 128
      %726 = vst.msk [vmem:[%s725] sm:$0xff] %vm580, %v678
      %727 = vst.msk [vmem:[%s725 + $0x8] sm:$0xff] %vm580, %v680
      %728 = vst.msk [vmem:[%s725 + $0x10] sm:$0xff] %vm580, %v682
      %729 = vst.msk [vmem:[%s725 + $0x18] sm:$0xff] %vm580, %v684
      %730 = vst.msk [vmem:[%s725 + $0x20] sm:$0xff] %vm580, %v686
      %731 = vst.msk [vmem:[%s725 + $0x28] sm:$0xff] %vm580, %v688
      %732 = vst.msk [vmem:[%s725 + $0x30] sm:$0xff] %vm580, %v690
      %733 = vst.msk [vmem:[%s725 + $0x38] sm:$0xff] %vm580, %v692
      %734 = vst.msk [vmem:[%s725 + $0x40] sm:$0xff] %vm580, %v694
      %735 = vst.msk [vmem:[%s725 + $0x48] sm:$0xff] %vm580, %v696
      %736 = vst.msk [vmem:[%s725 + $0x50] sm:$0xff] %vm580, %v698
      %737 = vst.msk [vmem:[%s725 + $0x58] sm:$0xff] %vm580, %v700
      %738 = vst.msk [vmem:[%s725 + $0x60] sm:$0xff] %vm580, %v702
      %739 = vst.msk [vmem:[%s725 + $0x68] sm:$0xff] %vm580, %v704
      %740 = vst.msk [vmem:[%s725 + $0x70] sm:$0xff] %vm580, %v706
      %741 = vst.msk [vmem:[%s725 + $0x78] sm:$0xff] %vm580, %v708
      %742 = vrot.lane.b32.xlu0 %v564, 96
      %v743 = vpop.permute.xlu0 %742
      %744 = vrot.lane.b32.xlu0 %v565, 96
      %v745 = vpop.permute.xlu0 %744
      %746 = vrot.lane.b32.xlu0 %v566, 96
      %v747 = vpop.permute.xlu0 %746
      %748 = vrot.lane.b32.xlu0 %v567, 96
      %v749 = vpop.permute.xlu0 %748
      %750 = vrot.lane.b32.xlu0 %v568, 96
      %v751 = vpop.permute.xlu0 %750
      %752 = vrot.lane.b32.xlu0 %v569, 96
      %v753 = vpop.permute.xlu0 %752
      %754 = vrot.lane.b32.xlu0 %v570, 96
      %v755 = vpop.permute.xlu0 %754
      %756 = vrot.lane.b32.xlu0 %v571, 96
      %v757 = vpop.permute.xlu0 %756
      %758 = vrot.lane.b32.xlu0 %v572, 96
      %v759 = vpop.permute.xlu0 %758
      %760 = vrot.lane.b32.xlu0 %v573, 96
      %v761 = vpop.permute.xlu0 %760
      %762 = vrot.lane.b32.xlu0 %v574, 96
      %v763 = vpop.permute.xlu0 %762
      %764 = vrot.lane.b32.xlu0 %v575, 96
      %v765 = vpop.permute.xlu0 %764
      %766 = vrot.lane.b32.xlu0 %v576, 96
      %v767 = vpop.permute.xlu0 %766
      %768 = vrot.lane.b32.xlu0 %v577, 96
      %v769 = vpop.permute.xlu0 %768
      %770 = vrot.lane.b32.xlu0 %v578, 96
      %v771 = vpop.permute.xlu0 %770
      %772 = vrot.lane.b32.xlu0 %v579, 96
      %v773 = vpop.permute.xlu0 %772
      %s790 = scalar_lea.vmem %s298, 128
      %791 = vst.msk [vmem:[%s790] sm:$0xff] %vm580, %v743
      %792 = vst.msk [vmem:[%s790 + $0x8] sm:$0xff] %vm580, %v745
      %793 = vst.msk [vmem:[%s790 + $0x10] sm:$0xff] %vm580, %v747
      %794 = vst.msk [vmem:[%s790 + $0x18] sm:$0xff] %vm580, %v749
      %795 = vst.msk [vmem:[%s790 + $0x20] sm:$0xff] %vm580, %v751
      %796 = vst.msk [vmem:[%s790 + $0x28] sm:$0xff] %vm580, %v753
      %797 = vst.msk [vmem:[%s790 + $0x30] sm:$0xff] %vm580, %v755
      %798 = vst.msk [vmem:[%s790 + $0x38] sm:$0xff] %vm580, %v757
      %799 = vst.msk [vmem:[%s790 + $0x40] sm:$0xff] %vm580, %v759
      %800 = vst.msk [vmem:[%s790 + $0x48] sm:$0xff] %vm580, %v761
      %801 = vst.msk [vmem:[%s790 + $0x50] sm:$0xff] %vm580, %v763
      %802 = vst.msk [vmem:[%s790 + $0x58] sm:$0xff] %vm580, %v765
      %803 = vst.msk [vmem:[%s790 + $0x60] sm:$0xff] %vm580, %v767
      %804 = vst.msk [vmem:[%s790 + $0x68] sm:$0xff] %vm580, %v769
      %805 = vst.msk [vmem:[%s790 + $0x70] sm:$0xff] %vm580, %v771
      %806 = vst.msk [vmem:[%s790 + $0x78] sm:$0xff] %vm580, %v773
      %807 = vrot.lane.b32.xlu0 %v564, 112
      %v808 = vpop.permute.xlu0 %807
      %809 = vrot.lane.b32.xlu0 %v565, 112
      %v810 = vpop.permute.xlu0 %809
      %811 = vrot.lane.b32.xlu0 %v566, 112
      %v812 = vpop.permute.xlu0 %811
      %813 = vrot.lane.b32.xlu0 %v567, 112
      %v814 = vpop.permute.xlu0 %813
      %815 = vrot.lane.b32.xlu0 %v568, 112
      %v816 = vpop.permute.xlu0 %815
      %817 = vrot.lane.b32.xlu0 %v569, 112
      %v818 = vpop.permute.xlu0 %817
      %819 = vrot.lane.b32.xlu0 %v570, 112
      %v820 = vpop.permute.xlu0 %819
      %821 = vrot.lane.b32.xlu0 %v571, 112
      %v822 = vpop.permute.xlu0 %821
      %823 = vrot.lane.b32.xlu0 %v572, 112
      %v824 = vpop.permute.xlu0 %823
      %825 = vrot.lane.b32.xlu0 %v573, 112
      %v826 = vpop.permute.xlu0 %825
      %827 = vrot.lane.b32.xlu0 %v574, 112
      %v828 = vpop.permute.xlu0 %827
      %829 = vrot.lane.b32.xlu0 %v575, 112
      %v830 = vpop.permute.xlu0 %829
      %831 = vrot.lane.b32.xlu0 %v576, 112
      %v832 = vpop.permute.xlu0 %831
      %833 = vrot.lane.b32.xlu0 %v577, 112
      %v834 = vpop.permute.xlu0 %833
      %835 = vrot.lane.b32.xlu0 %v578, 112
      %v836 = vpop.permute.xlu0 %835
      %837 = vrot.lane.b32.xlu0 %v579, 112
      %v838 = vpop.permute.xlu0 %837
      %s855 = scalar_lea.vmem %s288, 256
      %856 = vst.msk [vmem:[%s855] sm:$0xff] %vm580, %v808
      %857 = vst.msk [vmem:[%s855 + $0x8] sm:$0xff] %vm580, %v810
      %858 = vst.msk [vmem:[%s855 + $0x10] sm:$0xff] %vm580, %v812
      %859 = vst.msk [vmem:[%s855 + $0x18] sm:$0xff] %vm580, %v814
      %860 = vst.msk [vmem:[%s855 + $0x20] sm:$0xff] %vm580, %v816
      %861 = vst.msk [vmem:[%s855 + $0x28] sm:$0xff] %vm580, %v818
      %862 = vst.msk [vmem:[%s855 + $0x30] sm:$0xff] %vm580, %v820
      %863 = vst.msk [vmem:[%s855 + $0x38] sm:$0xff] %vm580, %v822
      %864 = vst.msk [vmem:[%s855 + $0x40] sm:$0xff] %vm580, %v824
      %865 = vst.msk [vmem:[%s855 + $0x48] sm:$0xff] %vm580, %v826
      %866 = vst.msk [vmem:[%s855 + $0x50] sm:$0xff] %vm580, %v828
      %867 = vst.msk [vmem:[%s855 + $0x58] sm:$0xff] %vm580, %v830
      %868 = vst.msk [vmem:[%s855 + $0x60] sm:$0xff] %vm580, %v832
      %869 = vst.msk [vmem:[%s855 + $0x68] sm:$0xff] %vm580, %v834
      %870 = vst.msk [vmem:[%s855 + $0x70] sm:$0xff] %vm580, %v836
      %871 = vst.msk [vmem:[%s855 + $0x78] sm:$0xff] %vm580, %v838
      %872 = vrot.lane.b32.xlu0 %v564, 88
      %v873 = vpop.permute.xlu0 %872
      %874 = vrot.lane.b32.xlu0 %v565, 88
      %v875 = vpop.permute.xlu0 %874
      %876 = vrot.lane.b32.xlu0 %v566, 88
      %v877 = vpop.permute.xlu0 %876
      %878 = vrot.lane.b32.xlu0 %v567, 88
      %v879 = vpop.permute.xlu0 %878
      %880 = vrot.lane.b32.xlu0 %v568, 88
      %v881 = vpop.permute.xlu0 %880
      %882 = vrot.lane.b32.xlu0 %v569, 88
      %v883 = vpop.permute.xlu0 %882
      %884 = vrot.lane.b32.xlu0 %v570, 88
      %v885 = vpop.permute.xlu0 %884
      %886 = vrot.lane.b32.xlu0 %v571, 88
      %v887 = vpop.permute.xlu0 %886
      %888 = vrot.lane.b32.xlu0 %v572, 88
      %v889 = vpop.permute.xlu0 %888
      %890 = vrot.lane.b32.xlu0 %v573, 88
      %v891 = vpop.permute.xlu0 %890
      %892 = vrot.lane.b32.xlu0 %v574, 88
      %v893 = vpop.permute.xlu0 %892
      %894 = vrot.lane.b32.xlu0 %v575, 88
      %v895 = vpop.permute.xlu0 %894
      %896 = vrot.lane.b32.xlu0 %v576, 88
      %v897 = vpop.permute.xlu0 %896
      %898 = vrot.lane.b32.xlu0 %v577, 88
      %v899 = vpop.permute.xlu0 %898
      %900 = vrot.lane.b32.xlu0 %v578, 88
      %v901 = vpop.permute.xlu0 %900
      %902 = vrot.lane.b32.xlu0 %v579, 88
      %v903 = vpop.permute.xlu0 %902
      %s920 = scalar_lea.vmem %s298, 256
      %921 = vst.msk [vmem:[%s920] sm:$0xff] %vm580, %v873
      %922 = vst.msk [vmem:[%s920 + $0x8] sm:$0xff] %vm580, %v875
      %923 = vst.msk [vmem:[%s920 + $0x10] sm:$0xff] %vm580, %v877
      %924 = vst.msk [vmem:[%s920 + $0x18] sm:$0xff] %vm580, %v879
      %925 = vst.msk [vmem:[%s920 + $0x20] sm:$0xff] %vm580, %v881
      %926 = vst.msk [vmem:[%s920 + $0x28] sm:$0xff] %vm580, %v883
      %927 = vst.msk [vmem:[%s920 + $0x30] sm:$0xff] %vm580, %v885
      %928 = vst.msk [vmem:[%s920 + $0x38] sm:$0xff] %vm580, %v887
      %929 = vst.msk [vmem:[%s920 + $0x40] sm:$0xff] %vm580, %v889
      %930 = vst.msk [vmem:[%s920 + $0x48] sm:$0xff] %vm580, %v891
      %931 = vst.msk [vmem:[%s920 + $0x50] sm:$0xff] %vm580, %v893
      %932 = vst.msk [vmem:[%s920 + $0x58] sm:$0xff] %vm580, %v895
      %933 = vst.msk [vmem:[%s920 + $0x60] sm:$0xff] %vm580, %v897
      %934 = vst.msk [vmem:[%s920 + $0x68] sm:$0xff] %vm580, %v899
      %935 = vst.msk [vmem:[%s920 + $0x70] sm:$0xff] %vm580, %v901
      %936 = vst.msk [vmem:[%s920 + $0x78] sm:$0xff] %vm580, %v903
      %s937 = smul.u32 16, %s22
      %p938 = scmp.lt.s32.totalorder %s21, 1
      %s939 = scalar_select %p938, %s21, 1
      %p940 = scmp.lt.s32.totalorder %s937, 15
      %s941 = scalar_select %p940, %s937, 15
      %s942 = smul.addr %s939, 48
      %s943 = sadd.s32 %s941, %s942
      %s944 = smul.addr %s943, 8
      %s945 = scalar_lea.vmem %s4, %s944
      %s946 = smul.u32 16, %s22
      %p947 = scmp.lt.s32.totalorder %s21, 1
      %s948 = scalar_select %p947, %s21, 1
      %p949 = scmp.lt.s32.totalorder %s946, 15
      %s950 = scalar_select %p949, %s946, 15
      %s951 = smul.addr %s948, 48
      %s952 = sadd.s32 %s950, %s951
      %s953 = smul.addr %s952, 8
      %s954 = scalar_lea.vmem %s5, %s953
      // Predicated region
      $region37: #{yolo_head_forward.3} parent=35 // pred_check
        %p955 = pneg %p145
      $region38: #{yolo_head_forward.3} parent=35 // pred_check_branch
        %957 = sbr.rel (%p955) target = $region40
      $region39: #{yolo_head_forward.3} parent=35 // pred_region
        %s958 = smul.u32 16, %s22
      $region40: #{yolo_head_forward.3} parent=35 // pred_fallthru
        _
      // Predicated region
      $region41: #{yolo_head_forward.3} parent=35 // pred_check
        %p959 = pneg %p173
      $region42: #{yolo_head_forward.3} parent=35 // pred_check_branch
        %961 = sbr.rel (%p959) target = $region44
      $region43: #{yolo_head_forward.3} parent=35 // pred_region
        %s962 = smul.u32 16, %s22
      $region44: #{yolo_head_forward.3} parent=35 // pred_fallthru
        _
    $region36: #{yolo_head_forward.3} parent=5 // pred_fallthru
      _
    %p963 = scmp.le.s32.totalorder 2, %s12
    // Predicated region
    $region45: #{yolo_head_forward.3} parent=5 // pred_check
      %p964 = pneg %p963
    $region46: #{yolo_head_forward.3} parent=5 // pred_check_branch
      %966 = sbr.rel (%p964) target = $region48
    $region47: #{yolo_head_forward.3} parent=5 // pred_region
      %s967 = ssub.s32 %s12, 2
      // Predicated region
      $region49: #{yolo_head_forward.3} parent=47 // pred_check
        %p968 = pneg %p151
      $region50: #{yolo_head_forward.3} parent=47 // pred_check_branch
        %970 = sbr.rel (%p968) target = $region52
      $region51: #{yolo_head_forward.3} parent=47 // pred_region
        %s971 = smul.u32 16, %s24
        %p972 = scmp.lt.s32.totalorder %s23, 1
        %s973 = scalar_select %p972, %s23, 1
        %p974 = scmp.lt.s32.totalorder %s971, 15
        %s975 = scalar_select %p974, %s971, 15
        %s976 = smul.addr %s973, 48
        %s977 = sadd.s32 %s975, %s976
        %s978 = smul.addr %s977, 8
        %s979 = scalar_lea.vmem %s4, %s978
      $region52: #{yolo_head_forward.3} parent=47 // pred_fallthru
        _
      // Predicated region
      $region53: #{yolo_head_forward.3} parent=47 // pred_check
        %p980 = pneg %p179
      $region54: #{yolo_head_forward.3} parent=47 // pred_check_branch
        %982 = sbr.rel (%p980) target = $region56
      $region55: #{yolo_head_forward.3} parent=47 // pred_region
        %s983 = smul.u32 16, %s24
        %p984 = scmp.lt.s32.totalorder %s23, 1
        %s985 = scalar_select %p984, %s23, 1
        %p986 = scmp.lt.s32.totalorder %s983, 15
        %s987 = scalar_select %p986, %s983, 15
        %s988 = smul.addr %s985, 48
        %s989 = sadd.s32 %s987, %s988
        %s990 = smul.addr %s989, 8
        %s991 = scalar_lea.vmem %s5, %s990
      $region56: #{yolo_head_forward.3} parent=47 // pred_fallthru
        _
    $region48: #{yolo_head_forward.3} parent=5 // pred_fallthru
      _
  $region6: #{yolo_head_forward.3} parent=0 // loop_footer
    %s16 = sadd.s32 1, %s12
  $region7: #{yolo_head_forward.3} parent=0 // loop_footer_branch
    %11 = sbr.rel target = $region3
  $region8: #{yolo_head_forward.3} parent=0 // loop_exit
    _

</llo_original>
